<compile_context>
chip_gen: v7x
topology: tpu7x:2x2x1
jax: 0.10.0
libtpu: 0.0.40
codegen_flags: <defaults>
</compile_context>

<pallas_src>
import jax
import jax.numpy as jnp
from jax.experimental import pallas as pl
from jax.experimental.pallas import tpu as pltpu

HIDDEN = 4096        # fc1 output width, fixed by the module
EPS = 1e-12          # F.normalize eps


def _round_up(n, m):
    return ((n + m - 1) // m) * m


def _image_mlp_kernel(x_ref, w1_ref, b1_ref, w2_ref, b2_ref, out_ref,
                      inv_ref, acc_ref):
    h = pl.program_id(1)

    # Prologue per batch tile: inverse L2 norm of each row, zero accumulator.
    @pl.when(h == 0)
    def _():
        x = x_ref[...].astype(jnp.float32)
        sumsq = jnp.sum(x * x, axis=1, keepdims=True)
        # rsqrt(max(||x||^2, eps^2)) == 1 / max(||x||, eps)  (F.normalize).
        inv_ref[...] = jax.lax.rsqrt(jnp.maximum(sumsq, EPS * EPS))
        acc_ref[...] = jnp.zeros_like(acc_ref)

    # fc1 chunk on the MXU in bf16; row scaling applied after the matmul
    # (scaling rows commutes with right-multiplication), bias + ReLU in f32.
    xb = x_ref[...].astype(jnp.bfloat16)
    feat = inv_ref[...] * jnp.dot(xb, w1_ref[...],
                                  preferred_element_type=jnp.float32)
    feat = jnp.maximum(feat + b1_ref[...], 0.0)

    # TODO(synk): nn.Dropout(0.3) is identity in eval-mode forward; no RNG mask.

    # tohash chunk: accumulate (tb, TH) @ (TH, L) into the resident f32 acc.
    acc_ref[...] += jnp.dot(feat.astype(jnp.bfloat16), w2_ref[...],
                            preferred_element_type=jnp.float32)

    # Epilogue per batch tile: bias, tanh, final L2 normalize, store.
    @pl.when(h == pl.num_programs(1) - 1)
    def _():
        hid = jnp.tanh(acc_ref[...] + b2_ref[...])
        sumsq = jnp.sum(hid * hid, axis=1, keepdims=True)
        inv = jax.lax.rsqrt(jnp.maximum(sumsq, EPS * EPS))
        out_ref[...] = (hid * inv).astype(out_ref.dtype)


def _vmem_capacity_bytes():
    """Physical per-core VMEM; conservative 64 MiB (v7x) fallback."""
    cap = 64 * 1024 * 1024
    try:
        info = pltpu.get_tpu_info()
        cap = int(getattr(info, "vmem_capacity_bytes", cap))
    except Exception:
        pass
    return cap


def _choose_block_h(D, L, tb, budget_bytes):
    """Largest power-of-two hidden chunk whose working set fits the budget."""
    bh = HIDDEN
    while bh > 256:
        need = (2 * (D * bh + bh * L) * 2      # double-buffered bf16 w1/w2 chunks
                + 2 * tb * D * 4               # double-buffered x tile (f32)
                + 2 * tb * L * 4               # double-buffered out tile
                + tb * L * 4                   # f32 accumulator scratch
                + tb * 128 * 4                 # lane-padded inv-norm scratch
                + 2 * (bh + L) * 4)            # bias chunks
        if need <= budget_bytes and HIDDEN % bh == 0:
            return bh
        bh //= 2
    return 256


def image_mlp_forward(x, w1, b1, w2, b2, *, block_b=256, block_h=None):
    """ImageMlp forward. x: (B, D). w1: (D, 4096). w2: (4096, L). Returns (B, L)."""
    B, D = x.shape
    Dh, L = w1.shape[1], w2.shape[1]
    assert Dh == HIDDEN
    assert w1.shape == (D, Dh) and b1.shape == (Dh,)
    assert w2.shape == (Dh, L) and b2.shape == (L,)

    # Batch tile (multiple of 8 sublanes); pad B with zero rows if needed.
    tb = _round_up(min(block_b, B), 8)
    B_pad = _round_up(B, tb)
    x_in = x if B_pad == B else jnp.pad(x, ((0, B_pad - B), (0, 0)))

    # Per-generation VMEM budget: vmem_limit ~= 75% of physical capacity.
    cap = _vmem_capacity_bytes()
    vmem_limit = max(32 * 1024 * 1024, int(cap * 0.75))
    if block_h is None:
        block_h = _choose_block_h(D, L, tb, vmem_limit - 4 * 1024 * 1024)
    assert Dh % block_h == 0

    # Stream weights as bf16 (halves HBM weight traffic, native MXU rate).
    w1_bf = w1.astype(jnp.bfloat16)
    w2_bf = w2.astype(jnp.bfloat16)
    b1_2d = b1.reshape(1, Dh).astype(jnp.float32)
    b2_2d = b2.reshape(1, L).astype(jnp.float32)

    grid = (B_pad // tb, Dh // block_h)

    out = pl.pallas_call(
        _image_mlp_kernel,
        out_shape=jax.ShapeDtypeStruct((B_pad, L), x.dtype),
        grid_spec=pltpu.PrefetchScalarGridSpec(
            num_scalar_prefetch=0,
            grid=grid,
            in_specs=[
                pl.BlockSpec((tb, D), lambda i, h: (i, 0)),        # X rows
                pl.BlockSpec((D, block_h), lambda i, h: (0, h)),   # fc1 w chunk (bf16)
                pl.BlockSpec((1, block_h), lambda i, h: (0, h)),   # fc1 bias chunk
                pl.BlockSpec((block_h, L), lambda i, h: (h, 0)),   # tohash w chunk (bf16)
                pl.BlockSpec((1, L), lambda i, h: (0, 0)),         # tohash bias
            ],
            out_specs=pl.BlockSpec((tb, L), lambda i, h: (i, 0)),
            scratch_shapes=[
                pltpu.VMEM((tb, 1), jnp.float32),   # inverse row norms
                pltpu.VMEM((tb, L), jnp.float32),   # tohash accumulator
            ],
        ),
        compiler_params=pltpu.CompilerParams(
            dimension_semantics=("parallel", "arbitrary"),
            vmem_limit_bytes=vmem_limit,
        ),
    )(x_in, w1_bf, b1_2d, w2_bf, b2_2d)

    return out if B_pad == B else out[:B]


def _reference_forward(x, w1, b1, w2, b2):
    def l2norm(v):
        n = jnp.linalg.norm(v, axis=1, keepdims=True)
        return v / jnp.maximum(n, EPS)
    xn = l2norm(x)
    feat = jnp.maximum(xn @ w1 + b1, 0.0)
    hid = jnp.tanh(feat @ w2 + b2)
    return l2norm(hid)


if __name__ == "__main__":
    key = jax.random.PRNGKey(0)
    k1, k2, k3, k4, k5 = jax.random.split(key, 5)

    B, D, L = 8, 256, 128        # batch, input_dim, hash_lens (HIDDEN = 4096)
    x = jax.random.normal(k1, (B, D), dtype=jnp.float32)
    w1 = jax.random.normal(k2, (D, HIDDEN), dtype=jnp.float32) * 0.05
    b1 = jax.random.normal(k3, (HIDDEN,), dtype=jnp.float32) * 0.05
    w2 = jax.random.normal(k4, (HIDDEN, L), dtype=jnp.float32) * 0.05
    b2 = jax.random.normal(k5, (L,), dtype=jnp.float32) * 0.05

    out = image_mlp_forward(x, w1, b1, w2, b2)
    jax.block_until_ready(out)

    ref = _reference_forward(x, w1, b1, w2, b2)
    assert out.shape == (B, L)
    # bf16 weight/activation streaming on the MXU (f32 accumulate) vs the
    # pure-f32 reference: observed error ~1e-3; allow 1e-2.
    err = float(jnp.max(jnp.abs(out - ref)))
    assert err < 1e-2, err

    print("KERNEL_OK")
</pallas_src>

<mosaic_0001>
module attributes {stable_mosaic.version = 11 : i64} {
  func.func @_image_mlp_kernel(%arg0: i32, %arg1: i32, %arg2: memref<8x256xf32, #tpu.memory_space<vmem>>, %arg3: memref<256x4096xbf16, #tpu.memory_space<vmem>>, %arg4: memref<1x4096xf32, #tpu.memory_space<vmem>>, %arg5: memref<4096x128xbf16, #tpu.memory_space<vmem>>, %arg6: memref<1x128xf32, #tpu.memory_space<vmem>>, %arg7: memref<8x128xf32, #tpu.memory_space<vmem>>, %arg8: memref<8x1xf32, #tpu.memory_space<vmem>>, %arg9: memref<8x128xf32, #tpu.memory_space<vmem>>) attributes {dimension_semantics = [#tpu.dimension_semantics<parallel>, #tpu.dimension_semantics<arbitrary>], iteration_bounds = array<i64: 1, 1>, scalar_prefetch = 0 : i64, scratch_operands = 2 : i64, tpu.core_type = #tpu.core_type<tc>, window_params = [{transform_indices = @transform_0, window_bounds = array<i64: 8, 256>}, {transform_indices = @transform_1, window_bounds = array<i64: 256, 4096>}, {transform_indices = @transform_2, window_bounds = array<i64: 1, 4096>}, {transform_indices = @transform_3, window_bounds = array<i64: 4096, 128>}, {pipeline_mode = #tpu.pipeline_mode<synchronous>, transform_indices = @transform_4, window_bounds = array<i64: 1, 128>}, {transform_indices = @transform_5, window_bounds = array<i64: 8, 128>}]} {
    %c0_i32 = arith.constant 0 : i32
    %0 = arith.cmpi eq, %arg1, %c0_i32 : i32
    %1 = arith.extui %0 : i1 to i32
    %c0_i32_0 = arith.constant 0 : i32
    %2 = arith.cmpi ne, %1, %c0_i32_0 : i32
    scf.if %2 {
      %c0_18 = arith.constant 0 : index
      %c0_19 = arith.constant 0 : index
      %24 = vector.load %arg2[%c0_18, %c0_19] : memref<8x256xf32, #tpu.memory_space<vmem>>, vector<8x256xf32>
      %25 = arith.mulf %24, %24 : vector<8x256xf32>
      %cst_20 = arith.constant dense<0.000000e+00> : vector<8xf32>
      %26 = vector.multi_reduction <add>, %25, %cst_20 [1] : vector<8x256xf32> to vector<8xf32>
      %27 = vector.shape_cast %26 : vector<8xf32> to vector<8x1xf32>
      %cst_21 = arith.constant 1.000000e-24 : f32
      %28 = vector.broadcast %cst_21 : f32 to vector<8x1xf32>
      %29 = arith.maximumf %27, %28 : vector<8x1xf32>
      %30 = math.rsqrt %29 : vector<8x1xf32>
      %c0_22 = arith.constant 0 : index
      %c0_23 = arith.constant 0 : index
      %31 = vector.load %arg8[%c0_22, %c0_23] : memref<8x1xf32, #tpu.memory_space<vmem>>, vector<8x1xf32>
      tpu.vector_store %arg8[%c0_22, %c0_23], %30 {strides = array<i32>} : memref<8x1xf32, #tpu.memory_space<vmem>>, vector<8x1xf32>,
      %cst_24 = arith.constant 0.000000e+00 : f32
      %32 = vector.broadcast %cst_24 : f32 to vector<8x128xf32>
      %c0_25 = arith.constant 0 : index
      %c0_26 = arith.constant 0 : index
      %33 = vector.load %arg9[%c0_25, %c0_26] : memref<8x128xf32, #tpu.memory_space<vmem>>, vector<8x128xf32>
      tpu.vector_store %arg9[%c0_25, %c0_26], %32 {strides = array<i32>} : memref<8x128xf32, #tpu.memory_space<vmem>>, vector<8x128xf32>,
    } else {
    }
    %c0 = arith.constant 0 : index
    %c0_1 = arith.constant 0 : index
    %3 = vector.load %arg2[%c0, %c0_1] : memref<8x256xf32, #tpu.memory_space<vmem>>, vector<8x256xf32>
    %4 = arith.truncf %3 : vector<8x256xf32> to vector<8x256xbf16>
    %c0_2 = arith.constant 0 : index
    %c0_3 = arith.constant 0 : index
    %5 = vector.load %arg8[%c0_2, %c0_3] : memref<8x1xf32, #tpu.memory_space<vmem>>, vector<8x1xf32>
    %c0_4 = arith.constant 0 : index
    %c0_5 = arith.constant 0 : index
    %6 = vector.load %arg3[%c0_4, %c0_5] : memref<256x4096xbf16, #tpu.memory_space<vmem>>, vector<256x4096xbf16>
    %cst = arith.constant dense<0.000000e+00> : vector<8x4096xf32>
    %7 = tpu.matmul %4, %6, %cst {dimension_numbers = #tpu.dot_dimension_numbers<[1], [0], [0], [1], [0, 0, 1, 1], [], []>} : vector<8x256xbf16>, vector<256x4096xbf16>, vector<8x4096xf32> -> vector<8x4096xf32>
    %8 = vector.broadcast %5 : vector<8x1xf32> to vector<8x4096xf32>
    %9 = arith.mulf %8, %7 : vector<8x4096xf32>
    %c0_6 = arith.constant 0 : index
    %c0_7 = arith.constant 0 : index
    %10 = vector.load %arg4[%c0_6, %c0_7] : memref<1x4096xf32, #tpu.memory_space<vmem>>, vector<1x4096xf32>
    %11 = vector.broadcast %10 : vector<1x4096xf32> to vector<8x4096xf32>
    %12 = arith.addf %9, %11 : vector<8x4096xf32>
    %cst_8 = arith.constant 0.000000e+00 : f32
    %13 = vector.broadcast %cst_8 : f32 to vector<8x4096xf32>
    %14 = arith.maximumf %12, %13 : vector<8x4096xf32>
    %c0_9 = arith.constant 0 : index
    %c0_10 = arith.constant 0 : index
    %15 = vector.load %arg9[%c0_9, %c0_10] : memref<8x128xf32, #tpu.memory_space<vmem>>, vector<8x128xf32>
    %16 = arith.truncf %14 : vector<8x4096xf32> to vector<8x4096xbf16>
    %c0_11 = arith.constant 0 : index
    %c0_12 = arith.constant 0 : index
    %17 = vector.load %arg5[%c0_11, %c0_12] : memref<4096x128xbf16, #tpu.memory_space<vmem>>, vector<4096x128xbf16>
    %cst_13 = arith.constant dense<0.000000e+00> : vector<8x128xf32>
    %18 = tpu.matmul %16, %17, %cst_13 {dimension_numbers = #tpu.dot_dimension_numbers<[1], [0], [0], [1], [0, 0, 1, 1], [], []>} : vector<8x4096xbf16>, vector<4096x128xbf16>, vector<8x128xf32> -> vector<8x128xf32>
    %19 = arith.addf %15, %18 : vector<8x128xf32>
    %c0_14 = arith.constant 0 : index
    %c0_15 = arith.constant 0 : index
    %20 = vector.load %arg9[%c0_14, %c0_15] : memref<8x128xf32, #tpu.memory_space<vmem>>, vector<8x128xf32>
    tpu.vector_store %arg9[%c0_14, %c0_15], %19 {strides = array<i32>} : memref<8x128xf32, #tpu.memory_space<vmem>>, vector<8x128xf32>,
    %c0_i32_16 = arith.constant 0 : i32
    %21 = arith.cmpi eq, %arg1, %c0_i32_16 : i32
    %22 = arith.extui %21 : i1 to i32
    %c0_i32_17 = arith.constant 0 : i32
    %23 = arith.cmpi ne, %22, %c0_i32_17 : i32
    scf.if %23 {
      %c0_18 = arith.constant 0 : index
      %c0_19 = arith.constant 0 : index
      %24 = vector.load %arg9[%c0_18, %c0_19] : memref<8x128xf32, #tpu.memory_space<vmem>>, vector<8x128xf32>
      %c0_20 = arith.constant 0 : index
      %c0_21 = arith.constant 0 : index
      %25 = vector.load %arg6[%c0_20, %c0_21] : memref<1x128xf32, #tpu.memory_space<vmem>>, vector<1x128xf32>
      %26 = vector.broadcast %25 : vector<1x128xf32> to vector<8x128xf32>
      %27 = arith.addf %24, %26 : vector<8x128xf32>
      %28 = math.tanh %27 : vector<8x128xf32>
      %29 = arith.mulf %28, %28 : vector<8x128xf32>
      %cst_22 = arith.constant dense<0.000000e+00> : vector<8xf32>
      %30 = vector.multi_reduction <add>, %29, %cst_22 [1] : vector<8x128xf32> to vector<8xf32>
      %31 = vector.shape_cast %30 : vector<8xf32> to vector<8x1xf32>
      %cst_23 = arith.constant 1.000000e-24 : f32
      %32 = vector.broadcast %cst_23 : f32 to vector<8x1xf32>
      %33 = arith.maximumf %31, %32 : vector<8x1xf32>
      %34 = math.rsqrt %33 : vector<8x1xf32>
      %35 = vector.broadcast %34 : vector<8x1xf32> to vector<8x128xf32>
      %36 = arith.mulf %28, %35 : vector<8x128xf32>
      %c0_24 = arith.constant 0 : index
      %c0_25 = arith.constant 0 : index
      %37 = vector.load %arg7[%c0_24, %c0_25] : memref<8x128xf32, #tpu.memory_space<vmem>>, vector<8x128xf32>
      tpu.vector_store %arg7[%c0_24, %c0_25], %36 {strides = array<i32>} : memref<8x128xf32, #tpu.memory_space<vmem>>, vector<8x128xf32>,
    } else {
    }
    return
  }
  func.func @transform_0(%arg0: i32, %arg1: i32) -> (i32, i32) {
    %c0_i32 = arith.constant 0 : i32
    %c0_i32_0 = arith.constant 0 : i32
    return %arg0, %c0_i32 : i32, i32
  }
  func.func @transform_1(%arg0: i32, %arg1: i32) -> (i32, i32) {
    %c0_i32 = arith.constant 0 : i32
    %c0_i32_0 = arith.constant 0 : i32
    return %c0_i32, %arg1 : i32, i32
  }
  func.func @transform_2(%arg0: i32, %arg1: i32) -> (i32, i32) {
    %c0_i32 = arith.constant 0 : i32
    %c0_i32_0 = arith.constant 0 : i32
    return %c0_i32, %arg1 : i32, i32
  }
  func.func @transform_3(%arg0: i32, %arg1: i32) -> (i32, i32) {
    %c0_i32 = arith.constant 0 : i32
    %c0_i32_0 = arith.constant 0 : i32
    return %arg1, %c0_i32 : i32, i32
  }
  func.func @transform_4(%arg0: i32, %arg1: i32) -> (i32, i32) {
    %c0_i32 = arith.constant 0 : i32
    %c0_i32_0 = arith.constant 0 : i32
    %c0_i32_1 = arith.constant 0 : i32
    return %c0_i32, %c0_i32_0 : i32, i32
  }
  func.func @transform_5(%arg0: i32, %arg1: i32) -> (i32, i32) {
    %c0_i32 = arith.constant 0 : i32
    %c0_i32_0 = arith.constant 0 : i32
    return %arg0, %c0_i32 : i32, i32
  }
}

</mosaic_0001>

<llo_original>
// kernel: tpu_custom_call.1
$region0: #{tpu_custom_call.1}
  #allocation0 [shape = 'u32[]', space=smem, size = 0x4, offset = 0x4, fixed_abs, tag = 'smem constant byte address 0x4 - core index']
  #allocation1 [shape = 'u32[144,128]{1,0:T(1,128)}', space=vmem, size = 0x12000, scoped, tag = 'internal scratch']
  #allocation2 [shape = 'f32[8,1]{1,0:T(8,128)}', space=vmem, size = 0x1000, scoped, tag = 'scratch operand']
  #allocation3 [shape = 'f32[8,128]{1,0:T(8,128)}', space=vmem, size = 0x1000, scoped, tag = 'scratch operand']
  %s0 = inlined_call_operand.hbm [shape: f32[8,256], index: 0, kind: input, shape index: {}]
  %s1 = inlined_call_operand.hbm [shape: bf16[256,4096], index: 1, kind: input, shape index: {}]
  %s2 = inlined_call_operand.hbm [shape: f32[1,4096], index: 2, kind: input, shape index: {}]
  %s3 = inlined_call_operand.hbm [shape: bf16[4096,128], index: 3, kind: input, shape index: {}]
  %s4 = inlined_call_operand.hbm [shape: f32[1,128], index: 4, kind: input, shape index: {}]
  %s5 = inlined_call_operand.hbm [shape: f32[8,128], index: 5, kind: output, shape index: {}]
  %s6 = sld [smem:[#allocation0]]
  $region58: #{tpu_custom_call.1} parent=0
    _
  %s8 = ssub.s32 1, %s6
  %s9 = scalar_select 0, %s8, %s6
  $region1: #{tpu_custom_call.1} parent=0
    #allocation4 [shape = 'u8[8192]{0}', space=vmem, size = 0x2000, scoped, tag = 'input window, operand 0, single buffered']
    #allocation5 [shape = 's32[1]{0}', space=sflag, size = 0x4, scoped, tag = 'scoped memory for tpu_custom_call.1']
    #allocation6 [shape = 's32[1]{0}', space=sflag, size = 0x4, scoped, tag = 'scoped memory for tpu_custom_call.1']
    #allocation7 [shape = 'u8[2097152]{0}', space=vmem, size = 0x200000, scoped, tag = 'input window, operand 1, single buffered']
    #allocation8 [shape = 's32[1]{0}', space=sflag, size = 0x4, scoped, tag = 'scoped memory for tpu_custom_call.1']
    #allocation9 [shape = 'u8[16384]{0}', space=vmem, size = 0x4000, scoped, tag = 'input window, operand 2, single buffered']
    #allocation10 [shape = 'u8[1048576]{0}', space=vmem, size = 0x100000, scoped, tag = 'input window, operand 3, single buffered']
    #allocation11 [shape = 's32[1]{0}', space=sflag, size = 0x4, scoped, tag = 'scoped memory for tpu_custom_call.1']
    #allocation12 [shape = 'u8[512]{0}', space=vmem, size = 0x400, scoped, tag = 'input window, operand 4, single buffered']
    #allocation13 [shape = 'u8[4096]{0}', space=vmem, size = 0x1000, scoped, tag = 'output window, operand 0, single buffered']
    %10 = vsyncpa [#allocation5], 0
    %11 = vsyncpa [#allocation8], 0
    %12 = vsyncpa [#allocation11], 0
    %13 = vsyncpa [#allocation6], 0
    // Predicated region
    $region2: #{tpu_custom_call.1} parent=1 // pred_check
      _
    $region3: #{tpu_custom_call.1} parent=1 // pred_check_branch
      %15 = sbr.rel (0) target = $region5
    $region4: #{tpu_custom_call.1} parent=1 // pred_region
      %s17 = ssub.s32 256, 256
      %18 = vsyncadd [#allocation5], %s17
      %s20 = sshll.u32 [#allocation4], 4
      %s21 = int_to_ptr.vmem [resolvable:$true] %s20
      %23 = dma.hbm_to_vmem [thread:$0]  %s0, 256, %s21, [#allocation5]
    $region5: #{tpu_custom_call.1} parent=1 // pred_fallthru
      _
    // Predicated region
    $region6: #{tpu_custom_call.1} parent=1 // pred_check
      _
    $region7: #{tpu_custom_call.1} parent=1 // pred_check_branch
      %25 = sbr.rel (0) target = $region9
    $region8: #{tpu_custom_call.1} parent=1 // pred_region
      %s27 = ssub.s32 65536, 65536
      %28 = vsyncadd [#allocation8], %s27
      %s29 = sshll.u32 [#allocation7], 4
      %s30 = int_to_ptr.vmem [resolvable:$true] %s29
      %35 = dma.hbm_to_vmem [thread:$0]  %s1, 65536, %s30, [#allocation8], 2048, 2048, 128
    $region9: #{tpu_custom_call.1} parent=1 // pred_fallthru
      _
    // Predicated region
    $region10: #{tpu_custom_call.1} parent=1 // pred_check
      _
    $region11: #{tpu_custom_call.1} parent=1 // pred_check_branch
      %37 = sbr.rel (0) target = $region13
    $region12: #{tpu_custom_call.1} parent=1 // pred_region
      %s39 = ssub.s32 512, 512
      %40 = vsyncadd [#allocation8], %s39
      %s42 = sshll.u32 [#allocation9], 4
      %s43 = int_to_ptr.vmem [resolvable:$true] %s42
      %45 = dma.hbm_to_vmem [thread:$0]  %s2, 512, %s43, [#allocation8]
    $region13: #{tpu_custom_call.1} parent=1 // pred_fallthru
      _
    // Predicated region
    $region14: #{tpu_custom_call.1} parent=1 // pred_check
      _
    $region15: #{tpu_custom_call.1} parent=1 // pred_check_branch
      %47 = sbr.rel (0) target = $region17
    $region16: #{tpu_custom_call.1} parent=1 // pred_region
      %s49 = ssub.s32 32768, 32768
      %50 = vsyncadd [#allocation11], %s49
      %s51 = sshll.u32 [#allocation10], 4
      %s52 = int_to_ptr.vmem [resolvable:$true] %s51
      %57 = dma.hbm_to_vmem [thread:$0]  %s3, 32768, %s52, [#allocation11], 64, 64, 4
    $region17: #{tpu_custom_call.1} parent=1 // pred_fallthru
      _
    // Predicated region
    $region18: #{tpu_custom_call.1} parent=1 // pred_check
      _
    $region19: #{tpu_custom_call.1} parent=1 // pred_check_branch
      %59 = sbr.rel (0) target = $region21
    $region20: #{tpu_custom_call.1} parent=1 // pred_region
      %s61 = ssub.s32 16, 16
      %62 = vsyncadd [#allocation11], %s61
      %s64 = sshll.u32 [#allocation12], 4
      %s65 = int_to_ptr.vmem [resolvable:$true] %s64
      %67 = dma.hbm_to_vmem [thread:$0]  %s4, 16, %s65, [#allocation11]
    $region21: #{tpu_custom_call.1} parent=1 // pred_fallthru
      _
    // Predicated region
    $region22: #{tpu_custom_call.1} parent=1 // pred_check
      _
    $region23: #{tpu_custom_call.1} parent=1 // pred_check_branch
      %69 = sbr.rel (0) target = $region25
    $region24: #{tpu_custom_call.1} parent=1 // pred_region
      %70 = dma.done [#allocation5], 256
    $region25: #{tpu_custom_call.1} parent=1 // pred_fallthru
      _
    // Predicated region
    $region26: #{tpu_custom_call.1} parent=1 // pred_check
      _
    $region27: #{tpu_custom_call.1} parent=1 // pred_check_branch
      %72 = sbr.rel (0) target = $region29
    $region28: #{tpu_custom_call.1} parent=1 // pred_region
      %73 = dma.done [#allocation8], 65536
    $region29: #{tpu_custom_call.1} parent=1 // pred_fallthru
      _
    // Predicated region
    $region30: #{tpu_custom_call.1} parent=1 // pred_check
      _
    $region31: #{tpu_custom_call.1} parent=1 // pred_check_branch
      %75 = sbr.rel (0) target = $region33
    $region32: #{tpu_custom_call.1} parent=1 // pred_region
      %76 = dma.done [#allocation8], 512
    $region33: #{tpu_custom_call.1} parent=1 // pred_fallthru
      _
    // Predicated region
    $region34: #{tpu_custom_call.1} parent=1 // pred_check
      _
    $region35: #{tpu_custom_call.1} parent=1 // pred_check_branch
      %78 = sbr.rel (0) target = $region37
    $region36: #{tpu_custom_call.1} parent=1 // pred_region
      %79 = dma.done [#allocation11], 32768
    $region37: #{tpu_custom_call.1} parent=1 // pred_fallthru
      _
    // Predicated region
    $region38: #{tpu_custom_call.1} parent=1 // pred_check
      _
    $region39: #{tpu_custom_call.1} parent=1 // pred_check_branch
      %81 = sbr.rel (0) target = $region41
    $region40: #{tpu_custom_call.1} parent=1 // pred_region
      %82 = dma.done [#allocation11], 16
    $region41: #{tpu_custom_call.1} parent=1 // pred_fallthru
      _
    %p84 = scmp.eq.s32.totalorder 0, 0
    // Predicated region
    $region42: #{tpu_custom_call.1} parent=1 // pred_check
      %p85 = pneg %p84
    $region43: #{tpu_custom_call.1} parent=1 // pred_check_branch
      %87 = sbr.rel (%p85) target = $region45
    $region44: #{tpu_custom_call.1} parent=1 // pred_region
      %v88 = vld [vmem:[#allocation4] sm:$0xff]
      %v89 = vld [vmem:[#allocation4 + $0x8] sm:$0xff]
      %v90 = vmul.f32 %v88, %v88
      %v91 = vmul.f32 %v89, %v89
      %v92 = vadd.f32 %v90, %v91
      %93 = vadd.xlane.f32.xlu0 %v92
      %v94 = vpop.xlane.xlu0 %93
      %v95 = vmax.f32 %v94, 1e-24
      %v96 = vrsqrt.pop %v95
      %vm97 = vcmask 7168
      %98 = vst.msk [vmem:[#allocation2] sm:$0xff] %vm97, %v96
      %99 = vst [vmem:[#allocation3] sm:$0xff] 0.0
    $region45: #{tpu_custom_call.1} parent=1 // pred_fallthru
      _
    %v100 = vld [vmem:[#allocation4] sm:$0xff]
    %v101 = vld [vmem:[#allocation4 + $0x8] sm:$0xff]
    %v102 = vpack.c.bf16 %v100, %v100
    %v103 = vpack.c.bf16 %v101, %v101
    %v104 = vld [vmem:[#allocation2] sm:$0xff]
    %v105 = vld [vmem:[#allocation7] sm:$0xff]
    %v106 = vld [vmem:[#allocation7 + $0x8] sm:$0xff]
    %v107 = vld [vmem:[#allocation7 + $0x10] sm:$0xff]
    %v108 = vld [vmem:[#allocation7 + $0x18] sm:$0xff]
    %v109 = vld [vmem:[#allocation7 + $0x20] sm:$0xff]
    %v110 = vld [vmem:[#allocation7 + $0x28] sm:$0xff]
    %v111 = vld [vmem:[#allocation7 + $0x30] sm:$0xff]
    %v112 = vld [vmem:[#allocation7 + $0x38] sm:$0xff]
    %v113 = vld [vmem:[#allocation7 + $0x40] sm:$0xff]
    %v114 = vld [vmem:[#allocation7 + $0x48] sm:$0xff]
    %v115 = vld [vmem:[#allocation7 + $0x50] sm:$0xff]
    %v116 = vld [vmem:[#allocation7 + $0x58] sm:$0xff]
    %v117 = vld [vmem:[#allocation7 + $0x60] sm:$0xff]
    %v118 = vld [vmem:[#allocation7 + $0x68] sm:$0xff]
    %v119 = vld [vmem:[#allocation7 + $0x70] sm:$0xff]
    %v120 = vld [vmem:[#allocation7 + $0x78] sm:$0xff]
    %v121 = vld [vmem:[#allocation7 + $0x80] sm:$0xff]
    %v122 = vld [vmem:[#allocation7 + $0x88] sm:$0xff]
    %v123 = vld [vmem:[#allocation7 + $0x90] sm:$0xff]
    %v124 = vld [vmem:[#allocation7 + $0x98] sm:$0xff]
    %v125 = vld [vmem:[#allocation7 + $0xa0] sm:$0xff]
    %v126 = vld [vmem:[#allocation7 + $0xa8] sm:$0xff]
    %v127 = vld [vmem:[#allocation7 + $0xb0] sm:$0xff]
    %v128 = vld [vmem:[#allocation7 + $0xb8] sm:$0xff]
    %v129 = vld [vmem:[#allocation7 + $0xc0] sm:$0xff]
    %v130 = vld [vmem:[#allocation7 + $0xc8] sm:$0xff]
    %v131 = vld [vmem:[#allocation7 + $0xd0] sm:$0xff]
    %v132 = vld [vmem:[#allocation7 + $0xd8] sm:$0xff]
    %v133 = vld [vmem:[#allocation7 + $0xe0] sm:$0xff]
    %v134 = vld [vmem:[#allocation7 + $0xe8] sm:$0xff]
    %v135 = vld [vmem:[#allocation7 + $0xf0] sm:$0xff]
    %v136 = vld [vmem:[#allocation7 + $0xf8] sm:$0xff]
    %v137 = vld [vmem:[#allocation7 + $0x100] sm:$0xff]
    %v138 = vld [vmem:[#allocation7 + $0x108] sm:$0xff]
    %v139 = vld [vmem:[#allocation7 + $0x110] sm:$0xff]
    %v140 = vld [vmem:[#allocation7 + $0x118] sm:$0xff]
    %v141 = vld [vmem:[#allocation7 + $0x120] sm:$0xff]
    %v142 = vld [vmem:[#allocation7 + $0x128] sm:$0xff]
    %v143 = vld [vmem:[#allocation7 + $0x130] sm:$0xff]
    %v144 = vld [vmem:[#allocation7 + $0x138] sm:$0xff]
    %v145 = vld [vmem:[#allocation7 + $0x140] sm:$0xff]
    %v146 = vld [vmem:[#allocation7 + $0x148] sm:$0xff]
    %v147 = vld [vmem:[#allocation7 + $0x150] sm:$0xff]
    %v148 = vld [vmem:[#allocation7 + $0x158] sm:$0xff]
    %v149 = vld [vmem:[#allocation7 + $0x160] sm:$0xff]
    %v150 = vld [vmem:[#allocation7 + $0x168] sm:$0xff]
    %v151 = vld [vmem:[#allocation7 + $0x170] sm:$0xff]
    %v152 = vld [vmem:[#allocation7 + $0x178] sm:$0xff]
    %v153 = vld [vmem:[#allocation7 + $0x180] sm:$0xff]
    %v154 = vld [vmem:[#allocation7 + $0x188] sm:$0xff]
    %v155 = vld [vmem:[#allocation7 + $0x190] sm:$0xff]
    %v156 = vld [vmem:[#allocation7 + $0x198] sm:$0xff]
    %v157 = vld [vmem:[#allocation7 + $0x1a0] sm:$0xff]
    %v158 = vld [vmem:[#allocation7 + $0x1a8] sm:$0xff]
    %v159 = vld [vmem:[#allocation7 + $0x1b0] sm:$0xff]
    %v160 = vld [vmem:[#allocation7 + $0x1b8] sm:$0xff]
    %v161 = vld [vmem:[#allocation7 + $0x1c0] sm:$0xff]
    %v162 = vld [vmem:[#allocation7 + $0x1c8] sm:$0xff]
    %v163 = vld [vmem:[#allocation7 + $0x1d0] sm:$0xff]
    %v164 = vld [vmem:[#allocation7 + $0x1d8] sm:$0xff]
    %v165 = vld [vmem:[#allocation7 + $0x1e0] sm:$0xff]
    %v166 = vld [vmem:[#allocation7 + $0x1e8] sm:$0xff]
    %v167 = vld [vmem:[#allocation7 + $0x1f0] sm:$0xff]
    %v168 = vld [vmem:[#allocation7 + $0x1f8] sm:$0xff]
    %v169 = vld [vmem:[#allocation7 + $0x200] sm:$0xff]
    %v170 = vld [vmem:[#allocation7 + $0x208] sm:$0xff]
    %v171 = vld [vmem:[#allocation7 + $0x210] sm:$0xff]
    %v172 = vld [vmem:[#allocation7 + $0x218] sm:$0xff]
    %v173 = vld [vmem:[#allocation7 + $0x220] sm:$0xff]
    %v174 = vld [vmem:[#allocation7 + $0x228] sm:$0xff]
    %v175 = vld [vmem:[#allocation7 + $0x230] sm:$0xff]
    %v176 = vld [vmem:[#allocation7 + $0x238] sm:$0xff]
    %v177 = vld [vmem:[#allocation7 + $0x240] sm:$0xff]
    %v178 = vld [vmem:[#allocation7 + $0x248] sm:$0xff]
    %v179 = vld [vmem:[#allocation7 + $0x250] sm:$0xff]
    %v180 = vld [vmem:[#allocation7 + $0x258] sm:$0xff]
    %v181 = vld [vmem:[#allocation7 + $0x260] sm:$0xff]
    %v182 = vld [vmem:[#allocation7 + $0x268] sm:$0xff]
    %v183 = vld [vmem:[#allocation7 + $0x270] sm:$0xff]
    %v184 = vld [vmem:[#allocation7 + $0x278] sm:$0xff]
    %v185 = vld [vmem:[#allocation7 + $0x280] sm:$0xff]
    %v186 = vld [vmem:[#allocation7 + $0x288] sm:$0xff]
    %v187 = vld [vmem:[#allocation7 + $0x290] sm:$0xff]
    %v188 = vld [vmem:[#allocation7 + $0x298] sm:$0xff]
    %v189 = vld [vmem:[#allocation7 + $0x2a0] sm:$0xff]
    %v190 = vld [vmem:[#allocation7 + $0x2a8] sm:$0xff]
    %v191 = vld [vmem:[#allocation7 + $0x2b0] sm:$0xff]
    %v192 = vld [vmem:[#allocation7 + $0x2b8] sm:$0xff]
    %v193 = vld [vmem:[#allocation7 + $0x2c0] sm:$0xff]
    %v194 = vld [vmem:[#allocation7 + $0x2c8] sm:$0xff]
    %v195 = vld [vmem:[#allocation7 + $0x2d0] sm:$0xff]
    %v196 = vld [vmem:[#allocation7 + $0x2d8] sm:$0xff]
    %v197 = vld [vmem:[#allocation7 + $0x2e0] sm:$0xff]
    %v198 = vld [vmem:[#allocation7 + $0x2e8] sm:$0xff]
    %v199 = vld [vmem:[#allocation7 + $0x2f0] sm:$0xff]
    %v200 = vld [vmem:[#allocation7 + $0x2f8] sm:$0xff]
    %v201 = vld [vmem:[#allocation7 + $0x300] sm:$0xff]
    %v202 = vld [vmem:[#allocation7 + $0x308] sm:$0xff]
    %v203 = vld [vmem:[#allocation7 + $0x310] sm:$0xff]
    %v204 = vld [vmem:[#allocation7 + $0x318] sm:$0xff]
    %v205 = vld [vmem:[#allocation7 + $0x320] sm:$0xff]
    %v206 = vld [vmem:[#allocation7 + $0x328] sm:$0xff]
    %v207 = vld [vmem:[#allocation7 + $0x330] sm:$0xff]
    %v208 = vld [vmem:[#allocation7 + $0x338] sm:$0xff]
    %v209 = vld [vmem:[#allocation7 + $0x340] sm:$0xff]
    %v210 = vld [vmem:[#allocation7 + $0x348] sm:$0xff]
    %v211 = vld [vmem:[#allocation7 + $0x350] sm:$0xff]
    %v212 = vld [vmem:[#allocation7 + $0x358] sm:$0xff]
    %v213 = vld [vmem:[#allocation7 + $0x360] sm:$0xff]
    %v214 = vld [vmem:[#allocation7 + $0x368] sm:$0xff]
    %v215 = vld [vmem:[#allocation7 + $0x370] sm:$0xff]
    %v216 = vld [vmem:[#allocation7 + $0x378] sm:$0xff]
    %v217 = vld [vmem:[#allocation7 + $0x380] sm:$0xff]
    %v218 = vld [vmem:[#allocation7 + $0x388] sm:$0xff]
    %v219 = vld [vmem:[#allocation7 + $0x390] sm:$0xff]
    %v220 = vld [vmem:[#allocation7 + $0x398] sm:$0xff]
    %v221 = vld [vmem:[#allocation7 + $0x3a0] sm:$0xff]
    %v222 = vld [vmem:[#allocation7 + $0x3a8] sm:$0xff]
    %v223 = vld [vmem:[#allocation7 + $0x3b0] sm:$0xff]
    %v224 = vld [vmem:[#allocation7 + $0x3b8] sm:$0xff]
    %v225 = vld [vmem:[#allocation7 + $0x3c0] sm:$0xff]
    %v226 = vld [vmem:[#allocation7 + $0x3c8] sm:$0xff]
    %v227 = vld [vmem:[#allocation7 + $0x3d0] sm:$0xff]
    %v228 = vld [vmem:[#allocation7 + $0x3d8] sm:$0xff]
    %v229 = vld [vmem:[#allocation7 + $0x3e0] sm:$0xff]
    %v230 = vld [vmem:[#allocation7 + $0x3e8] sm:$0xff]
    %v231 = vld [vmem:[#allocation7 + $0x3f0] sm:$0xff]
    %v232 = vld [vmem:[#allocation7 + $0x3f8] sm:$0xff]
    %v233 = vld [vmem:[#allocation7 + $0x400] sm:$0xff]
    %v234 = vld [vmem:[#allocation7 + $0x408] sm:$0xff]
    %v235 = vld [vmem:[#allocation7 + $0x410] sm:$0xff]
    %v236 = vld [vmem:[#allocation7 + $0x418] sm:$0xff]
    %v237 = vld [vmem:[#allocation7 + $0x420] sm:$0xff]
    %v238 = vld [vmem:[#allocation7 + $0x428] sm:$0xff]
    %v239 = vld [vmem:[#allocation7 + $0x430] sm:$0xff]
    %v240 = vld [vmem:[#allocation7 + $0x438] sm:$0xff]
    %v241 = vld [vmem:[#allocation7 + $0x440] sm:$0xff]
    %v242 = vld [vmem:[#allocation7 + $0x448] sm:$0xff]
    %v243 = vld [vmem:[#allocation7 + $0x450] sm:$0xff]
    %v244 = vld [vmem:[#allocation7 + $0x458] sm:$0xff]
    %v245 = vld [vmem:[#allocation7 + $0x460] sm:$0xff]
    %v246 = vld [vmem:[#allocation7 + $0x468] sm:$0xff]
    %v247 = vld [vmem:[#allocation7 + $0x470] sm:$0xff]
    %v248 = vld [vmem:[#allocation7 + $0x478] sm:$0xff]
    %v249 = vld [vmem:[#allocation7 + $0x480] sm:$0xff]
    %v250 = vld [vmem:[#allocation7 + $0x488] sm:$0xff]
    %v251 = vld [vmem:[#allocation7 + $0x490] sm:$0xff]
    %v252 = vld [vmem:[#allocation7 + $0x498] sm:$0xff]
    %v253 = vld [vmem:[#allocation7 + $0x4a0] sm:$0xff]
    %v254 = vld [vmem:[#allocation7 + $0x4a8] sm:$0xff]
    %v255 = vld [vmem:[#allocation7 + $0x4b0] sm:$0xff]
    %v256 = vld [vmem:[#allocation7 + $0x4b8] sm:$0xff]
    %v257 = vld [vmem:[#allocation7 + $0x4c0] sm:$0xff]
    %v258 = vld [vmem:[#allocation7 + $0x4c8] sm:$0xff]
    %v259 = vld [vmem:[#allocation7 + $0x4d0] sm:$0xff]
    %v260 = vld [vmem:[#allocation7 + $0x4d8] sm:$0xff]
    %v261 = vld [vmem:[#allocation7 + $0x4e0] sm:$0xff]
    %v262 = vld [vmem:[#allocation7 + $0x4e8] sm:$0xff]
    %v263 = vld [vmem:[#allocation7 + $0x4f0] sm:$0xff]
    %v264 = vld [vmem:[#allocation7 + $0x4f8] sm:$0xff]
    %v265 = vld [vmem:[#allocation7 + $0x500] sm:$0xff]
    %v266 = vld [vmem:[#allocation7 + $0x508] sm:$0xff]
    %v267 = vld [vmem:[#allocation7 + $0x510] sm:$0xff]
    %v268 = vld [vmem:[#allocation7 + $0x518] sm:$0xff]
    %v269 = vld [vmem:[#allocation7 + $0x520] sm:$0xff]
    %v270 = vld [vmem:[#allocation7 + $0x528] sm:$0xff]
    %v271 = vld [vmem:[#allocation7 + $0x530] sm:$0xff]
    %v272 = vld [vmem:[#allocation7 + $0x538] sm:$0xff]
    %v273 = vld [vmem:[#allocation7 + $0x540] sm:$0xff]
    %v274 = vld [vmem:[#allocation7 + $0x548] sm:$0xff]
    %v275 = vld [vmem:[#allocation7 + $0x550] sm:$0xff]
    %v276 = vld [vmem:[#allocation7 + $0x558] sm:$0xff]
    %v277 = vld [vmem:[#allocation7 + $0x560] sm:$0xff]
    %v278 = vld [vmem:[#allocation7 + $0x568] sm:$0xff]
    %v279 = vld [vmem:[#allocation7 + $0x570] sm:$0xff]
    %v280 = vld [vmem:[#allocation7 + $0x578] sm:$0xff]
    %v281 = vld [vmem:[#allocation7 + $0x580] sm:$0xff]
    %v282 = vld [vmem:[#allocation7 + $0x588] sm:$0xff]
    %v283 = vld [vmem:[#allocation7 + $0x590] sm:$0xff]
    %v284 = vld [vmem:[#allocation7 + $0x598] sm:$0xff]
    %v285 = vld [vmem:[#allocation7 + $0x5a0] sm:$0xff]
    %v286 = vld [vmem:[#allocation7 + $0x5a8] sm:$0xff]
    %v287 = vld [vmem:[#allocation7 + $0x5b0] sm:$0xff]
    %v288 = vld [vmem:[#allocation7 + $0x5b8] sm:$0xff]
    %v289 = vld [vmem:[#allocation7 + $0x5c0] sm:$0xff]
    %v290 = vld [vmem:[#allocation7 + $0x5c8] sm:$0xff]
    %v291 = vld [vmem:[#allocation7 + $0x5d0] sm:$0xff]
    %v292 = vld [vmem:[#allocation7 + $0x5d8] sm:$0xff]
    %v293 = vld [vmem:[#allocation7 + $0x5e0] sm:$0xff]
    %v294 = vld [vmem:[#allocation7 + $0x5e8] sm:$0xff]
    %v295 = vld [vmem:[#allocation7 + $0x5f0] sm:$0xff]
    %v296 = vld [vmem:[#allocation7 + $0x5f8] sm:$0xff]
    %v297 = vld [vmem:[#allocation7 + $0x600] sm:$0xff]
    %v298 = vld [vmem:[#allocation7 + $0x608] sm:$0xff]
    %v299 = vld [vmem:[#allocation7 + $0x610] sm:$0xff]
    %v300 = vld [vmem:[#allocation7 + $0x618] sm:$0xff]
    %v301 = vld [vmem:[#allocation7 + $0x620] sm:$0xff]
    %v302 = vld [vmem:[#allocation7 + $0x628] sm:$0xff]
    %v303 = vld [vmem:[#allocation7 + $0x630] sm:$0xff]
    %v304 = vld [vmem:[#allocation7 + $0x638] sm:$0xff]
    %v305 = vld [vmem:[#allocation7 + $0x640] sm:$0xff]
    %v306 = vld [vmem:[#allocation7 + $0x648] sm:$0xff]
    %v307 = vld [vmem:[#allocation7 + $0x650] sm:$0xff]
    %v308 = vld [vmem:[#allocation7 + $0x658] sm:$0xff]
    %v309 = vld [vmem:[#allocation7 + $0x660] sm:$0xff]
    %v310 = vld [vmem:[#allocation7 + $0x668] sm:$0xff]
    %v311 = vld [vmem:[#allocation7 + $0x670] sm:$0xff]
    %v312 = vld [vmem:[#allocation7 + $0x678] sm:$0xff]
    %v313 = vld [vmem:[#allocation7 + $0x680] sm:$0xff]
    %v314 = vld [vmem:[#allocation7 + $0x688] sm:$0xff]
    %v315 = vld [vmem:[#allocation7 + $0x690] sm:$0xff]
    %v316 = vld [vmem:[#allocation7 + $0x698] sm:$0xff]
    %v317 = vld [vmem:[#allocation7 + $0x6a0] sm:$0xff]
    %v318 = vld [vmem:[#allocation7 + $0x6a8] sm:$0xff]
    %v319 = vld [vmem:[#allocation7 + $0x6b0] sm:$0xff]
    %v320 = vld [vmem:[#allocation7 + $0x6b8] sm:$0xff]
    %v321 = vld [vmem:[#allocation7 + $0x6c0] sm:$0xff]
    %v322 = vld [vmem:[#allocation7 + $0x6c8] sm:$0xff]
    %v323 = vld [vmem:[#allocation7 + $0x6d0] sm:$0xff]
    %v324 = vld [vmem:[#allocation7 + $0x6d8] sm:$0xff]
    %v325 = vld [vmem:[#allocation7 + $0x6e0] sm:$0xff]
    %v326 = vld [vmem:[#allocation7 + $0x6e8] sm:$0xff]
    %v327 = vld [vmem:[#allocation7 + $0x6f0] sm:$0xff]
    %v328 = vld [vmem:[#allocation7 + $0x6f8] sm:$0xff]
    %v329 = vld [vmem:[#allocation7 + $0x700] sm:$0xff]
    %v330 = vld [vmem:[#allocation7 + $0x708] sm:$0xff]
    %v331 = vld [vmem:[#allocation7 + $0x710] sm:$0xff]
    %v332 = vld [vmem:[#allocation7 + $0x718] sm:$0xff]
    %v333 = vld [vmem:[#allocation7 + $0x720] sm:$0xff]
    %v334 = vld [vmem:[#allocation7 + $0x728] sm:$0xff]
    %v335 = vld [vmem:[#allocation7 + $0x730] sm:$0xff]
    %v336 = vld [vmem:[#allocation7 + $0x738] sm:$0xff]
    %v337 = vld [vmem:[#allocation7 + $0x740] sm:$0xff]
    %v338 = vld [vmem:[#allocation7 + $0x748] sm:$0xff]
    %v339 = vld [vmem:[#allocation7 + $0x750] sm:$0xff]
    %v340 = vld [vmem:[#allocation7 + $0x758] sm:$0xff]
    %v341 = vld [vmem:[#allocation7 + $0x760] sm:$0xff]
    %v342 = vld [vmem:[#allocation7 + $0x768] sm:$0xff]
    %v343 = vld [vmem:[#allocation7 + $0x770] sm:$0xff]
    %v344 = vld [vmem:[#allocation7 + $0x778] sm:$0xff]
    %v345 = vld [vmem:[#allocation7 + $0x780] sm:$0xff]
    %v346 = vld [vmem:[#allocation7 + $0x788] sm:$0xff]
    %v347 = vld [vmem:[#allocation7 + $0x790] sm:$0xff]
    %v348 = vld [vmem:[#allocation7 + $0x798] sm:$0xff]
    %v349 = vld [vmem:[#allocation7 + $0x7a0] sm:$0xff]
    %v350 = vld [vmem:[#allocation7 + $0x7a8] sm:$0xff]
    %v351 = vld [vmem:[#allocation7 + $0x7b0] sm:$0xff]
    %v352 = vld [vmem:[#allocation7 + $0x7b8] sm:$0xff]
    %v353 = vld [vmem:[#allocation7 + $0x7c0] sm:$0xff]
    %v354 = vld [vmem:[#allocation7 + $0x7c8] sm:$0xff]
    %v355 = vld [vmem:[#allocation7 + $0x7d0] sm:$0xff]
    %v356 = vld [vmem:[#allocation7 + $0x7d8] sm:$0xff]
    %v357 = vld [vmem:[#allocation7 + $0x7e0] sm:$0xff]
    %v358 = vld [vmem:[#allocation7 + $0x7e8] sm:$0xff]
    %v359 = vld [vmem:[#allocation7 + $0x7f0] sm:$0xff]
    %v360 = vld [vmem:[#allocation7 + $0x7f8] sm:$0xff]
    %v361 = vld [vmem:[#allocation7 + $0x800] sm:$0xff]
    %v362 = vld [vmem:[#allocation7 + $0x808] sm:$0xff]
    %v363 = vld [vmem:[#allocation7 + $0x810] sm:$0xff]
    %v364 = vld [vmem:[#allocation7 + $0x818] sm:$0xff]
    %v365 = vld [vmem:[#allocation7 + $0x820] sm:$0xff]
    %v366 = vld [vmem:[#allocation7 + $0x828] sm:$0xff]
    %v367 = vld [vmem:[#allocation7 + $0x830] sm:$0xff]
    %v368 = vld [vmem:[#allocation7 + $0x838] sm:$0xff]
    %v369 = vld [vmem:[#allocation7 + $0x840] sm:$0xff]
    %v370 = vld [vmem:[#allocation7 + $0x848] sm:$0xff]
    %v371 = vld [vmem:[#allocation7 + $0x850] sm:$0xff]
    %v372 = vld [vmem:[#allocation7 + $0x858] sm:$0xff]
    %v373 = vld [vmem:[#allocation7 + $0x860] sm:$0xff]
    %v374 = vld [vmem:[#allocation7 + $0x868] sm:$0xff]
    %v375 = vld [vmem:[#allocation7 + $0x870] sm:$0xff]
    %v376 = vld [vmem:[#allocation7 + $0x878] sm:$0xff]
    %v377 = vld [vmem:[#allocation7 + $0x880] sm:$0xff]
    %v378 = vld [vmem:[#allocation7 + $0x888] sm:$0xff]
    %v379 = vld [vmem:[#allocation7 + $0x890] sm:$0xff]
    %v380 = vld [vmem:[#allocation7 + $0x898] sm:$0xff]
    %v381 = vld [vmem:[#allocation7 + $0x8a0] sm:$0xff]
    %v382 = vld [vmem:[#allocation7 + $0x8a8] sm:$0xff]
    %v383 = vld [vmem:[#allocation7 + $0x8b0] sm:$0xff]
    %v384 = vld [vmem:[#allocation7 + $0x8b8] sm:$0xff]
    %v385 = vld [vmem:[#allocation7 + $0x8c0] sm:$0xff]
    %v386 = vld [vmem:[#allocation7 + $0x8c8] sm:$0xff]
    %v387 = vld [vmem:[#allocation7 + $0x8d0] sm:$0xff]
    %v388 = vld [vmem:[#allocation7 + $0x8d8] sm:$0xff]
    %v389 = vld [vmem:[#allocation7 + $0x8e0] sm:$0xff]
    %v390 = vld [vmem:[#allocation7 + $0x8e8] sm:$0xff]
    %v391 = vld [vmem:[#allocation7 + $0x8f0] sm:$0xff]
    %v392 = vld [vmem:[#allocation7 + $0x8f8] sm:$0xff]
    %v393 = vld [vmem:[#allocation7 + $0x900] sm:$0xff]
    %v394 = vld [vmem:[#allocation7 + $0x908] sm:$0xff]
    %v395 = vld [vmem:[#allocation7 + $0x910] sm:$0xff]
    %v396 = vld [vmem:[#allocation7 + $0x918] sm:$0xff]
    %v397 = vld [vmem:[#allocation7 + $0x920] sm:$0xff]
    %v398 = vld [vmem:[#allocation7 + $0x928] sm:$0xff]
    %v399 = vld [vmem:[#allocation7 + $0x930] sm:$0xff]
    %v400 = vld [vmem:[#allocation7 + $0x938] sm:$0xff]
    %v401 = vld [vmem:[#allocation7 + $0x940] sm:$0xff]
    %v402 = vld [vmem:[#allocation7 + $0x948] sm:$0xff]
    %v403 = vld [vmem:[#allocation7 + $0x950] sm:$0xff]
    %v404 = vld [vmem:[#allocation7 + $0x958] sm:$0xff]
    %v405 = vld [vmem:[#allocation7 + $0x960] sm:$0xff]
    %v406 = vld [vmem:[#allocation7 + $0x968] sm:$0xff]
    %v407 = vld [vmem:[#allocation7 + $0x970] sm:$0xff]
    %v408 = vld [vmem:[#allocation7 + $0x978] sm:$0xff]
    %v409 = vld [vmem:[#allocation7 + $0x980] sm:$0xff]
    %v410 = vld [vmem:[#allocation7 + $0x988] sm:$0xff]
    %v411 = vld [vmem:[#allocation7 + $0x990] sm:$0xff]
    %v412 = vld [vmem:[#allocation7 + $0x998] sm:$0xff]
    %v413 = vld [vmem:[#allocation7 + $0x9a0] sm:$0xff]
    %v414 = vld [vmem:[#allocation7 + $0x9a8] sm:$0xff]
    %v415 = vld [vmem:[#allocation7 + $0x9b0] sm:$0xff]
    %v416 = vld [vmem:[#allocation7 + $0x9b8] sm:$0xff]
    %v417 = vld [vmem:[#allocation7 + $0x9c0] sm:$0xff]
    %v418 = vld [vmem:[#allocation7 + $0x9c8] sm:$0xff]
    %v419 = vld [vmem:[#allocation7 + $0x9d0] sm:$0xff]
    %v420 = vld [vmem:[#allocation7 + $0x9d8] sm:$0xff]
    %v421 = vld [vmem:[#allocation7 + $0x9e0] sm:$0xff]
    %v422 = vld [vmem:[#allocation7 + $0x9e8] sm:$0xff]
    %v423 = vld [vmem:[#allocation7 + $0x9f0] sm:$0xff]
    %v424 = vld [vmem:[#allocation7 + $0x9f8] sm:$0xff]
    %v425 = vld [vmem:[#allocation7 + $0xa00] sm:$0xff]
    %v426 = vld [vmem:[#allocation7 + $0xa08] sm:$0xff]
    %v427 = vld [vmem:[#allocation7 + $0xa10] sm:$0xff]
    %v428 = vld [vmem:[#allocation7 + $0xa18] sm:$0xff]
    %v429 = vld [vmem:[#allocation7 + $0xa20] sm:$0xff]
    %v430 = vld [vmem:[#allocation7 + $0xa28] sm:$0xff]
    %v431 = vld [vmem:[#allocation7 + $0xa30] sm:$0xff]
    %v432 = vld [vmem:[#allocation7 + $0xa38] sm:$0xff]
    %v433 = vld [vmem:[#allocation7 + $0xa40] sm:$0xff]
    %v434 = vld [vmem:[#allocation7 + $0xa48] sm:$0xff]
    %v435 = vld [vmem:[#allocation7 + $0xa50] sm:$0xff]
    %v436 = vld [vmem:[#allocation7 + $0xa58] sm:$0xff]
    %v437 = vld [vmem:[#allocation7 + $0xa60] sm:$0xff]
    %v438 = vld [vmem:[#allocation7 + $0xa68] sm:$0xff]
    %v439 = vld [vmem:[#allocation7 + $0xa70] sm:$0xff]
    %v440 = vld [vmem:[#allocation7 + $0xa78] sm:$0xff]
    %v441 = vld [vmem:[#allocation7 + $0xa80] sm:$0xff]
    %v442 = vld [vmem:[#allocation7 + $0xa88] sm:$0xff]
    %v443 = vld [vmem:[#allocation7 + $0xa90] sm:$0xff]
    %v444 = vld [vmem:[#allocation7 + $0xa98] sm:$0xff]
    %v445 = vld [vmem:[#allocation7 + $0xaa0] sm:$0xff]
    %v446 = vld [vmem:[#allocation7 + $0xaa8] sm:$0xff]
    %v447 = vld [vmem:[#allocation7 + $0xab0] sm:$0xff]
    %v448 = vld [vmem:[#allocation7 + $0xab8] sm:$0xff]
    %v449 = vld [vmem:[#allocation7 + $0xac0] sm:$0xff]
    %v450 = vld [vmem:[#allocation7 + $0xac8] sm:$0xff]
    %v451 = vld [vmem:[#allocation7 + $0xad0] sm:$0xff]
    %v452 = vld [vmem:[#allocation7 + $0xad8] sm:$0xff]
    %v453 = vld [vmem:[#allocation7 + $0xae0] sm:$0xff]
    %v454 = vld [vmem:[#allocation7 + $0xae8] sm:$0xff]
    %v455 = vld [vmem:[#allocation7 + $0xaf0] sm:$0xff]
    %v456 = vld [vmem:[#allocation7 + $0xaf8] sm:$0xff]
    %v457 = vld [vmem:[#allocation7 + $0xb00] sm:$0xff]
    %v458 = vld [vmem:[#allocation7 + $0xb08] sm:$0xff]
    %v459 = vld [vmem:[#allocation7 + $0xb10] sm:$0xff]
    %v460 = vld [vmem:[#allocation7 + $0xb18] sm:$0xff]
    %v461 = vld [vmem:[#allocation7 + $0xb20] sm:$0xff]
    %v462 = vld [vmem:[#allocation7 + $0xb28] sm:$0xff]
    %v463 = vld [vmem:[#allocation7 + $0xb30] sm:$0xff]
    %v464 = vld [vmem:[#allocation7 + $0xb38] sm:$0xff]
    %v465 = vld [vmem:[#allocation7 + $0xb40] sm:$0xff]
    %v466 = vld [vmem:[#allocation7 + $0xb48] sm:$0xff]
    %v467 = vld [vmem:[#allocation7 + $0xb50] sm:$0xff]
    %v468 = vld [vmem:[#allocation7 + $0xb58] sm:$0xff]
    %v469 = vld [vmem:[#allocation7 + $0xb60] sm:$0xff]
    %v470 = vld [vmem:[#allocation7 + $0xb68] sm:$0xff]
    %v471 = vld [vmem:[#allocation7 + $0xb70] sm:$0xff]
    %v472 = vld [vmem:[#allocation7 + $0xb78] sm:$0xff]
    %v473 = vld [vmem:[#allocation7 + $0xb80] sm:$0xff]
    %v474 = vld [vmem:[#allocation7 + $0xb88] sm:$0xff]
    %v475 = vld [vmem:[#allocation7 + $0xb90] sm:$0xff]
    %v476 = vld [vmem:[#allocation7 + $0xb98] sm:$0xff]
    %v477 = vld [vmem:[#allocation7 + $0xba0] sm:$0xff]
    %v478 = vld [vmem:[#allocation7 + $0xba8] sm:$0xff]
    %v479 = vld [vmem:[#allocation7 + $0xbb0] sm:$0xff]
    %v480 = vld [vmem:[#allocation7 + $0xbb8] sm:$0xff]
    %v481 = vld [vmem:[#allocation7 + $0xbc0] sm:$0xff]
    %v482 = vld [vmem:[#allocation7 + $0xbc8] sm:$0xff]
    %v483 = vld [vmem:[#allocation7 + $0xbd0] sm:$0xff]
    %v484 = vld [vmem:[#allocation7 + $0xbd8] sm:$0xff]
    %v485 = vld [vmem:[#allocation7 + $0xbe0] sm:$0xff]
    %v486 = vld [vmem:[#allocation7 + $0xbe8] sm:$0xff]
    %v487 = vld [vmem:[#allocation7 + $0xbf0] sm:$0xff]
    %v488 = vld [vmem:[#allocation7 + $0xbf8] sm:$0xff]
    %v489 = vld [vmem:[#allocation7 + $0xc00] sm:$0xff]
    %v490 = vld [vmem:[#allocation7 + $0xc08] sm:$0xff]
    %v491 = vld [vmem:[#allocation7 + $0xc10] sm:$0xff]
    %v492 = vld [vmem:[#allocation7 + $0xc18] sm:$0xff]
    %v493 = vld [vmem:[#allocation7 + $0xc20] sm:$0xff]
    %v494 = vld [vmem:[#allocation7 + $0xc28] sm:$0xff]
    %v495 = vld [vmem:[#allocation7 + $0xc30] sm:$0xff]
    %v496 = vld [vmem:[#allocation7 + $0xc38] sm:$0xff]
    %v497 = vld [vmem:[#allocation7 + $0xc40] sm:$0xff]
    %v498 = vld [vmem:[#allocation7 + $0xc48] sm:$0xff]
    %v499 = vld [vmem:[#allocation7 + $0xc50] sm:$0xff]
    %v500 = vld [vmem:[#allocation7 + $0xc58] sm:$0xff]
    %v501 = vld [vmem:[#allocation7 + $0xc60] sm:$0xff]
    %v502 = vld [vmem:[#allocation7 + $0xc68] sm:$0xff]
    %v503 = vld [vmem:[#allocation7 + $0xc70] sm:$0xff]
    %v504 = vld [vmem:[#allocation7 + $0xc78] sm:$0xff]
    %v505 = vld [vmem:[#allocation7 + $0xc80] sm:$0xff]
    %v506 = vld [vmem:[#allocation7 + $0xc88] sm:$0xff]
    %v507 = vld [vmem:[#allocation7 + $0xc90] sm:$0xff]
    %v508 = vld [vmem:[#allocation7 + $0xc98] sm:$0xff]
    %v509 = vld [vmem:[#allocation7 + $0xca0] sm:$0xff]
    %v510 = vld [vmem:[#allocation7 + $0xca8] sm:$0xff]
    %v511 = vld [vmem:[#allocation7 + $0xcb0] sm:$0xff]
    %v512 = vld [vmem:[#allocation7 + $0xcb8] sm:$0xff]
    %v513 = vld [vmem:[#allocation7 + $0xcc0] sm:$0xff]
    %v514 = vld [vmem:[#allocation7 + $0xcc8] sm:$0xff]
    %v515 = vld [vmem:[#allocation7 + $0xcd0] sm:$0xff]
    %v516 = vld [vmem:[#allocation7 + $0xcd8] sm:$0xff]
    %v517 = vld [vmem:[#allocation7 + $0xce0] sm:$0xff]
    %v518 = vld [vmem:[#allocation7 + $0xce8] sm:$0xff]
    %v519 = vld [vmem:[#allocation7 + $0xcf0] sm:$0xff]
    %v520 = vld [vmem:[#allocation7 + $0xcf8] sm:$0xff]
    %v521 = vld [vmem:[#allocation7 + $0xd00] sm:$0xff]
    %v522 = vld [vmem:[#allocation7 + $0xd08] sm:$0xff]
    %v523 = vld [vmem:[#allocation7 + $0xd10] sm:$0xff]
    %v524 = vld [vmem:[#allocation7 + $0xd18] sm:$0xff]
    %v525 = vld [vmem:[#allocation7 + $0xd20] sm:$0xff]
    %v526 = vld [vmem:[#allocation7 + $0xd28] sm:$0xff]
    %v527 = vld [vmem:[#allocation7 + $0xd30] sm:$0xff]
    %v528 = vld [vmem:[#allocation7 + $0xd38] sm:$0xff]
    %v529 = vld [vmem:[#allocation7 + $0xd40] sm:$0xff]
    %v530 = vld [vmem:[#allocation7 + $0xd48] sm:$0xff]
    %v531 = vld [vmem:[#allocation7 + $0xd50] sm:$0xff]
    %v532 = vld [vmem:[#allocation7 + $0xd58] sm:$0xff]
    %v533 = vld [vmem:[#allocation7 + $0xd60] sm:$0xff]
    %v534 = vld [vmem:[#allocation7 + $0xd68] sm:$0xff]
    %v535 = vld [vmem:[#allocation7 + $0xd70] sm:$0xff]
    %v536 = vld [vmem:[#allocation7 + $0xd78] sm:$0xff]
    %v537 = vld [vmem:[#allocation7 + $0xd80] sm:$0xff]
    %v538 = vld [vmem:[#allocation7 + $0xd88] sm:$0xff]
    %v539 = vld [vmem:[#allocation7 + $0xd90] sm:$0xff]
    %v540 = vld [vmem:[#allocation7 + $0xd98] sm:$0xff]
    %v541 = vld [vmem:[#allocation7 + $0xda0] sm:$0xff]
    %v542 = vld [vmem:[#allocation7 + $0xda8] sm:$0xff]
    %v543 = vld [vmem:[#allocation7 + $0xdb0] sm:$0xff]
    %v544 = vld [vmem:[#allocation7 + $0xdb8] sm:$0xff]
    %v545 = vld [vmem:[#allocation7 + $0xdc0] sm:$0xff]
    %v546 = vld [vmem:[#allocation7 + $0xdc8] sm:$0xff]
    %v547 = vld [vmem:[#allocation7 + $0xdd0] sm:$0xff]
    %v548 = vld [vmem:[#allocation7 + $0xdd8] sm:$0xff]
    %v549 = vld [vmem:[#allocation7 + $0xde0] sm:$0xff]
    %v550 = vld [vmem:[#allocation7 + $0xde8] sm:$0xff]
    %v551 = vld [vmem:[#allocation7 + $0xdf0] sm:$0xff]
    %v552 = vld [vmem:[#allocation7 + $0xdf8] sm:$0xff]
    %v553 = vld [vmem:[#allocation7 + $0xe00] sm:$0xff]
    %v554 = vld [vmem:[#allocation7 + $0xe08] sm:$0xff]
    %v555 = vld [vmem:[#allocation7 + $0xe10] sm:$0xff]
    %v556 = vld [vmem:[#allocation7 + $0xe18] sm:$0xff]
    %v557 = vld [vmem:[#allocation7 + $0xe20] sm:$0xff]
    %v558 = vld [vmem:[#allocation7 + $0xe28] sm:$0xff]
    %v559 = vld [vmem:[#allocation7 + $0xe30] sm:$0xff]
    %v560 = vld [vmem:[#allocation7 + $0xe38] sm:$0xff]
    %v561 = vld [vmem:[#allocation7 + $0xe40] sm:$0xff]
    %v562 = vld [vmem:[#allocation7 + $0xe48] sm:$0xff]
    %v563 = vld [vmem:[#allocation7 + $0xe50] sm:$0xff]
    %v564 = vld [vmem:[#allocation7 + $0xe58] sm:$0xff]
    %v565 = vld [vmem:[#allocation7 + $0xe60] sm:$0xff]
    %v566 = vld [vmem:[#allocation7 + $0xe68] sm:$0xff]
    %v567 = vld [vmem:[#allocation7 + $0xe70] sm:$0xff]
    %v568 = vld [vmem:[#allocation7 + $0xe78] sm:$0xff]
    %v569 = vld [vmem:[#allocation7 + $0xe80] sm:$0xff]
    %v570 = vld [vmem:[#allocation7 + $0xe88] sm:$0xff]
    %v571 = vld [vmem:[#allocation7 + $0xe90] sm:$0xff]
    %v572 = vld [vmem:[#allocation7 + $0xe98] sm:$0xff]
    %v573 = vld [vmem:[#allocation7 + $0xea0] sm:$0xff]
    %v574 = vld [vmem:[#allocation7 + $0xea8] sm:$0xff]
    %v575 = vld [vmem:[#allocation7 + $0xeb0] sm:$0xff]
    %v576 = vld [vmem:[#allocation7 + $0xeb8] sm:$0xff]
    %v577 = vld [vmem:[#allocation7 + $0xec0] sm:$0xff]
    %v578 = vld [vmem:[#allocation7 + $0xec8] sm:$0xff]
    %v579 = vld [vmem:[#allocation7 + $0xed0] sm:$0xff]
    %v580 = vld [vmem:[#allocation7 + $0xed8] sm:$0xff]
    %v581 = vld [vmem:[#allocation7 + $0xee0] sm:$0xff]
    %v582 = vld [vmem:[#allocation7 + $0xee8] sm:$0xff]
    %v583 = vld [vmem:[#allocation7 + $0xef0] sm:$0xff]
    %v584 = vld [vmem:[#allocation7 + $0xef8] sm:$0xff]
    %v585 = vld [vmem:[#allocation7 + $0xf00] sm:$0xff]
    %v586 = vld [vmem:[#allocation7 + $0xf08] sm:$0xff]
    %v587 = vld [vmem:[#allocation7 + $0xf10] sm:$0xff]
    %v588 = vld [vmem:[#allocation7 + $0xf18] sm:$0xff]
    %v589 = vld [vmem:[#allocation7 + $0xf20] sm:$0xff]
    %v590 = vld [vmem:[#allocation7 + $0xf28] sm:$0xff]
    %v591 = vld [vmem:[#allocation7 + $0xf30] sm:$0xff]
    %v592 = vld [vmem:[#allocation7 + $0xf38] sm:$0xff]
    %v593 = vld [vmem:[#allocation7 + $0xf40] sm:$0xff]
    %v594 = vld [vmem:[#allocation7 + $0xf48] sm:$0xff]
    %v595 = vld [vmem:[#allocation7 + $0xf50] sm:$0xff]
    %v596 = vld [vmem:[#allocation7 + $0xf58] sm:$0xff]
    %v597 = vld [vmem:[#allocation7 + $0xf60] sm:$0xff]
    %v598 = vld [vmem:[#allocation7 + $0xf68] sm:$0xff]
    %v599 = vld [vmem:[#allocation7 + $0xf70] sm:$0xff]
    %v600 = vld [vmem:[#allocation7 + $0xf78] sm:$0xff]
    %v601 = vld [vmem:[#allocation7 + $0xf80] sm:$0xff]
    %v602 = vld [vmem:[#allocation7 + $0xf88] sm:$0xff]
    %v603 = vld [vmem:[#allocation7 + $0xf90] sm:$0xff]
    %v604 = vld [vmem:[#allocation7 + $0xf98] sm:$0xff]
    %v605 = vld [vmem:[#allocation7 + $0xfa0] sm:$0xff]
    %v606 = vld [vmem:[#allocation7 + $0xfa8] sm:$0xff]
    %v607 = vld [vmem:[#allocation7 + $0xfb0] sm:$0xff]
    %v608 = vld [vmem:[#allocation7 + $0xfb8] sm:$0xff]
    %v609 = vld [vmem:[#allocation7 + $0xfc0] sm:$0xff]
    %v610 = vld [vmem:[#allocation7 + $0xfc8] sm:$0xff]
    %v611 = vld [vmem:[#allocation7 + $0xfd0] sm:$0xff]
    %v612 = vld [vmem:[#allocation7 + $0xfd8] sm:$0xff]
    %v613 = vld [vmem:[#allocation7 + $0xfe0] sm:$0xff]
    %v614 = vld [vmem:[#allocation7 + $0xfe8] sm:$0xff]
    %v615 = vld [vmem:[#allocation7 + $0xff0] sm:$0xff]
    %v616 = vld [vmem:[#allocation7 + $0xff8] sm:$0xff]
    %v1129 = vunpack.c.l.b16 %v105
    %v1130 = vunpack.c.h.b16 %v105
    %v1131 = vunpack.c.l.b16 %v106
    %v1132 = vunpack.c.h.b16 %v106
    %v1133 = vunpack.c.l.b16 %v107
    %v1134 = vunpack.c.h.b16 %v107
    %v1135 = vunpack.c.l.b16 %v108
    %v1136 = vunpack.c.h.b16 %v108
    %v1137 = vunpack.c.l.b16 %v109
    %v1138 = vunpack.c.h.b16 %v109
    %v1139 = vunpack.c.l.b16 %v110
    %v1140 = vunpack.c.h.b16 %v110
    %v1141 = vunpack.c.l.b16 %v111
    %v1142 = vunpack.c.h.b16 %v111
    %v1143 = vunpack.c.l.b16 %v112
    %v1144 = vunpack.c.h.b16 %v112
    %v1145 = vunpack.c.l.b16 %v113
    %v1146 = vunpack.c.h.b16 %v113
    %v1147 = vunpack.c.l.b16 %v114
    %v1148 = vunpack.c.h.b16 %v114
    %v1149 = vunpack.c.l.b16 %v115
    %v1150 = vunpack.c.h.b16 %v115
    %v1151 = vunpack.c.l.b16 %v116
    %v1152 = vunpack.c.h.b16 %v116
    %v1153 = vunpack.c.l.b16 %v117
    %v1154 = vunpack.c.h.b16 %v117
    %v1155 = vunpack.c.l.b16 %v118
    %v1156 = vunpack.c.h.b16 %v118
    %v1157 = vunpack.c.l.b16 %v119
    %v1158 = vunpack.c.h.b16 %v119
    %v1159 = vunpack.c.l.b16 %v120
    %v1160 = vunpack.c.h.b16 %v120
    %v1161 = vunpack.c.l.b16 %v121
    %v1162 = vunpack.c.h.b16 %v121
    %v1163 = vunpack.c.l.b16 %v122
    %v1164 = vunpack.c.h.b16 %v122
    %v1165 = vunpack.c.l.b16 %v123
    %v1166 = vunpack.c.h.b16 %v123
    %v1167 = vunpack.c.l.b16 %v124
    %v1168 = vunpack.c.h.b16 %v124
    %v1169 = vunpack.c.l.b16 %v125
    %v1170 = vunpack.c.h.b16 %v125
    %v1171 = vunpack.c.l.b16 %v126
    %v1172 = vunpack.c.h.b16 %v126
    %v1173 = vunpack.c.l.b16 %v127
    %v1174 = vunpack.c.h.b16 %v127
    %v1175 = vunpack.c.l.b16 %v128
    %v1176 = vunpack.c.h.b16 %v128
    %v1177 = vunpack.c.l.b16 %v129
    %v1178 = vunpack.c.h.b16 %v129
    %v1179 = vunpack.c.l.b16 %v130
    %v1180 = vunpack.c.h.b16 %v130
    %v1181 = vunpack.c.l.b16 %v131
    %v1182 = vunpack.c.h.b16 %v131
    %v1183 = vunpack.c.l.b16 %v132
    %v1184 = vunpack.c.h.b16 %v132
    %v1185 = vunpack.c.l.b16 %v133
    %v1186 = vunpack.c.h.b16 %v133
    %v1187 = vunpack.c.l.b16 %v134
    %v1188 = vunpack.c.h.b16 %v134
    %v1189 = vunpack.c.l.b16 %v135
    %v1190 = vunpack.c.h.b16 %v135
    %v1191 = vunpack.c.l.b16 %v136
    %v1192 = vunpack.c.h.b16 %v136
    %v1193 = vunpack.c.l.b16 %v137
    %v1194 = vunpack.c.h.b16 %v137
    %v1195 = vunpack.c.l.b16 %v138
    %v1196 = vunpack.c.h.b16 %v138
    %v1197 = vunpack.c.l.b16 %v139
    %v1198 = vunpack.c.h.b16 %v139
    %v1199 = vunpack.c.l.b16 %v140
    %v1200 = vunpack.c.h.b16 %v140
    %v1201 = vunpack.c.l.b16 %v141
    %v1202 = vunpack.c.h.b16 %v141
    %v1203 = vunpack.c.l.b16 %v142
    %v1204 = vunpack.c.h.b16 %v142
    %v1205 = vunpack.c.l.b16 %v143
    %v1206 = vunpack.c.h.b16 %v143
    %v1207 = vunpack.c.l.b16 %v144
    %v1208 = vunpack.c.h.b16 %v144
    %v1209 = vunpack.c.l.b16 %v145
    %v1210 = vunpack.c.h.b16 %v145
    %v1211 = vunpack.c.l.b16 %v146
    %v1212 = vunpack.c.h.b16 %v146
    %v1213 = vunpack.c.l.b16 %v147
    %v1214 = vunpack.c.h.b16 %v147
    %v1215 = vunpack.c.l.b16 %v148
    %v1216 = vunpack.c.h.b16 %v148
    %v1217 = vunpack.c.l.b16 %v149
    %v1218 = vunpack.c.h.b16 %v149
    %v1219 = vunpack.c.l.b16 %v150
    %v1220 = vunpack.c.h.b16 %v150
    %v1221 = vunpack.c.l.b16 %v151
    %v1222 = vunpack.c.h.b16 %v151
    %v1223 = vunpack.c.l.b16 %v152
    %v1224 = vunpack.c.h.b16 %v152
    %v1225 = vunpack.c.l.b16 %v153
    %v1226 = vunpack.c.h.b16 %v153
    %v1227 = vunpack.c.l.b16 %v154
    %v1228 = vunpack.c.h.b16 %v154
    %v1229 = vunpack.c.l.b16 %v155
    %v1230 = vunpack.c.h.b16 %v155
    %v1231 = vunpack.c.l.b16 %v156
    %v1232 = vunpack.c.h.b16 %v156
    %v1233 = vunpack.c.l.b16 %v157
    %v1234 = vunpack.c.h.b16 %v157
    %v1235 = vunpack.c.l.b16 %v158
    %v1236 = vunpack.c.h.b16 %v158
    %v1237 = vunpack.c.l.b16 %v159
    %v1238 = vunpack.c.h.b16 %v159
    %v1239 = vunpack.c.l.b16 %v160
    %v1240 = vunpack.c.h.b16 %v160
    %v1241 = vunpack.c.l.b16 %v161
    %v1242 = vunpack.c.h.b16 %v161
    %v1243 = vunpack.c.l.b16 %v162
    %v1244 = vunpack.c.h.b16 %v162
    %v1245 = vunpack.c.l.b16 %v163
    %v1246 = vunpack.c.h.b16 %v163
    %v1247 = vunpack.c.l.b16 %v164
    %v1248 = vunpack.c.h.b16 %v164
    %v1249 = vunpack.c.l.b16 %v165
    %v1250 = vunpack.c.h.b16 %v165
    %v1251 = vunpack.c.l.b16 %v166
    %v1252 = vunpack.c.h.b16 %v166
    %v1253 = vunpack.c.l.b16 %v167
    %v1254 = vunpack.c.h.b16 %v167
    %v1255 = vunpack.c.l.b16 %v168
    %v1256 = vunpack.c.h.b16 %v168
    %v1257 = vunpack.c.l.b16 %v169
    %v1258 = vunpack.c.h.b16 %v169
    %v1259 = vunpack.c.l.b16 %v170
    %v1260 = vunpack.c.h.b16 %v170
    %v1261 = vunpack.c.l.b16 %v171
    %v1262 = vunpack.c.h.b16 %v171
    %v1263 = vunpack.c.l.b16 %v172
    %v1264 = vunpack.c.h.b16 %v172
    %v1265 = vunpack.c.l.b16 %v173
    %v1266 = vunpack.c.h.b16 %v173
    %v1267 = vunpack.c.l.b16 %v174
    %v1268 = vunpack.c.h.b16 %v174
    %v1269 = vunpack.c.l.b16 %v175
    %v1270 = vunpack.c.h.b16 %v175
    %v1271 = vunpack.c.l.b16 %v176
    %v1272 = vunpack.c.h.b16 %v176
    %v1273 = vunpack.c.l.b16 %v177
    %v1274 = vunpack.c.h.b16 %v177
    %v1275 = vunpack.c.l.b16 %v178
    %v1276 = vunpack.c.h.b16 %v178
    %v1277 = vunpack.c.l.b16 %v179
    %v1278 = vunpack.c.h.b16 %v179
    %v1279 = vunpack.c.l.b16 %v180
    %v1280 = vunpack.c.h.b16 %v180
    %v1281 = vunpack.c.l.b16 %v181
    %v1282 = vunpack.c.h.b16 %v181
    %v1283 = vunpack.c.l.b16 %v182
    %v1284 = vunpack.c.h.b16 %v182
    %v1285 = vunpack.c.l.b16 %v183
    %v1286 = vunpack.c.h.b16 %v183
    %v1287 = vunpack.c.l.b16 %v184
    %v1288 = vunpack.c.h.b16 %v184
    %v1289 = vunpack.c.l.b16 %v185
    %v1290 = vunpack.c.h.b16 %v185
    %v1291 = vunpack.c.l.b16 %v186
    %v1292 = vunpack.c.h.b16 %v186
    %v1293 = vunpack.c.l.b16 %v187
    %v1294 = vunpack.c.h.b16 %v187
    %v1295 = vunpack.c.l.b16 %v188
    %v1296 = vunpack.c.h.b16 %v188
    %v1297 = vunpack.c.l.b16 %v189
    %v1298 = vunpack.c.h.b16 %v189
    %v1299 = vunpack.c.l.b16 %v190
    %v1300 = vunpack.c.h.b16 %v190
    %v1301 = vunpack.c.l.b16 %v191
    %v1302 = vunpack.c.h.b16 %v191
    %v1303 = vunpack.c.l.b16 %v192
    %v1304 = vunpack.c.h.b16 %v192
    %v1305 = vunpack.c.l.b16 %v193
    %v1306 = vunpack.c.h.b16 %v193
    %v1307 = vunpack.c.l.b16 %v194
    %v1308 = vunpack.c.h.b16 %v194
    %v1309 = vunpack.c.l.b16 %v195
    %v1310 = vunpack.c.h.b16 %v195
    %v1311 = vunpack.c.l.b16 %v196
    %v1312 = vunpack.c.h.b16 %v196
    %v1313 = vunpack.c.l.b16 %v197
    %v1314 = vunpack.c.h.b16 %v197
    %v1315 = vunpack.c.l.b16 %v198
    %v1316 = vunpack.c.h.b16 %v198
    %v1317 = vunpack.c.l.b16 %v199
    %v1318 = vunpack.c.h.b16 %v199
    %v1319 = vunpack.c.l.b16 %v200
    %v1320 = vunpack.c.h.b16 %v200
    %v1321 = vunpack.c.l.b16 %v201
    %v1322 = vunpack.c.h.b16 %v201
    %v1323 = vunpack.c.l.b16 %v202
    %v1324 = vunpack.c.h.b16 %v202
    %v1325 = vunpack.c.l.b16 %v203
    %v1326 = vunpack.c.h.b16 %v203
    %v1327 = vunpack.c.l.b16 %v204
    %v1328 = vunpack.c.h.b16 %v204
    %v1329 = vunpack.c.l.b16 %v205
    %v1330 = vunpack.c.h.b16 %v205
    %v1331 = vunpack.c.l.b16 %v206
    %v1332 = vunpack.c.h.b16 %v206
    %v1333 = vunpack.c.l.b16 %v207
    %v1334 = vunpack.c.h.b16 %v207
    %v1335 = vunpack.c.l.b16 %v208
    %v1336 = vunpack.c.h.b16 %v208
    %v1337 = vunpack.c.l.b16 %v209
    %v1338 = vunpack.c.h.b16 %v209
    %v1339 = vunpack.c.l.b16 %v210
    %v1340 = vunpack.c.h.b16 %v210
    %v1341 = vunpack.c.l.b16 %v211
    %v1342 = vunpack.c.h.b16 %v211
    %v1343 = vunpack.c.l.b16 %v212
    %v1344 = vunpack.c.h.b16 %v212
    %v1345 = vunpack.c.l.b16 %v213
    %v1346 = vunpack.c.h.b16 %v213
    %v1347 = vunpack.c.l.b16 %v214
    %v1348 = vunpack.c.h.b16 %v214
    %v1349 = vunpack.c.l.b16 %v215
    %v1350 = vunpack.c.h.b16 %v215
    %v1351 = vunpack.c.l.b16 %v216
    %v1352 = vunpack.c.h.b16 %v216
    %v1353 = vunpack.c.l.b16 %v217
    %v1354 = vunpack.c.h.b16 %v217
    %v1355 = vunpack.c.l.b16 %v218
    %v1356 = vunpack.c.h.b16 %v218
    %v1357 = vunpack.c.l.b16 %v219
    %v1358 = vunpack.c.h.b16 %v219
    %v1359 = vunpack.c.l.b16 %v220
    %v1360 = vunpack.c.h.b16 %v220
    %v1361 = vunpack.c.l.b16 %v221
    %v1362 = vunpack.c.h.b16 %v221
    %v1363 = vunpack.c.l.b16 %v222
    %v1364 = vunpack.c.h.b16 %v222
    %v1365 = vunpack.c.l.b16 %v223
    %v1366 = vunpack.c.h.b16 %v223
    %v1367 = vunpack.c.l.b16 %v224
    %v1368 = vunpack.c.h.b16 %v224
    %v1369 = vunpack.c.l.b16 %v225
    %v1370 = vunpack.c.h.b16 %v225
    %v1371 = vunpack.c.l.b16 %v226
    %v1372 = vunpack.c.h.b16 %v226
    %v1373 = vunpack.c.l.b16 %v227
    %v1374 = vunpack.c.h.b16 %v227
    %v1375 = vunpack.c.l.b16 %v228
    %v1376 = vunpack.c.h.b16 %v228
    %v1377 = vunpack.c.l.b16 %v229
    %v1378 = vunpack.c.h.b16 %v229
    %v1379 = vunpack.c.l.b16 %v230
    %v1380 = vunpack.c.h.b16 %v230
    %v1381 = vunpack.c.l.b16 %v231
    %v1382 = vunpack.c.h.b16 %v231
    %v1383 = vunpack.c.l.b16 %v232
    %v1384 = vunpack.c.h.b16 %v232
    %v1385 = vunpack.c.l.b16 %v233
    %v1386 = vunpack.c.h.b16 %v233
    %v1387 = vunpack.c.l.b16 %v234
    %v1388 = vunpack.c.h.b16 %v234
    %v1389 = vunpack.c.l.b16 %v235
    %v1390 = vunpack.c.h.b16 %v235
    %v1391 = vunpack.c.l.b16 %v236
    %v1392 = vunpack.c.h.b16 %v236
    %v1393 = vunpack.c.l.b16 %v237
    %v1394 = vunpack.c.h.b16 %v237
    %v1395 = vunpack.c.l.b16 %v238
    %v1396 = vunpack.c.h.b16 %v238
    %v1397 = vunpack.c.l.b16 %v239
    %v1398 = vunpack.c.h.b16 %v239
    %v1399 = vunpack.c.l.b16 %v240
    %v1400 = vunpack.c.h.b16 %v240
    %v1401 = vunpack.c.l.b16 %v241
    %v1402 = vunpack.c.h.b16 %v241
    %v1403 = vunpack.c.l.b16 %v242
    %v1404 = vunpack.c.h.b16 %v242
    %v1405 = vunpack.c.l.b16 %v243
    %v1406 = vunpack.c.h.b16 %v243
    %v1407 = vunpack.c.l.b16 %v244
    %v1408 = vunpack.c.h.b16 %v244
    %v1409 = vunpack.c.l.b16 %v245
    %v1410 = vunpack.c.h.b16 %v245
    %v1411 = vunpack.c.l.b16 %v246
    %v1412 = vunpack.c.h.b16 %v246
    %v1413 = vunpack.c.l.b16 %v247
    %v1414 = vunpack.c.h.b16 %v247
    %v1415 = vunpack.c.l.b16 %v248
    %v1416 = vunpack.c.h.b16 %v248
    %v1417 = vunpack.c.l.b16 %v249
    %v1418 = vunpack.c.h.b16 %v249
    %v1419 = vunpack.c.l.b16 %v250
    %v1420 = vunpack.c.h.b16 %v250
    %v1421 = vunpack.c.l.b16 %v251
    %v1422 = vunpack.c.h.b16 %v251
    %v1423 = vunpack.c.l.b16 %v252
    %v1424 = vunpack.c.h.b16 %v252
    %v1425 = vunpack.c.l.b16 %v253
    %v1426 = vunpack.c.h.b16 %v253
    %v1427 = vunpack.c.l.b16 %v254
    %v1428 = vunpack.c.h.b16 %v254
    %v1429 = vunpack.c.l.b16 %v255
    %v1430 = vunpack.c.h.b16 %v255
    %v1431 = vunpack.c.l.b16 %v256
    %v1432 = vunpack.c.h.b16 %v256
    %v1433 = vunpack.c.l.b16 %v257
    %v1434 = vunpack.c.h.b16 %v257
    %v1435 = vunpack.c.l.b16 %v258
    %v1436 = vunpack.c.h.b16 %v258
    %v1437 = vunpack.c.l.b16 %v259
    %v1438 = vunpack.c.h.b16 %v259
    %v1439 = vunpack.c.l.b16 %v260
    %v1440 = vunpack.c.h.b16 %v260
    %v1441 = vunpack.c.l.b16 %v261
    %v1442 = vunpack.c.h.b16 %v261
    %v1443 = vunpack.c.l.b16 %v262
    %v1444 = vunpack.c.h.b16 %v262
    %v1445 = vunpack.c.l.b16 %v263
    %v1446 = vunpack.c.h.b16 %v263
    %v1447 = vunpack.c.l.b16 %v264
    %v1448 = vunpack.c.h.b16 %v264
    %v1449 = vunpack.c.l.b16 %v265
    %v1450 = vunpack.c.h.b16 %v265
    %v1451 = vunpack.c.l.b16 %v266
    %v1452 = vunpack.c.h.b16 %v266
    %v1453 = vunpack.c.l.b16 %v267
    %v1454 = vunpack.c.h.b16 %v267
    %v1455 = vunpack.c.l.b16 %v268
    %v1456 = vunpack.c.h.b16 %v268
    %v1457 = vunpack.c.l.b16 %v269
    %v1458 = vunpack.c.h.b16 %v269
    %v1459 = vunpack.c.l.b16 %v270
    %v1460 = vunpack.c.h.b16 %v270
    %v1461 = vunpack.c.l.b16 %v271
    %v1462 = vunpack.c.h.b16 %v271
    %v1463 = vunpack.c.l.b16 %v272
    %v1464 = vunpack.c.h.b16 %v272
    %v1465 = vunpack.c.l.b16 %v273
    %v1466 = vunpack.c.h.b16 %v273
    %v1467 = vunpack.c.l.b16 %v274
    %v1468 = vunpack.c.h.b16 %v274
    %v1469 = vunpack.c.l.b16 %v275
    %v1470 = vunpack.c.h.b16 %v275
    %v1471 = vunpack.c.l.b16 %v276
    %v1472 = vunpack.c.h.b16 %v276
    %v1473 = vunpack.c.l.b16 %v277
    %v1474 = vunpack.c.h.b16 %v277
    %v1475 = vunpack.c.l.b16 %v278
    %v1476 = vunpack.c.h.b16 %v278
    %v1477 = vunpack.c.l.b16 %v279
    %v1478 = vunpack.c.h.b16 %v279
    %v1479 = vunpack.c.l.b16 %v280
    %v1480 = vunpack.c.h.b16 %v280
    %v1481 = vunpack.c.l.b16 %v281
    %v1482 = vunpack.c.h.b16 %v281
    %v1483 = vunpack.c.l.b16 %v282
    %v1484 = vunpack.c.h.b16 %v282
    %v1485 = vunpack.c.l.b16 %v283
    %v1486 = vunpack.c.h.b16 %v283
    %v1487 = vunpack.c.l.b16 %v284
    %v1488 = vunpack.c.h.b16 %v284
    %v1489 = vunpack.c.l.b16 %v285
    %v1490 = vunpack.c.h.b16 %v285
    %v1491 = vunpack.c.l.b16 %v286
    %v1492 = vunpack.c.h.b16 %v286
    %v1493 = vunpack.c.l.b16 %v287
    %v1494 = vunpack.c.h.b16 %v287
    %v1495 = vunpack.c.l.b16 %v288
    %v1496 = vunpack.c.h.b16 %v288
    %v1497 = vunpack.c.l.b16 %v289
    %v1498 = vunpack.c.h.b16 %v289
    %v1499 = vunpack.c.l.b16 %v290
    %v1500 = vunpack.c.h.b16 %v290
    %v1501 = vunpack.c.l.b16 %v291
    %v1502 = vunpack.c.h.b16 %v291
    %v1503 = vunpack.c.l.b16 %v292
    %v1504 = vunpack.c.h.b16 %v292
    %v1505 = vunpack.c.l.b16 %v293
    %v1506 = vunpack.c.h.b16 %v293
    %v1507 = vunpack.c.l.b16 %v294
    %v1508 = vunpack.c.h.b16 %v294
    %v1509 = vunpack.c.l.b16 %v295
    %v1510 = vunpack.c.h.b16 %v295
    %v1511 = vunpack.c.l.b16 %v296
    %v1512 = vunpack.c.h.b16 %v296
    %v1513 = vunpack.c.l.b16 %v297
    %v1514 = vunpack.c.h.b16 %v297
    %v1515 = vunpack.c.l.b16 %v298
    %v1516 = vunpack.c.h.b16 %v298
    %v1517 = vunpack.c.l.b16 %v299
    %v1518 = vunpack.c.h.b16 %v299
    %v1519 = vunpack.c.l.b16 %v300
    %v1520 = vunpack.c.h.b16 %v300
    %v1521 = vunpack.c.l.b16 %v301
    %v1522 = vunpack.c.h.b16 %v301
    %v1523 = vunpack.c.l.b16 %v302
    %v1524 = vunpack.c.h.b16 %v302
    %v1525 = vunpack.c.l.b16 %v303
    %v1526 = vunpack.c.h.b16 %v303
    %v1527 = vunpack.c.l.b16 %v304
    %v1528 = vunpack.c.h.b16 %v304
    %v1529 = vunpack.c.l.b16 %v305
    %v1530 = vunpack.c.h.b16 %v305
    %v1531 = vunpack.c.l.b16 %v306
    %v1532 = vunpack.c.h.b16 %v306
    %v1533 = vunpack.c.l.b16 %v307
    %v1534 = vunpack.c.h.b16 %v307
    %v1535 = vunpack.c.l.b16 %v308
    %v1536 = vunpack.c.h.b16 %v308
    %v1537 = vunpack.c.l.b16 %v309
    %v1538 = vunpack.c.h.b16 %v309
    %v1539 = vunpack.c.l.b16 %v310
    %v1540 = vunpack.c.h.b16 %v310
    %v1541 = vunpack.c.l.b16 %v311
    %v1542 = vunpack.c.h.b16 %v311
    %v1543 = vunpack.c.l.b16 %v312
    %v1544 = vunpack.c.h.b16 %v312
    %v1545 = vunpack.c.l.b16 %v313
    %v1546 = vunpack.c.h.b16 %v313
    %v1547 = vunpack.c.l.b16 %v314
    %v1548 = vunpack.c.h.b16 %v314
    %v1549 = vunpack.c.l.b16 %v315
    %v1550 = vunpack.c.h.b16 %v315
    %v1551 = vunpack.c.l.b16 %v316
    %v1552 = vunpack.c.h.b16 %v316
    %v1553 = vunpack.c.l.b16 %v317
    %v1554 = vunpack.c.h.b16 %v317
    %v1555 = vunpack.c.l.b16 %v318
    %v1556 = vunpack.c.h.b16 %v318
    %v1557 = vunpack.c.l.b16 %v319
    %v1558 = vunpack.c.h.b16 %v319
    %v1559 = vunpack.c.l.b16 %v320
    %v1560 = vunpack.c.h.b16 %v320
    %v1561 = vunpack.c.l.b16 %v321
    %v1562 = vunpack.c.h.b16 %v321
    %v1563 = vunpack.c.l.b16 %v322
    %v1564 = vunpack.c.h.b16 %v322
    %v1565 = vunpack.c.l.b16 %v323
    %v1566 = vunpack.c.h.b16 %v323
    %v1567 = vunpack.c.l.b16 %v324
    %v1568 = vunpack.c.h.b16 %v324
    %v1569 = vunpack.c.l.b16 %v325
    %v1570 = vunpack.c.h.b16 %v325
    %v1571 = vunpack.c.l.b16 %v326
    %v1572 = vunpack.c.h.b16 %v326
    %v1573 = vunpack.c.l.b16 %v327
    %v1574 = vunpack.c.h.b16 %v327
    %v1575 = vunpack.c.l.b16 %v328
    %v1576 = vunpack.c.h.b16 %v328
    %v1577 = vunpack.c.l.b16 %v329
    %v1578 = vunpack.c.h.b16 %v329
    %v1579 = vunpack.c.l.b16 %v330
    %v1580 = vunpack.c.h.b16 %v330
    %v1581 = vunpack.c.l.b16 %v331
    %v1582 = vunpack.c.h.b16 %v331
    %v1583 = vunpack.c.l.b16 %v332
    %v1584 = vunpack.c.h.b16 %v332
    %v1585 = vunpack.c.l.b16 %v333
    %v1586 = vunpack.c.h.b16 %v333
    %v1587 = vunpack.c.l.b16 %v334
    %v1588 = vunpack.c.h.b16 %v334
    %v1589 = vunpack.c.l.b16 %v335
    %v1590 = vunpack.c.h.b16 %v335
    %v1591 = vunpack.c.l.b16 %v336
    %v1592 = vunpack.c.h.b16 %v336
    %v1593 = vunpack.c.l.b16 %v337
    %v1594 = vunpack.c.h.b16 %v337
    %v1595 = vunpack.c.l.b16 %v338
    %v1596 = vunpack.c.h.b16 %v338
    %v1597 = vunpack.c.l.b16 %v339
    %v1598 = vunpack.c.h.b16 %v339
    %v1599 = vunpack.c.l.b16 %v340
    %v1600 = vunpack.c.h.b16 %v340
    %v1601 = vunpack.c.l.b16 %v341
    %v1602 = vunpack.c.h.b16 %v341
    %v1603 = vunpack.c.l.b16 %v342
    %v1604 = vunpack.c.h.b16 %v342
    %v1605 = vunpack.c.l.b16 %v343
    %v1606 = vunpack.c.h.b16 %v343
    %v1607 = vunpack.c.l.b16 %v344
    %v1608 = vunpack.c.h.b16 %v344
    %v1609 = vunpack.c.l.b16 %v345
    %v1610 = vunpack.c.h.b16 %v345
    %v1611 = vunpack.c.l.b16 %v346
    %v1612 = vunpack.c.h.b16 %v346
    %v1613 = vunpack.c.l.b16 %v347
    %v1614 = vunpack.c.h.b16 %v347
    %v1615 = vunpack.c.l.b16 %v348
    %v1616 = vunpack.c.h.b16 %v348
    %v1617 = vunpack.c.l.b16 %v349
    %v1618 = vunpack.c.h.b16 %v349
    %v1619 = vunpack.c.l.b16 %v350
    %v1620 = vunpack.c.h.b16 %v350
    %v1621 = vunpack.c.l.b16 %v351
    %v1622 = vunpack.c.h.b16 %v351
    %v1623 = vunpack.c.l.b16 %v352
    %v1624 = vunpack.c.h.b16 %v352
    %v1625 = vunpack.c.l.b16 %v353
    %v1626 = vunpack.c.h.b16 %v353
    %v1627 = vunpack.c.l.b16 %v354
    %v1628 = vunpack.c.h.b16 %v354
    %v1629 = vunpack.c.l.b16 %v355
    %v1630 = vunpack.c.h.b16 %v355
    %v1631 = vunpack.c.l.b16 %v356
    %v1632 = vunpack.c.h.b16 %v356
    %v1633 = vunpack.c.l.b16 %v357
    %v1634 = vunpack.c.h.b16 %v357
    %v1635 = vunpack.c.l.b16 %v358
    %v1636 = vunpack.c.h.b16 %v358
    %v1637 = vunpack.c.l.b16 %v359
    %v1638 = vunpack.c.h.b16 %v359
    %v1639 = vunpack.c.l.b16 %v360
    %v1640 = vunpack.c.h.b16 %v360
    %v1641 = vunpack.c.l.b16 %v361
    %v1642 = vunpack.c.h.b16 %v361
    %v1643 = vunpack.c.l.b16 %v362
    %v1644 = vunpack.c.h.b16 %v362
    %v1645 = vunpack.c.l.b16 %v363
    %v1646 = vunpack.c.h.b16 %v363
    %v1647 = vunpack.c.l.b16 %v364
    %v1648 = vunpack.c.h.b16 %v364
    %v1649 = vunpack.c.l.b16 %v365
    %v1650 = vunpack.c.h.b16 %v365
    %v1651 = vunpack.c.l.b16 %v366
    %v1652 = vunpack.c.h.b16 %v366
    %v1653 = vunpack.c.l.b16 %v367
    %v1654 = vunpack.c.h.b16 %v367
    %v1655 = vunpack.c.l.b16 %v368
    %v1656 = vunpack.c.h.b16 %v368
    %v1657 = vunpack.c.l.b16 %v369
    %v1658 = vunpack.c.h.b16 %v369
    %v1659 = vunpack.c.l.b16 %v370
    %v1660 = vunpack.c.h.b16 %v370
    %v1661 = vunpack.c.l.b16 %v371
    %v1662 = vunpack.c.h.b16 %v371
    %v1663 = vunpack.c.l.b16 %v372
    %v1664 = vunpack.c.h.b16 %v372
    %v1665 = vunpack.c.l.b16 %v373
    %v1666 = vunpack.c.h.b16 %v373
    %v1667 = vunpack.c.l.b16 %v374
    %v1668 = vunpack.c.h.b16 %v374
    %v1669 = vunpack.c.l.b16 %v375
    %v1670 = vunpack.c.h.b16 %v375
    %v1671 = vunpack.c.l.b16 %v376
    %v1672 = vunpack.c.h.b16 %v376
    %v1673 = vunpack.c.l.b16 %v377
    %v1674 = vunpack.c.h.b16 %v377
    %v1675 = vunpack.c.l.b16 %v378
    %v1676 = vunpack.c.h.b16 %v378
    %v1677 = vunpack.c.l.b16 %v379
    %v1678 = vunpack.c.h.b16 %v379
    %v1679 = vunpack.c.l.b16 %v380
    %v1680 = vunpack.c.h.b16 %v380
    %v1681 = vunpack.c.l.b16 %v381
    %v1682 = vunpack.c.h.b16 %v381
    %v1683 = vunpack.c.l.b16 %v382
    %v1684 = vunpack.c.h.b16 %v382
    %v1685 = vunpack.c.l.b16 %v383
    %v1686 = vunpack.c.h.b16 %v383
    %v1687 = vunpack.c.l.b16 %v384
    %v1688 = vunpack.c.h.b16 %v384
    %v1689 = vunpack.c.l.b16 %v385
    %v1690 = vunpack.c.h.b16 %v385
    %v1691 = vunpack.c.l.b16 %v386
    %v1692 = vunpack.c.h.b16 %v386
    %v1693 = vunpack.c.l.b16 %v387
    %v1694 = vunpack.c.h.b16 %v387
    %v1695 = vunpack.c.l.b16 %v388
    %v1696 = vunpack.c.h.b16 %v388
    %v1697 = vunpack.c.l.b16 %v389
    %v1698 = vunpack.c.h.b16 %v389
    %v1699 = vunpack.c.l.b16 %v390
    %v1700 = vunpack.c.h.b16 %v390
    %v1701 = vunpack.c.l.b16 %v391
    %v1702 = vunpack.c.h.b16 %v391
    %v1703 = vunpack.c.l.b16 %v392
    %v1704 = vunpack.c.h.b16 %v392
    %v1705 = vunpack.c.l.b16 %v393
    %v1706 = vunpack.c.h.b16 %v393
    %v1707 = vunpack.c.l.b16 %v394
    %v1708 = vunpack.c.h.b16 %v394
    %v1709 = vunpack.c.l.b16 %v395
    %v1710 = vunpack.c.h.b16 %v395
    %v1711 = vunpack.c.l.b16 %v396
    %v1712 = vunpack.c.h.b16 %v396
    %v1713 = vunpack.c.l.b16 %v397
    %v1714 = vunpack.c.h.b16 %v397
    %v1715 = vunpack.c.l.b16 %v398
    %v1716 = vunpack.c.h.b16 %v398
    %v1717 = vunpack.c.l.b16 %v399
    %v1718 = vunpack.c.h.b16 %v399
    %v1719 = vunpack.c.l.b16 %v400
    %v1720 = vunpack.c.h.b16 %v400
    %v1721 = vunpack.c.l.b16 %v401
    %v1722 = vunpack.c.h.b16 %v401
    %v1723 = vunpack.c.l.b16 %v402
    %v1724 = vunpack.c.h.b16 %v402
    %v1725 = vunpack.c.l.b16 %v403
    %v1726 = vunpack.c.h.b16 %v403
    %v1727 = vunpack.c.l.b16 %v404
    %v1728 = vunpack.c.h.b16 %v404
    %v1729 = vunpack.c.l.b16 %v405
    %v1730 = vunpack.c.h.b16 %v405
    %v1731 = vunpack.c.l.b16 %v406
    %v1732 = vunpack.c.h.b16 %v406
    %v1733 = vunpack.c.l.b16 %v407
    %v1734 = vunpack.c.h.b16 %v407
    %v1735 = vunpack.c.l.b16 %v408
    %v1736 = vunpack.c.h.b16 %v408
    %v1737 = vunpack.c.l.b16 %v409
    %v1738 = vunpack.c.h.b16 %v409
    %v1739 = vunpack.c.l.b16 %v410
    %v1740 = vunpack.c.h.b16 %v410
    %v1741 = vunpack.c.l.b16 %v411
    %v1742 = vunpack.c.h.b16 %v411
    %v1743 = vunpack.c.l.b16 %v412
    %v1744 = vunpack.c.h.b16 %v412
    %v1745 = vunpack.c.l.b16 %v413
    %v1746 = vunpack.c.h.b16 %v413
    %v1747 = vunpack.c.l.b16 %v414
    %v1748 = vunpack.c.h.b16 %v414
    %v1749 = vunpack.c.l.b16 %v415
    %v1750 = vunpack.c.h.b16 %v415
    %v1751 = vunpack.c.l.b16 %v416
    %v1752 = vunpack.c.h.b16 %v416
    %v1753 = vunpack.c.l.b16 %v417
    %v1754 = vunpack.c.h.b16 %v417
    %v1755 = vunpack.c.l.b16 %v418
    %v1756 = vunpack.c.h.b16 %v418
    %v1757 = vunpack.c.l.b16 %v419
    %v1758 = vunpack.c.h.b16 %v419
    %v1759 = vunpack.c.l.b16 %v420
    %v1760 = vunpack.c.h.b16 %v420
    %v1761 = vunpack.c.l.b16 %v421
    %v1762 = vunpack.c.h.b16 %v421
    %v1763 = vunpack.c.l.b16 %v422
    %v1764 = vunpack.c.h.b16 %v422
    %v1765 = vunpack.c.l.b16 %v423
    %v1766 = vunpack.c.h.b16 %v423
    %v1767 = vunpack.c.l.b16 %v424
    %v1768 = vunpack.c.h.b16 %v424
    %v1769 = vunpack.c.l.b16 %v425
    %v1770 = vunpack.c.h.b16 %v425
    %v1771 = vunpack.c.l.b16 %v426
    %v1772 = vunpack.c.h.b16 %v426
    %v1773 = vunpack.c.l.b16 %v427
    %v1774 = vunpack.c.h.b16 %v427
    %v1775 = vunpack.c.l.b16 %v428
    %v1776 = vunpack.c.h.b16 %v428
    %v1777 = vunpack.c.l.b16 %v429
    %v1778 = vunpack.c.h.b16 %v429
    %v1779 = vunpack.c.l.b16 %v430
    %v1780 = vunpack.c.h.b16 %v430
    %v1781 = vunpack.c.l.b16 %v431
    %v1782 = vunpack.c.h.b16 %v431
    %v1783 = vunpack.c.l.b16 %v432
    %v1784 = vunpack.c.h.b16 %v432
    %v1785 = vunpack.c.l.b16 %v433
    %v1786 = vunpack.c.h.b16 %v433
    %v1787 = vunpack.c.l.b16 %v434
    %v1788 = vunpack.c.h.b16 %v434
    %v1789 = vunpack.c.l.b16 %v435
    %v1790 = vunpack.c.h.b16 %v435
    %v1791 = vunpack.c.l.b16 %v436
    %v1792 = vunpack.c.h.b16 %v436
    %v1793 = vunpack.c.l.b16 %v437
    %v1794 = vunpack.c.h.b16 %v437
    %v1795 = vunpack.c.l.b16 %v438
    %v1796 = vunpack.c.h.b16 %v438
    %v1797 = vunpack.c.l.b16 %v439
    %v1798 = vunpack.c.h.b16 %v439
    %v1799 = vunpack.c.l.b16 %v440
    %v1800 = vunpack.c.h.b16 %v440
    %v1801 = vunpack.c.l.b16 %v441
    %v1802 = vunpack.c.h.b16 %v441
    %v1803 = vunpack.c.l.b16 %v442
    %v1804 = vunpack.c.h.b16 %v442
    %v1805 = vunpack.c.l.b16 %v443
    %v1806 = vunpack.c.h.b16 %v443
    %v1807 = vunpack.c.l.b16 %v444
    %v1808 = vunpack.c.h.b16 %v444
    %v1809 = vunpack.c.l.b16 %v445
    %v1810 = vunpack.c.h.b16 %v445
    %v1811 = vunpack.c.l.b16 %v446
    %v1812 = vunpack.c.h.b16 %v446
    %v1813 = vunpack.c.l.b16 %v447
    %v1814 = vunpack.c.h.b16 %v447
    %v1815 = vunpack.c.l.b16 %v448
    %v1816 = vunpack.c.h.b16 %v448
    %v1817 = vunpack.c.l.b16 %v449
    %v1818 = vunpack.c.h.b16 %v449
    %v1819 = vunpack.c.l.b16 %v450
    %v1820 = vunpack.c.h.b16 %v450
    %v1821 = vunpack.c.l.b16 %v451
    %v1822 = vunpack.c.h.b16 %v451
    %v1823 = vunpack.c.l.b16 %v452
    %v1824 = vunpack.c.h.b16 %v452
    %v1825 = vunpack.c.l.b16 %v453
    %v1826 = vunpack.c.h.b16 %v453
    %v1827 = vunpack.c.l.b16 %v454
    %v1828 = vunpack.c.h.b16 %v454
    %v1829 = vunpack.c.l.b16 %v455
    %v1830 = vunpack.c.h.b16 %v455
    %v1831 = vunpack.c.l.b16 %v456
    %v1832 = vunpack.c.h.b16 %v456
    %v1833 = vunpack.c.l.b16 %v457
    %v1834 = vunpack.c.h.b16 %v457
    %v1835 = vunpack.c.l.b16 %v458
    %v1836 = vunpack.c.h.b16 %v458
    %v1837 = vunpack.c.l.b16 %v459
    %v1838 = vunpack.c.h.b16 %v459
    %v1839 = vunpack.c.l.b16 %v460
    %v1840 = vunpack.c.h.b16 %v460
    %v1841 = vunpack.c.l.b16 %v461
    %v1842 = vunpack.c.h.b16 %v461
    %v1843 = vunpack.c.l.b16 %v462
    %v1844 = vunpack.c.h.b16 %v462
    %v1845 = vunpack.c.l.b16 %v463
    %v1846 = vunpack.c.h.b16 %v463
    %v1847 = vunpack.c.l.b16 %v464
    %v1848 = vunpack.c.h.b16 %v464
    %v1849 = vunpack.c.l.b16 %v465
    %v1850 = vunpack.c.h.b16 %v465
    %v1851 = vunpack.c.l.b16 %v466
    %v1852 = vunpack.c.h.b16 %v466
    %v1853 = vunpack.c.l.b16 %v467
    %v1854 = vunpack.c.h.b16 %v467
    %v1855 = vunpack.c.l.b16 %v468
    %v1856 = vunpack.c.h.b16 %v468
    %v1857 = vunpack.c.l.b16 %v469
    %v1858 = vunpack.c.h.b16 %v469
    %v1859 = vunpack.c.l.b16 %v470
    %v1860 = vunpack.c.h.b16 %v470
    %v1861 = vunpack.c.l.b16 %v471
    %v1862 = vunpack.c.h.b16 %v471
    %v1863 = vunpack.c.l.b16 %v472
    %v1864 = vunpack.c.h.b16 %v472
    %v1865 = vunpack.c.l.b16 %v473
    %v1866 = vunpack.c.h.b16 %v473
    %v1867 = vunpack.c.l.b16 %v474
    %v1868 = vunpack.c.h.b16 %v474
    %v1869 = vunpack.c.l.b16 %v475
    %v1870 = vunpack.c.h.b16 %v475
    %v1871 = vunpack.c.l.b16 %v476
    %v1872 = vunpack.c.h.b16 %v476
    %v1873 = vunpack.c.l.b16 %v477
    %v1874 = vunpack.c.h.b16 %v477
    %v1875 = vunpack.c.l.b16 %v478
    %v1876 = vunpack.c.h.b16 %v478
    %v1877 = vunpack.c.l.b16 %v479
    %v1878 = vunpack.c.h.b16 %v479
    %v1879 = vunpack.c.l.b16 %v480
    %v1880 = vunpack.c.h.b16 %v480
    %v1881 = vunpack.c.l.b16 %v481
    %v1882 = vunpack.c.h.b16 %v481
    %v1883 = vunpack.c.l.b16 %v482
    %v1884 = vunpack.c.h.b16 %v482
    %v1885 = vunpack.c.l.b16 %v483
    %v1886 = vunpack.c.h.b16 %v483
    %v1887 = vunpack.c.l.b16 %v484
    %v1888 = vunpack.c.h.b16 %v484
    %v1889 = vunpack.c.l.b16 %v485
    %v1890 = vunpack.c.h.b16 %v485
    %v1891 = vunpack.c.l.b16 %v486
    %v1892 = vunpack.c.h.b16 %v486
    %v1893 = vunpack.c.l.b16 %v487
    %v1894 = vunpack.c.h.b16 %v487
    %v1895 = vunpack.c.l.b16 %v488
    %v1896 = vunpack.c.h.b16 %v488
    %v1897 = vunpack.c.l.b16 %v489
    %v1898 = vunpack.c.h.b16 %v489
    %v1899 = vunpack.c.l.b16 %v490
    %v1900 = vunpack.c.h.b16 %v490
    %v1901 = vunpack.c.l.b16 %v491
    %v1902 = vunpack.c.h.b16 %v491
    %v1903 = vunpack.c.l.b16 %v492
    %v1904 = vunpack.c.h.b16 %v492
    %v1905 = vunpack.c.l.b16 %v493
    %v1906 = vunpack.c.h.b16 %v493
    %v1907 = vunpack.c.l.b16 %v494
    %v1908 = vunpack.c.h.b16 %v494
    %v1909 = vunpack.c.l.b16 %v495
    %v1910 = vunpack.c.h.b16 %v495
    %v1911 = vunpack.c.l.b16 %v496
    %v1912 = vunpack.c.h.b16 %v496
    %v1913 = vunpack.c.l.b16 %v497
    %v1914 = vunpack.c.h.b16 %v497
    %v1915 = vunpack.c.l.b16 %v498
    %v1916 = vunpack.c.h.b16 %v498
    %v1917 = vunpack.c.l.b16 %v499
    %v1918 = vunpack.c.h.b16 %v499
    %v1919 = vunpack.c.l.b16 %v500
    %v1920 = vunpack.c.h.b16 %v500
    %v1921 = vunpack.c.l.b16 %v501
    %v1922 = vunpack.c.h.b16 %v501
    %v1923 = vunpack.c.l.b16 %v502
    %v1924 = vunpack.c.h.b16 %v502
    %v1925 = vunpack.c.l.b16 %v503
    %v1926 = vunpack.c.h.b16 %v503
    %v1927 = vunpack.c.l.b16 %v504
    %v1928 = vunpack.c.h.b16 %v504
    %v1929 = vunpack.c.l.b16 %v505
    %v1930 = vunpack.c.h.b16 %v505
    %v1931 = vunpack.c.l.b16 %v506
    %v1932 = vunpack.c.h.b16 %v506
    %v1933 = vunpack.c.l.b16 %v507
    %v1934 = vunpack.c.h.b16 %v507
    %v1935 = vunpack.c.l.b16 %v508
    %v1936 = vunpack.c.h.b16 %v508
    %v1937 = vunpack.c.l.b16 %v509
    %v1938 = vunpack.c.h.b16 %v509
    %v1939 = vunpack.c.l.b16 %v510
    %v1940 = vunpack.c.h.b16 %v510
    %v1941 = vunpack.c.l.b16 %v511
    %v1942 = vunpack.c.h.b16 %v511
    %v1943 = vunpack.c.l.b16 %v512
    %v1944 = vunpack.c.h.b16 %v512
    %v1945 = vunpack.c.l.b16 %v513
    %v1946 = vunpack.c.h.b16 %v513
    %v1947 = vunpack.c.l.b16 %v514
    %v1948 = vunpack.c.h.b16 %v514
    %v1949 = vunpack.c.l.b16 %v515
    %v1950 = vunpack.c.h.b16 %v515
    %v1951 = vunpack.c.l.b16 %v516
    %v1952 = vunpack.c.h.b16 %v516
    %v1953 = vunpack.c.l.b16 %v517
    %v1954 = vunpack.c.h.b16 %v517
    %v1955 = vunpack.c.l.b16 %v518
    %v1956 = vunpack.c.h.b16 %v518
    %v1957 = vunpack.c.l.b16 %v519
    %v1958 = vunpack.c.h.b16 %v519
    %v1959 = vunpack.c.l.b16 %v520
    %v1960 = vunpack.c.h.b16 %v520
    %v1961 = vunpack.c.l.b16 %v521
    %v1962 = vunpack.c.h.b16 %v521
    %v1963 = vunpack.c.l.b16 %v522
    %v1964 = vunpack.c.h.b16 %v522
    %v1965 = vunpack.c.l.b16 %v523
    %v1966 = vunpack.c.h.b16 %v523
    %v1967 = vunpack.c.l.b16 %v524
    %v1968 = vunpack.c.h.b16 %v524
    %v1969 = vunpack.c.l.b16 %v525
    %v1970 = vunpack.c.h.b16 %v525
    %v1971 = vunpack.c.l.b16 %v526
    %v1972 = vunpack.c.h.b16 %v526
    %v1973 = vunpack.c.l.b16 %v527
    %v1974 = vunpack.c.h.b16 %v527
    %v1975 = vunpack.c.l.b16 %v528
    %v1976 = vunpack.c.h.b16 %v528
    %v1977 = vunpack.c.l.b16 %v529
    %v1978 = vunpack.c.h.b16 %v529
    %v1979 = vunpack.c.l.b16 %v530
    %v1980 = vunpack.c.h.b16 %v530
    %v1981 = vunpack.c.l.b16 %v531
    %v1982 = vunpack.c.h.b16 %v531
    %v1983 = vunpack.c.l.b16 %v532
    %v1984 = vunpack.c.h.b16 %v532
    %v1985 = vunpack.c.l.b16 %v533
    %v1986 = vunpack.c.h.b16 %v533
    %v1987 = vunpack.c.l.b16 %v534
    %v1988 = vunpack.c.h.b16 %v534
    %v1989 = vunpack.c.l.b16 %v535
    %v1990 = vunpack.c.h.b16 %v535
    %v1991 = vunpack.c.l.b16 %v536
    %v1992 = vunpack.c.h.b16 %v536
    %v1993 = vunpack.c.l.b16 %v537
    %v1994 = vunpack.c.h.b16 %v537
    %v1995 = vunpack.c.l.b16 %v538
    %v1996 = vunpack.c.h.b16 %v538
    %v1997 = vunpack.c.l.b16 %v539
    %v1998 = vunpack.c.h.b16 %v539
    %v1999 = vunpack.c.l.b16 %v540
    %v2000 = vunpack.c.h.b16 %v540
    %v2001 = vunpack.c.l.b16 %v541
    %v2002 = vunpack.c.h.b16 %v541
    %v2003 = vunpack.c.l.b16 %v542
    %v2004 = vunpack.c.h.b16 %v542
    %v2005 = vunpack.c.l.b16 %v543
    %v2006 = vunpack.c.h.b16 %v543
    %v2007 = vunpack.c.l.b16 %v544
    %v2008 = vunpack.c.h.b16 %v544
    %v2009 = vunpack.c.l.b16 %v545
    %v2010 = vunpack.c.h.b16 %v545
    %v2011 = vunpack.c.l.b16 %v546
    %v2012 = vunpack.c.h.b16 %v546
    %v2013 = vunpack.c.l.b16 %v547
    %v2014 = vunpack.c.h.b16 %v547
    %v2015 = vunpack.c.l.b16 %v548
    %v2016 = vunpack.c.h.b16 %v548
    %v2017 = vunpack.c.l.b16 %v549
    %v2018 = vunpack.c.h.b16 %v549
    %v2019 = vunpack.c.l.b16 %v550
    %v2020 = vunpack.c.h.b16 %v550
    %v2021 = vunpack.c.l.b16 %v551
    %v2022 = vunpack.c.h.b16 %v551
    %v2023 = vunpack.c.l.b16 %v552
    %v2024 = vunpack.c.h.b16 %v552
    %v2025 = vunpack.c.l.b16 %v553
    %v2026 = vunpack.c.h.b16 %v553
    %v2027 = vunpack.c.l.b16 %v554
    %v2028 = vunpack.c.h.b16 %v554
    %v2029 = vunpack.c.l.b16 %v555
    %v2030 = vunpack.c.h.b16 %v555
    %v2031 = vunpack.c.l.b16 %v556
    %v2032 = vunpack.c.h.b16 %v556
    %v2033 = vunpack.c.l.b16 %v557
    %v2034 = vunpack.c.h.b16 %v557
    %v2035 = vunpack.c.l.b16 %v558
    %v2036 = vunpack.c.h.b16 %v558
    %v2037 = vunpack.c.l.b16 %v559
    %v2038 = vunpack.c.h.b16 %v559
    %v2039 = vunpack.c.l.b16 %v560
    %v2040 = vunpack.c.h.b16 %v560
    %v2041 = vunpack.c.l.b16 %v561
    %v2042 = vunpack.c.h.b16 %v561
    %v2043 = vunpack.c.l.b16 %v562
    %v2044 = vunpack.c.h.b16 %v562
    %v2045 = vunpack.c.l.b16 %v563
    %v2046 = vunpack.c.h.b16 %v563
    %v2047 = vunpack.c.l.b16 %v564
    %v2048 = vunpack.c.h.b16 %v564
    %v2049 = vunpack.c.l.b16 %v565
    %v2050 = vunpack.c.h.b16 %v565
    %v2051 = vunpack.c.l.b16 %v566
    %v2052 = vunpack.c.h.b16 %v566
    %v2053 = vunpack.c.l.b16 %v567
    %v2054 = vunpack.c.h.b16 %v567
    %v2055 = vunpack.c.l.b16 %v568
    %v2056 = vunpack.c.h.b16 %v568
    %v2057 = vunpack.c.l.b16 %v569
    %v2058 = vunpack.c.h.b16 %v569
    %v2059 = vunpack.c.l.b16 %v570
    %v2060 = vunpack.c.h.b16 %v570
    %v2061 = vunpack.c.l.b16 %v571
    %v2062 = vunpack.c.h.b16 %v571
    %v2063 = vunpack.c.l.b16 %v572
    %v2064 = vunpack.c.h.b16 %v572
    %v2065 = vunpack.c.l.b16 %v573
    %v2066 = vunpack.c.h.b16 %v573
    %v2067 = vunpack.c.l.b16 %v574
    %v2068 = vunpack.c.h.b16 %v574
    %v2069 = vunpack.c.l.b16 %v575
    %v2070 = vunpack.c.h.b16 %v575
    %v2071 = vunpack.c.l.b16 %v576
    %v2072 = vunpack.c.h.b16 %v576
    %v2073 = vunpack.c.l.b16 %v577
    %v2074 = vunpack.c.h.b16 %v577
    %v2075 = vunpack.c.l.b16 %v578
    %v2076 = vunpack.c.h.b16 %v578
    %v2077 = vunpack.c.l.b16 %v579
    %v2078 = vunpack.c.h.b16 %v579
    %v2079 = vunpack.c.l.b16 %v580
    %v2080 = vunpack.c.h.b16 %v580
    %v2081 = vunpack.c.l.b16 %v581
    %v2082 = vunpack.c.h.b16 %v581
    %v2083 = vunpack.c.l.b16 %v582
    %v2084 = vunpack.c.h.b16 %v582
    %v2085 = vunpack.c.l.b16 %v583
    %v2086 = vunpack.c.h.b16 %v583
    %v2087 = vunpack.c.l.b16 %v584
    %v2088 = vunpack.c.h.b16 %v584
    %v2089 = vunpack.c.l.b16 %v585
    %v2090 = vunpack.c.h.b16 %v585
    %v2091 = vunpack.c.l.b16 %v586
    %v2092 = vunpack.c.h.b16 %v586
    %v2093 = vunpack.c.l.b16 %v587
    %v2094 = vunpack.c.h.b16 %v587
    %v2095 = vunpack.c.l.b16 %v588
    %v2096 = vunpack.c.h.b16 %v588
    %v2097 = vunpack.c.l.b16 %v589
    %v2098 = vunpack.c.h.b16 %v589
    %v2099 = vunpack.c.l.b16 %v590
    %v2100 = vunpack.c.h.b16 %v590
    %v2101 = vunpack.c.l.b16 %v591
    %v2102 = vunpack.c.h.b16 %v591
    %v2103 = vunpack.c.l.b16 %v592
    %v2104 = vunpack.c.h.b16 %v592
    %v2105 = vunpack.c.l.b16 %v593
    %v2106 = vunpack.c.h.b16 %v593
    %v2107 = vunpack.c.l.b16 %v594
    %v2108 = vunpack.c.h.b16 %v594
    %v2109 = vunpack.c.l.b16 %v595
    %v2110 = vunpack.c.h.b16 %v595
    %v2111 = vunpack.c.l.b16 %v596
    %v2112 = vunpack.c.h.b16 %v596
    %v2113 = vunpack.c.l.b16 %v597
    %v2114 = vunpack.c.h.b16 %v597
    %v2115 = vunpack.c.l.b16 %v598
    %v2116 = vunpack.c.h.b16 %v598
    %v2117 = vunpack.c.l.b16 %v599
    %v2118 = vunpack.c.h.b16 %v599
    %v2119 = vunpack.c.l.b16 %v600
    %v2120 = vunpack.c.h.b16 %v600
    %v2121 = vunpack.c.l.b16 %v601
    %v2122 = vunpack.c.h.b16 %v601
    %v2123 = vunpack.c.l.b16 %v602
    %v2124 = vunpack.c.h.b16 %v602
    %v2125 = vunpack.c.l.b16 %v603
    %v2126 = vunpack.c.h.b16 %v603
    %v2127 = vunpack.c.l.b16 %v604
    %v2128 = vunpack.c.h.b16 %v604
    %v2129 = vunpack.c.l.b16 %v605
    %v2130 = vunpack.c.h.b16 %v605
    %v2131 = vunpack.c.l.b16 %v606
    %v2132 = vunpack.c.h.b16 %v606
    %v2133 = vunpack.c.l.b16 %v607
    %v2134 = vunpack.c.h.b16 %v607
    %v2135 = vunpack.c.l.b16 %v608
    %v2136 = vunpack.c.h.b16 %v608
    %v2137 = vunpack.c.l.b16 %v609
    %v2138 = vunpack.c.h.b16 %v609
    %v2139 = vunpack.c.l.b16 %v610
    %v2140 = vunpack.c.h.b16 %v610
    %v2141 = vunpack.c.l.b16 %v611
    %v2142 = vunpack.c.h.b16 %v611
    %v2143 = vunpack.c.l.b16 %v612
    %v2144 = vunpack.c.h.b16 %v612
    %v2145 = vunpack.c.l.b16 %v613
    %v2146 = vunpack.c.h.b16 %v613
    %v2147 = vunpack.c.l.b16 %v614
    %v2148 = vunpack.c.h.b16 %v614
    %v2149 = vunpack.c.l.b16 %v615
    %v2150 = vunpack.c.h.b16 %v615
    %v2151 = vunpack.c.l.b16 %v616
    %v2152 = vunpack.c.h.b16 %v616
    %v2153 = vpack.c.b16 %v1161, %v1129
    %v2154 = vpack.c.b16 %v1162, %v1130
    %v2155 = vpack.c.b16 %v1163, %v1131
    %v2156 = vpack.c.b16 %v1164, %v1132
    %v2157 = vpack.c.b16 %v1165, %v1133
    %v2158 = vpack.c.b16 %v1166, %v1134
    %v2159 = vpack.c.b16 %v1167, %v1135
    %v2160 = vpack.c.b16 %v1168, %v1136
    %v2161 = vpack.c.b16 %v1169, %v1137
    %v2162 = vpack.c.b16 %v1170, %v1138
    %v2163 = vpack.c.b16 %v1171, %v1139
    %v2164 = vpack.c.b16 %v1172, %v1140
    %v2165 = vpack.c.b16 %v1173, %v1141
    %v2166 = vpack.c.b16 %v1174, %v1142
    %v2167 = vpack.c.b16 %v1175, %v1143
    %v2168 = vpack.c.b16 %v1176, %v1144
    %v2169 = vpack.c.b16 %v1177, %v1145
    %v2170 = vpack.c.b16 %v1178, %v1146
    %v2171 = vpack.c.b16 %v1179, %v1147
    %v2172 = vpack.c.b16 %v1180, %v1148
    %v2173 = vpack.c.b16 %v1181, %v1149
    %v2174 = vpack.c.b16 %v1182, %v1150
    %v2175 = vpack.c.b16 %v1183, %v1151
    %v2176 = vpack.c.b16 %v1184, %v1152
    %v2177 = vpack.c.b16 %v1185, %v1153
    %v2178 = vpack.c.b16 %v1186, %v1154
    %v2179 = vpack.c.b16 %v1187, %v1155
    %v2180 = vpack.c.b16 %v1188, %v1156
    %v2181 = vpack.c.b16 %v1189, %v1157
    %v2182 = vpack.c.b16 %v1190, %v1158
    %v2183 = vpack.c.b16 %v1191, %v1159
    %v2184 = vpack.c.b16 %v1192, %v1160
    %v2185 = vpack.c.b16 %v1225, %v1193
    %v2186 = vpack.c.b16 %v1226, %v1194
    %v2187 = vpack.c.b16 %v1227, %v1195
    %v2188 = vpack.c.b16 %v1228, %v1196
    %v2189 = vpack.c.b16 %v1229, %v1197
    %v2190 = vpack.c.b16 %v1230, %v1198
    %v2191 = vpack.c.b16 %v1231, %v1199
    %v2192 = vpack.c.b16 %v1232, %v1200
    %v2193 = vpack.c.b16 %v1233, %v1201
    %v2194 = vpack.c.b16 %v1234, %v1202
    %v2195 = vpack.c.b16 %v1235, %v1203
    %v2196 = vpack.c.b16 %v1236, %v1204
    %v2197 = vpack.c.b16 %v1237, %v1205
    %v2198 = vpack.c.b16 %v1238, %v1206
    %v2199 = vpack.c.b16 %v1239, %v1207
    %v2200 = vpack.c.b16 %v1240, %v1208
    %v2201 = vpack.c.b16 %v1241, %v1209
    %v2202 = vpack.c.b16 %v1242, %v1210
    %v2203 = vpack.c.b16 %v1243, %v1211
    %v2204 = vpack.c.b16 %v1244, %v1212
    %v2205 = vpack.c.b16 %v1245, %v1213
    %v2206 = vpack.c.b16 %v1246, %v1214
    %v2207 = vpack.c.b16 %v1247, %v1215
    %v2208 = vpack.c.b16 %v1248, %v1216
    %v2209 = vpack.c.b16 %v1249, %v1217
    %v2210 = vpack.c.b16 %v1250, %v1218
    %v2211 = vpack.c.b16 %v1251, %v1219
    %v2212 = vpack.c.b16 %v1252, %v1220
    %v2213 = vpack.c.b16 %v1253, %v1221
    %v2214 = vpack.c.b16 %v1254, %v1222
    %v2215 = vpack.c.b16 %v1255, %v1223
    %v2216 = vpack.c.b16 %v1256, %v1224
    %v2217 = vpack.c.b16 %v1289, %v1257
    %v2218 = vpack.c.b16 %v1290, %v1258
    %v2219 = vpack.c.b16 %v1291, %v1259
    %v2220 = vpack.c.b16 %v1292, %v1260
    %v2221 = vpack.c.b16 %v1293, %v1261
    %v2222 = vpack.c.b16 %v1294, %v1262
    %v2223 = vpack.c.b16 %v1295, %v1263
    %v2224 = vpack.c.b16 %v1296, %v1264
    %v2225 = vpack.c.b16 %v1297, %v1265
    %v2226 = vpack.c.b16 %v1298, %v1266
    %v2227 = vpack.c.b16 %v1299, %v1267
    %v2228 = vpack.c.b16 %v1300, %v1268
    %v2229 = vpack.c.b16 %v1301, %v1269
    %v2230 = vpack.c.b16 %v1302, %v1270
    %v2231 = vpack.c.b16 %v1303, %v1271
    %v2232 = vpack.c.b16 %v1304, %v1272
    %v2233 = vpack.c.b16 %v1305, %v1273
    %v2234 = vpack.c.b16 %v1306, %v1274
    %v2235 = vpack.c.b16 %v1307, %v1275
    %v2236 = vpack.c.b16 %v1308, %v1276
    %v2237 = vpack.c.b16 %v1309, %v1277
    %v2238 = vpack.c.b16 %v1310, %v1278
    %v2239 = vpack.c.b16 %v1311, %v1279
    %v2240 = vpack.c.b16 %v1312, %v1280
    %v2241 = vpack.c.b16 %v1313, %v1281
    %v2242 = vpack.c.b16 %v1314, %v1282
    %v2243 = vpack.c.b16 %v1315, %v1283
    %v2244 = vpack.c.b16 %v1316, %v1284
    %v2245 = vpack.c.b16 %v1317, %v1285
    %v2246 = vpack.c.b16 %v1318, %v1286
    %v2247 = vpack.c.b16 %v1319, %v1287
    %v2248 = vpack.c.b16 %v1320, %v1288
    %v2249 = vpack.c.b16 %v1353, %v1321
    %v2250 = vpack.c.b16 %v1354, %v1322
    %v2251 = vpack.c.b16 %v1355, %v1323
    %v2252 = vpack.c.b16 %v1356, %v1324
    %v2253 = vpack.c.b16 %v1357, %v1325
    %v2254 = vpack.c.b16 %v1358, %v1326
    %v2255 = vpack.c.b16 %v1359, %v1327
    %v2256 = vpack.c.b16 %v1360, %v1328
    %v2257 = vpack.c.b16 %v1361, %v1329
    %v2258 = vpack.c.b16 %v1362, %v1330
    %v2259 = vpack.c.b16 %v1363, %v1331
    %v2260 = vpack.c.b16 %v1364, %v1332
    %v2261 = vpack.c.b16 %v1365, %v1333
    %v2262 = vpack.c.b16 %v1366, %v1334
    %v2263 = vpack.c.b16 %v1367, %v1335
    %v2264 = vpack.c.b16 %v1368, %v1336
    %v2265 = vpack.c.b16 %v1369, %v1337
    %v2266 = vpack.c.b16 %v1370, %v1338
    %v2267 = vpack.c.b16 %v1371, %v1339
    %v2268 = vpack.c.b16 %v1372, %v1340
    %v2269 = vpack.c.b16 %v1373, %v1341
    %v2270 = vpack.c.b16 %v1374, %v1342
    %v2271 = vpack.c.b16 %v1375, %v1343
    %v2272 = vpack.c.b16 %v1376, %v1344
    %v2273 = vpack.c.b16 %v1377, %v1345
    %v2274 = vpack.c.b16 %v1378, %v1346
    %v2275 = vpack.c.b16 %v1379, %v1347
    %v2276 = vpack.c.b16 %v1380, %v1348
    %v2277 = vpack.c.b16 %v1381, %v1349
    %v2278 = vpack.c.b16 %v1382, %v1350
    %v2279 = vpack.c.b16 %v1383, %v1351
    %v2280 = vpack.c.b16 %v1384, %v1352
    %v2281 = vpack.c.b16 %v1417, %v1385
    %v2282 = vpack.c.b16 %v1418, %v1386
    %v2283 = vpack.c.b16 %v1419, %v1387
    %v2284 = vpack.c.b16 %v1420, %v1388
    %v2285 = vpack.c.b16 %v1421, %v1389
    %v2286 = vpack.c.b16 %v1422, %v1390
    %v2287 = vpack.c.b16 %v1423, %v1391
    %v2288 = vpack.c.b16 %v1424, %v1392
    %v2289 = vpack.c.b16 %v1425, %v1393
    %v2290 = vpack.c.b16 %v1426, %v1394
    %v2291 = vpack.c.b16 %v1427, %v1395
    %v2292 = vpack.c.b16 %v1428, %v1396
    %v2293 = vpack.c.b16 %v1429, %v1397
    %v2294 = vpack.c.b16 %v1430, %v1398
    %v2295 = vpack.c.b16 %v1431, %v1399
    %v2296 = vpack.c.b16 %v1432, %v1400
    %v2297 = vpack.c.b16 %v1433, %v1401
    %v2298 = vpack.c.b16 %v1434, %v1402
    %v2299 = vpack.c.b16 %v1435, %v1403
    %v2300 = vpack.c.b16 %v1436, %v1404
    %v2301 = vpack.c.b16 %v1437, %v1405
    %v2302 = vpack.c.b16 %v1438, %v1406
    %v2303 = vpack.c.b16 %v1439, %v1407
    %v2304 = vpack.c.b16 %v1440, %v1408
    %v2305 = vpack.c.b16 %v1441, %v1409
    %v2306 = vpack.c.b16 %v1442, %v1410
    %v2307 = vpack.c.b16 %v1443, %v1411
    %v2308 = vpack.c.b16 %v1444, %v1412
    %v2309 = vpack.c.b16 %v1445, %v1413
    %v2310 = vpack.c.b16 %v1446, %v1414
    %v2311 = vpack.c.b16 %v1447, %v1415
    %v2312 = vpack.c.b16 %v1448, %v1416
    %v2313 = vpack.c.b16 %v1481, %v1449
    %v2314 = vpack.c.b16 %v1482, %v1450
    %v2315 = vpack.c.b16 %v1483, %v1451
    %v2316 = vpack.c.b16 %v1484, %v1452
    %v2317 = vpack.c.b16 %v1485, %v1453
    %v2318 = vpack.c.b16 %v1486, %v1454
    %v2319 = vpack.c.b16 %v1487, %v1455
    %v2320 = vpack.c.b16 %v1488, %v1456
    %v2321 = vpack.c.b16 %v1489, %v1457
    %v2322 = vpack.c.b16 %v1490, %v1458
    %v2323 = vpack.c.b16 %v1491, %v1459
    %v2324 = vpack.c.b16 %v1492, %v1460
    %v2325 = vpack.c.b16 %v1493, %v1461
    %v2326 = vpack.c.b16 %v1494, %v1462
    %v2327 = vpack.c.b16 %v1495, %v1463
    %v2328 = vpack.c.b16 %v1496, %v1464
    %v2329 = vpack.c.b16 %v1497, %v1465
    %v2330 = vpack.c.b16 %v1498, %v1466
    %v2331 = vpack.c.b16 %v1499, %v1467
    %v2332 = vpack.c.b16 %v1500, %v1468
    %v2333 = vpack.c.b16 %v1501, %v1469
    %v2334 = vpack.c.b16 %v1502, %v1470
    %v2335 = vpack.c.b16 %v1503, %v1471
    %v2336 = vpack.c.b16 %v1504, %v1472
    %v2337 = vpack.c.b16 %v1505, %v1473
    %v2338 = vpack.c.b16 %v1506, %v1474
    %v2339 = vpack.c.b16 %v1507, %v1475
    %v2340 = vpack.c.b16 %v1508, %v1476
    %v2341 = vpack.c.b16 %v1509, %v1477
    %v2342 = vpack.c.b16 %v1510, %v1478
    %v2343 = vpack.c.b16 %v1511, %v1479
    %v2344 = vpack.c.b16 %v1512, %v1480
    %v2345 = vpack.c.b16 %v1545, %v1513
    %v2346 = vpack.c.b16 %v1546, %v1514
    %v2347 = vpack.c.b16 %v1547, %v1515
    %v2348 = vpack.c.b16 %v1548, %v1516
    %v2349 = vpack.c.b16 %v1549, %v1517
    %v2350 = vpack.c.b16 %v1550, %v1518
    %v2351 = vpack.c.b16 %v1551, %v1519
    %v2352 = vpack.c.b16 %v1552, %v1520
    %v2353 = vpack.c.b16 %v1553, %v1521
    %v2354 = vpack.c.b16 %v1554, %v1522
    %v2355 = vpack.c.b16 %v1555, %v1523
    %v2356 = vpack.c.b16 %v1556, %v1524
    %v2357 = vpack.c.b16 %v1557, %v1525
    %v2358 = vpack.c.b16 %v1558, %v1526
    %v2359 = vpack.c.b16 %v1559, %v1527
    %v2360 = vpack.c.b16 %v1560, %v1528
    %v2361 = vpack.c.b16 %v1561, %v1529
    %v2362 = vpack.c.b16 %v1562, %v1530
    %v2363 = vpack.c.b16 %v1563, %v1531
    %v2364 = vpack.c.b16 %v1564, %v1532
    %v2365 = vpack.c.b16 %v1565, %v1533
    %v2366 = vpack.c.b16 %v1566, %v1534
    %v2367 = vpack.c.b16 %v1567, %v1535
    %v2368 = vpack.c.b16 %v1568, %v1536
    %v2369 = vpack.c.b16 %v1569, %v1537
    %v2370 = vpack.c.b16 %v1570, %v1538
    %v2371 = vpack.c.b16 %v1571, %v1539
    %v2372 = vpack.c.b16 %v1572, %v1540
    %v2373 = vpack.c.b16 %v1573, %v1541
    %v2374 = vpack.c.b16 %v1574, %v1542
    %v2375 = vpack.c.b16 %v1575, %v1543
    %v2376 = vpack.c.b16 %v1576, %v1544
    %v2377 = vpack.c.b16 %v1609, %v1577
    %v2378 = vpack.c.b16 %v1610, %v1578
    %v2379 = vpack.c.b16 %v1611, %v1579
    %v2380 = vpack.c.b16 %v1612, %v1580
    %v2381 = vpack.c.b16 %v1613, %v1581
    %v2382 = vpack.c.b16 %v1614, %v1582
    %v2383 = vpack.c.b16 %v1615, %v1583
    %v2384 = vpack.c.b16 %v1616, %v1584
    %v2385 = vpack.c.b16 %v1617, %v1585
    %v2386 = vpack.c.b16 %v1618, %v1586
    %v2387 = vpack.c.b16 %v1619, %v1587
    %v2388 = vpack.c.b16 %v1620, %v1588
    %v2389 = vpack.c.b16 %v1621, %v1589
    %v2390 = vpack.c.b16 %v1622, %v1590
    %v2391 = vpack.c.b16 %v1623, %v1591
    %v2392 = vpack.c.b16 %v1624, %v1592
    %v2393 = vpack.c.b16 %v1625, %v1593
    %v2394 = vpack.c.b16 %v1626, %v1594
    %v2395 = vpack.c.b16 %v1627, %v1595
    %v2396 = vpack.c.b16 %v1628, %v1596
    %v2397 = vpack.c.b16 %v1629, %v1597
    %v2398 = vpack.c.b16 %v1630, %v1598
    %v2399 = vpack.c.b16 %v1631, %v1599
    %v2400 = vpack.c.b16 %v1632, %v1600
    %v2401 = vpack.c.b16 %v1633, %v1601
    %v2402 = vpack.c.b16 %v1634, %v1602
    %v2403 = vpack.c.b16 %v1635, %v1603
    %v2404 = vpack.c.b16 %v1636, %v1604
    %v2405 = vpack.c.b16 %v1637, %v1605
    %v2406 = vpack.c.b16 %v1638, %v1606
    %v2407 = vpack.c.b16 %v1639, %v1607
    %v2408 = vpack.c.b16 %v1640, %v1608
    %v2409 = vpack.c.b16 %v1673, %v1641
    %v2410 = vpack.c.b16 %v1674, %v1642
    %v2411 = vpack.c.b16 %v1675, %v1643
    %v2412 = vpack.c.b16 %v1676, %v1644
    %v2413 = vpack.c.b16 %v1677, %v1645
    %v2414 = vpack.c.b16 %v1678, %v1646
    %v2415 = vpack.c.b16 %v1679, %v1647
    %v2416 = vpack.c.b16 %v1680, %v1648
    %v2417 = vpack.c.b16 %v1681, %v1649
    %v2418 = vpack.c.b16 %v1682, %v1650
    %v2419 = vpack.c.b16 %v1683, %v1651
    %v2420 = vpack.c.b16 %v1684, %v1652
    %v2421 = vpack.c.b16 %v1685, %v1653
    %v2422 = vpack.c.b16 %v1686, %v1654
    %v2423 = vpack.c.b16 %v1687, %v1655
    %v2424 = vpack.c.b16 %v1688, %v1656
    %v2425 = vpack.c.b16 %v1689, %v1657
    %v2426 = vpack.c.b16 %v1690, %v1658
    %v2427 = vpack.c.b16 %v1691, %v1659
    %v2428 = vpack.c.b16 %v1692, %v1660
    %v2429 = vpack.c.b16 %v1693, %v1661
    %v2430 = vpack.c.b16 %v1694, %v1662
    %v2431 = vpack.c.b16 %v1695, %v1663
    %v2432 = vpack.c.b16 %v1696, %v1664
    %v2433 = vpack.c.b16 %v1697, %v1665
    %v2434 = vpack.c.b16 %v1698, %v1666
    %v2435 = vpack.c.b16 %v1699, %v1667
    %v2436 = vpack.c.b16 %v1700, %v1668
    %v2437 = vpack.c.b16 %v1701, %v1669
    %v2438 = vpack.c.b16 %v1702, %v1670
    %v2439 = vpack.c.b16 %v1703, %v1671
    %v2440 = vpack.c.b16 %v1704, %v1672
    %v2441 = vpack.c.b16 %v1737, %v1705
    %v2442 = vpack.c.b16 %v1738, %v1706
    %v2443 = vpack.c.b16 %v1739, %v1707
    %v2444 = vpack.c.b16 %v1740, %v1708
    %v2445 = vpack.c.b16 %v1741, %v1709
    %v2446 = vpack.c.b16 %v1742, %v1710
    %v2447 = vpack.c.b16 %v1743, %v1711
    %v2448 = vpack.c.b16 %v1744, %v1712
    %v2449 = vpack.c.b16 %v1745, %v1713
    %v2450 = vpack.c.b16 %v1746, %v1714
    %v2451 = vpack.c.b16 %v1747, %v1715
    %v2452 = vpack.c.b16 %v1748, %v1716
    %v2453 = vpack.c.b16 %v1749, %v1717
    %v2454 = vpack.c.b16 %v1750, %v1718
    %v2455 = vpack.c.b16 %v1751, %v1719
    %v2456 = vpack.c.b16 %v1752, %v1720
    %v2457 = vpack.c.b16 %v1753, %v1721
    %v2458 = vpack.c.b16 %v1754, %v1722
    %v2459 = vpack.c.b16 %v1755, %v1723
    %v2460 = vpack.c.b16 %v1756, %v1724
    %v2461 = vpack.c.b16 %v1757, %v1725
    %v2462 = vpack.c.b16 %v1758, %v1726
    %v2463 = vpack.c.b16 %v1759, %v1727
    %v2464 = vpack.c.b16 %v1760, %v1728
    %v2465 = vpack.c.b16 %v1761, %v1729
    %v2466 = vpack.c.b16 %v1762, %v1730
    %v2467 = vpack.c.b16 %v1763, %v1731
    %v2468 = vpack.c.b16 %v1764, %v1732
    %v2469 = vpack.c.b16 %v1765, %v1733
    %v2470 = vpack.c.b16 %v1766, %v1734
    %v2471 = vpack.c.b16 %v1767, %v1735
    %v2472 = vpack.c.b16 %v1768, %v1736
    %v2473 = vpack.c.b16 %v1801, %v1769
    %v2474 = vpack.c.b16 %v1802, %v1770
    %v2475 = vpack.c.b16 %v1803, %v1771
    %v2476 = vpack.c.b16 %v1804, %v1772
    %v2477 = vpack.c.b16 %v1805, %v1773
    %v2478 = vpack.c.b16 %v1806, %v1774
    %v2479 = vpack.c.b16 %v1807, %v1775
    %v2480 = vpack.c.b16 %v1808, %v1776
    %v2481 = vpack.c.b16 %v1809, %v1777
    %v2482 = vpack.c.b16 %v1810, %v1778
    %v2483 = vpack.c.b16 %v1811, %v1779
    %v2484 = vpack.c.b16 %v1812, %v1780
    %v2485 = vpack.c.b16 %v1813, %v1781
    %v2486 = vpack.c.b16 %v1814, %v1782
    %v2487 = vpack.c.b16 %v1815, %v1783
    %v2488 = vpack.c.b16 %v1816, %v1784
    %v2489 = vpack.c.b16 %v1817, %v1785
    %v2490 = vpack.c.b16 %v1818, %v1786
    %v2491 = vpack.c.b16 %v1819, %v1787
    %v2492 = vpack.c.b16 %v1820, %v1788
    %v2493 = vpack.c.b16 %v1821, %v1789
    %v2494 = vpack.c.b16 %v1822, %v1790
    %v2495 = vpack.c.b16 %v1823, %v1791
    %v2496 = vpack.c.b16 %v1824, %v1792
    %v2497 = vpack.c.b16 %v1825, %v1793
    %v2498 = vpack.c.b16 %v1826, %v1794
    %v2499 = vpack.c.b16 %v1827, %v1795
    %v2500 = vpack.c.b16 %v1828, %v1796
    %v2501 = vpack.c.b16 %v1829, %v1797
    %v2502 = vpack.c.b16 %v1830, %v1798
    %v2503 = vpack.c.b16 %v1831, %v1799
    %v2504 = vpack.c.b16 %v1832, %v1800
    %v2505 = vpack.c.b16 %v1865, %v1833
    %v2506 = vpack.c.b16 %v1866, %v1834
    %v2507 = vpack.c.b16 %v1867, %v1835
    %v2508 = vpack.c.b16 %v1868, %v1836
    %v2509 = vpack.c.b16 %v1869, %v1837
    %v2510 = vpack.c.b16 %v1870, %v1838
    %v2511 = vpack.c.b16 %v1871, %v1839
    %v2512 = vpack.c.b16 %v1872, %v1840
    %v2513 = vpack.c.b16 %v1873, %v1841
    %v2514 = vpack.c.b16 %v1874, %v1842
    %v2515 = vpack.c.b16 %v1875, %v1843
    %v2516 = vpack.c.b16 %v1876, %v1844
    %v2517 = vpack.c.b16 %v1877, %v1845
    %v2518 = vpack.c.b16 %v1878, %v1846
    %v2519 = vpack.c.b16 %v1879, %v1847
    %v2520 = vpack.c.b16 %v1880, %v1848
    %v2521 = vpack.c.b16 %v1881, %v1849
    %v2522 = vpack.c.b16 %v1882, %v1850
    %v2523 = vpack.c.b16 %v1883, %v1851
    %v2524 = vpack.c.b16 %v1884, %v1852
    %v2525 = vpack.c.b16 %v1885, %v1853
    %v2526 = vpack.c.b16 %v1886, %v1854
    %v2527 = vpack.c.b16 %v1887, %v1855
    %v2528 = vpack.c.b16 %v1888, %v1856
    %v2529 = vpack.c.b16 %v1889, %v1857
    %v2530 = vpack.c.b16 %v1890, %v1858
    %v2531 = vpack.c.b16 %v1891, %v1859
    %v2532 = vpack.c.b16 %v1892, %v1860
    %v2533 = vpack.c.b16 %v1893, %v1861
    %v2534 = vpack.c.b16 %v1894, %v1862
    %v2535 = vpack.c.b16 %v1895, %v1863
    %v2536 = vpack.c.b16 %v1896, %v1864
    %v2537 = vpack.c.b16 %v1929, %v1897
    %v2538 = vpack.c.b16 %v1930, %v1898
    %v2539 = vpack.c.b16 %v1931, %v1899
    %v2540 = vpack.c.b16 %v1932, %v1900
    %v2541 = vpack.c.b16 %v1933, %v1901
    %v2542 = vpack.c.b16 %v1934, %v1902
    %v2543 = vpack.c.b16 %v1935, %v1903
    %v2544 = vpack.c.b16 %v1936, %v1904
    %v2545 = vpack.c.b16 %v1937, %v1905
    %v2546 = vpack.c.b16 %v1938, %v1906
    %v2547 = vpack.c.b16 %v1939, %v1907
    %v2548 = vpack.c.b16 %v1940, %v1908
    %v2549 = vpack.c.b16 %v1941, %v1909
    %v2550 = vpack.c.b16 %v1942, %v1910
    %v2551 = vpack.c.b16 %v1943, %v1911
    %v2552 = vpack.c.b16 %v1944, %v1912
    %v2553 = vpack.c.b16 %v1945, %v1913
    %v2554 = vpack.c.b16 %v1946, %v1914
    %v2555 = vpack.c.b16 %v1947, %v1915
    %v2556 = vpack.c.b16 %v1948, %v1916
    %v2557 = vpack.c.b16 %v1949, %v1917
    %v2558 = vpack.c.b16 %v1950, %v1918
    %v2559 = vpack.c.b16 %v1951, %v1919
    %v2560 = vpack.c.b16 %v1952, %v1920
    %v2561 = vpack.c.b16 %v1953, %v1921
    %v2562 = vpack.c.b16 %v1954, %v1922
    %v2563 = vpack.c.b16 %v1955, %v1923
    %v2564 = vpack.c.b16 %v1956, %v1924
    %v2565 = vpack.c.b16 %v1957, %v1925
    %v2566 = vpack.c.b16 %v1958, %v1926
    %v2567 = vpack.c.b16 %v1959, %v1927
    %v2568 = vpack.c.b16 %v1960, %v1928
    %v2569 = vpack.c.b16 %v1993, %v1961
    %v2570 = vpack.c.b16 %v1994, %v1962
    %v2571 = vpack.c.b16 %v1995, %v1963
    %v2572 = vpack.c.b16 %v1996, %v1964
    %v2573 = vpack.c.b16 %v1997, %v1965
    %v2574 = vpack.c.b16 %v1998, %v1966
    %v2575 = vpack.c.b16 %v1999, %v1967
    %v2576 = vpack.c.b16 %v2000, %v1968
    %v2577 = vpack.c.b16 %v2001, %v1969
    %v2578 = vpack.c.b16 %v2002, %v1970
    %v2579 = vpack.c.b16 %v2003, %v1971
    %v2580 = vpack.c.b16 %v2004, %v1972
    %v2581 = vpack.c.b16 %v2005, %v1973
    %v2582 = vpack.c.b16 %v2006, %v1974
    %v2583 = vpack.c.b16 %v2007, %v1975
    %v2584 = vpack.c.b16 %v2008, %v1976
    %v2585 = vpack.c.b16 %v2009, %v1977
    %v2586 = vpack.c.b16 %v2010, %v1978
    %v2587 = vpack.c.b16 %v2011, %v1979
    %v2588 = vpack.c.b16 %v2012, %v1980
    %v2589 = vpack.c.b16 %v2013, %v1981
    %v2590 = vpack.c.b16 %v2014, %v1982
    %v2591 = vpack.c.b16 %v2015, %v1983
    %v2592 = vpack.c.b16 %v2016, %v1984
    %v2593 = vpack.c.b16 %v2017, %v1985
    %v2594 = vpack.c.b16 %v2018, %v1986
    %v2595 = vpack.c.b16 %v2019, %v1987
    %v2596 = vpack.c.b16 %v2020, %v1988
    %v2597 = vpack.c.b16 %v2021, %v1989
    %v2598 = vpack.c.b16 %v2022, %v1990
    %v2599 = vpack.c.b16 %v2023, %v1991
    %v2600 = vpack.c.b16 %v2024, %v1992
    %v2601 = vpack.c.b16 %v2057, %v2025
    %v2602 = vpack.c.b16 %v2058, %v2026
    %v2603 = vpack.c.b16 %v2059, %v2027
    %v2604 = vpack.c.b16 %v2060, %v2028
    %v2605 = vpack.c.b16 %v2061, %v2029
    %v2606 = vpack.c.b16 %v2062, %v2030
    %v2607 = vpack.c.b16 %v2063, %v2031
    %v2608 = vpack.c.b16 %v2064, %v2032
    %v2609 = vpack.c.b16 %v2065, %v2033
    %v2610 = vpack.c.b16 %v2066, %v2034
    %v2611 = vpack.c.b16 %v2067, %v2035
    %v2612 = vpack.c.b16 %v2068, %v2036
    %v2613 = vpack.c.b16 %v2069, %v2037
    %v2614 = vpack.c.b16 %v2070, %v2038
    %v2615 = vpack.c.b16 %v2071, %v2039
    %v2616 = vpack.c.b16 %v2072, %v2040
    %v2617 = vpack.c.b16 %v2073, %v2041
    %v2618 = vpack.c.b16 %v2074, %v2042
    %v2619 = vpack.c.b16 %v2075, %v2043
    %v2620 = vpack.c.b16 %v2076, %v2044
    %v2621 = vpack.c.b16 %v2077, %v2045
    %v2622 = vpack.c.b16 %v2078, %v2046
    %v2623 = vpack.c.b16 %v2079, %v2047
    %v2624 = vpack.c.b16 %v2080, %v2048
    %v2625 = vpack.c.b16 %v2081, %v2049
    %v2626 = vpack.c.b16 %v2082, %v2050
    %v2627 = vpack.c.b16 %v2083, %v2051
    %v2628 = vpack.c.b16 %v2084, %v2052
    %v2629 = vpack.c.b16 %v2085, %v2053
    %v2630 = vpack.c.b16 %v2086, %v2054
    %v2631 = vpack.c.b16 %v2087, %v2055
    %v2632 = vpack.c.b16 %v2088, %v2056
    %v2633 = vpack.c.b16 %v2121, %v2089
    %v2634 = vpack.c.b16 %v2122, %v2090
    %v2635 = vpack.c.b16 %v2123, %v2091
    %v2636 = vpack.c.b16 %v2124, %v2092
    %v2637 = vpack.c.b16 %v2125, %v2093
    %v2638 = vpack.c.b16 %v2126, %v2094
    %v2639 = vpack.c.b16 %v2127, %v2095
    %v2640 = vpack.c.b16 %v2128, %v2096
    %v2641 = vpack.c.b16 %v2129, %v2097
    %v2642 = vpack.c.b16 %v2130, %v2098
    %v2643 = vpack.c.b16 %v2131, %v2099
    %v2644 = vpack.c.b16 %v2132, %v2100
    %v2645 = vpack.c.b16 %v2133, %v2101
    %v2646 = vpack.c.b16 %v2134, %v2102
    %v2647 = vpack.c.b16 %v2135, %v2103
    %v2648 = vpack.c.b16 %v2136, %v2104
    %v2649 = vpack.c.b16 %v2137, %v2105
    %v2650 = vpack.c.b16 %v2138, %v2106
    %v2651 = vpack.c.b16 %v2139, %v2107
    %v2652 = vpack.c.b16 %v2140, %v2108
    %v2653 = vpack.c.b16 %v2141, %v2109
    %v2654 = vpack.c.b16 %v2142, %v2110
    %v2655 = vpack.c.b16 %v2143, %v2111
    %v2656 = vpack.c.b16 %v2144, %v2112
    %v2657 = vpack.c.b16 %v2145, %v2113
    %v2658 = vpack.c.b16 %v2146, %v2114
    %v2659 = vpack.c.b16 %v2147, %v2115
    %v2660 = vpack.c.b16 %v2148, %v2116
    %v2661 = vpack.c.b16 %v2149, %v2117
    %v2662 = vpack.c.b16 %v2150, %v2118
    %v2663 = vpack.c.b16 %v2151, %v2119
    %v2664 = vpack.c.b16 %v2152, %v2120
    %3177 = vmatprep.subr.bf16.mxu0 %v2154
    %3178 = vmatpush1.bf16.msra.mxu0 %v2153
    %3179 = vmatprep.subr.bf16.mxu0 %v2186
    %3180 = vmatpush1.bf16.msra.mxu0 %v2185
    %3181 = vmatprep.subr.bf16.mxu0 %v2218
    %3182 = vmatpush1.bf16.msra.mxu0 %v2217
    %3183 = vmatprep.subr.bf16.mxu0 %v2250
    %3184 = vmatpush1.bf16.msra.mxu0 %v2249
    %3185 = vmatprep.subr.bf16.mxu0 %v2282
    %3186 = vmatpush1.bf16.msra.mxu0 %v2281
    %3187 = vmatprep.subr.bf16.mxu0 %v2314
    %3188 = vmatpush1.bf16.msra.mxu0 %v2313
    %3189 = vmatprep.subr.bf16.mxu0 %v2346
    %3190 = vmatpush1.bf16.msra.mxu0 %v2345
    %3191 = vmatprep.subr.bf16.mxu0 %v2378
    %3192 = vmatpush1.bf16.msra.mxu0 %v2377
    %3193 = vmatprep.subr.bf16.mxu0 %v2410
    %3194 = vmatpush1.bf16.msra.mxu0 %v2409
    %3195 = vmatprep.subr.bf16.mxu0 %v2442
    %3196 = vmatpush1.bf16.msra.mxu0 %v2441
    %3197 = vmatprep.subr.bf16.mxu0 %v2474
    %3198 = vmatpush1.bf16.msra.mxu0 %v2473
    %3199 = vmatprep.subr.bf16.mxu0 %v2506
    %3200 = vmatpush1.bf16.msra.mxu0 %v2505
    %3201 = vmatprep.subr.bf16.mxu0 %v2538
    %3202 = vmatpush1.bf16.msra.mxu0 %v2537
    %3203 = vmatprep.subr.bf16.mxu0 %v2570
    %3204 = vmatpush1.bf16.msra.mxu0 %v2569
    %3205 = vmatprep.subr.bf16.mxu0 %v2602
    %3206 = vmatpush1.bf16.msra.mxu0 %v2601
    %3207 = vmatprep.subr.bf16.mxu0 %v2634
    %3208 = vmatpush1.bf16.msra.mxu0 %v2633
    %3209 = vmatprep.mubr.bf16.mxu0 %v103
    %3210 = vmatmul.mubr.bf16.gmra.mrb[0].mxu0 %v102
    %v3211 = vpop.f32.mrb[0].mxu0
    %v3212 = vadd.f32 0.0, %v3211
    %v3213 = vpop.f32.mrb[0].mxu0
    %v3214 = vadd.f32 0.0, %v3213
    %v3215 = vpop.f32.mrb[0].mxu0
    %v3216 = vpop.f32.mrb[0].mxu0
    %3217 = vdwg.mxu0
    %3218 = vmatprep.subr.bf16.mxu0 %v2156
    %3219 = vmatpush1.bf16.msra.mxu0 %v2155
    %3220 = vmatprep.subr.bf16.mxu0 %v2188
    %3221 = vmatpush1.bf16.msra.mxu0 %v2187
    %3222 = vmatprep.subr.bf16.mxu0 %v2220
    %3223 = vmatpush1.bf16.msra.mxu0 %v2219
    %3224 = vmatprep.subr.bf16.mxu0 %v2252
    %3225 = vmatpush1.bf16.msra.mxu0 %v2251
    %3226 = vmatprep.subr.bf16.mxu0 %v2284
    %3227 = vmatpush1.bf16.msra.mxu0 %v2283
    %3228 = vmatprep.subr.bf16.mxu0 %v2316
    %3229 = vmatpush1.bf16.msra.mxu0 %v2315
    %3230 = vmatprep.subr.bf16.mxu0 %v2348
    %3231 = vmatpush1.bf16.msra.mxu0 %v2347
    %3232 = vmatprep.subr.bf16.mxu0 %v2380
    %3233 = vmatpush1.bf16.msra.mxu0 %v2379
    %3234 = vmatprep.subr.bf16.mxu0 %v2412
    %3235 = vmatpush1.bf16.msra.mxu0 %v2411
    %3236 = vmatprep.subr.bf16.mxu0 %v2444
    %3237 = vmatpush1.bf16.msra.mxu0 %v2443
    %3238 = vmatprep.subr.bf16.mxu0 %v2476
    %3239 = vmatpush1.bf16.msra.mxu0 %v2475
    %3240 = vmatprep.subr.bf16.mxu0 %v2508
    %3241 = vmatpush1.bf16.msra.mxu0 %v2507
    %3242 = vmatprep.subr.bf16.mxu0 %v2540
    %3243 = vmatpush1.bf16.msra.mxu0 %v2539
    %3244 = vmatprep.subr.bf16.mxu0 %v2572
    %3245 = vmatpush1.bf16.msra.mxu0 %v2571
    %3246 = vmatprep.subr.bf16.mxu0 %v2604
    %3247 = vmatpush1.bf16.msra.mxu0 %v2603
    %3248 = vmatprep.subr.bf16.mxu0 %v2636
    %3249 = vmatpush1.bf16.msra.mxu0 %v2635
    %3250 = vmatprep.mubr.bf16.mxu0 %v103
    %3251 = vmatmul.mubr.bf16.gmra.mrb[0].mxu0 %v102
    %v3252 = vpop.f32.mrb[0].mxu0
    %v3253 = vadd.f32 0.0, %v3252
    %v3254 = vpop.f32.mrb[0].mxu0
    %v3255 = vadd.f32 0.0, %v3254
    %v3256 = vpop.f32.mrb[0].mxu0
    %v3257 = vpop.f32.mrb[0].mxu0
    %3258 = vdwg.mxu0
    %3259 = vmatprep.subr.bf16.mxu0 %v2158
    %3260 = vmatpush1.bf16.msra.mxu0 %v2157
    %3261 = vmatprep.subr.bf16.mxu0 %v2190
    %3262 = vmatpush1.bf16.msra.mxu0 %v2189
    %3263 = vmatprep.subr.bf16.mxu0 %v2222
    %3264 = vmatpush1.bf16.msra.mxu0 %v2221
    %3265 = vmatprep.subr.bf16.mxu0 %v2254
    %3266 = vmatpush1.bf16.msra.mxu0 %v2253
    %3267 = vmatprep.subr.bf16.mxu0 %v2286
    %3268 = vmatpush1.bf16.msra.mxu0 %v2285
    %3269 = vmatprep.subr.bf16.mxu0 %v2318
    %3270 = vmatpush1.bf16.msra.mxu0 %v2317
    %3271 = vmatprep.subr.bf16.mxu0 %v2350
    %3272 = vmatpush1.bf16.msra.mxu0 %v2349
    %3273 = vmatprep.subr.bf16.mxu0 %v2382
    %3274 = vmatpush1.bf16.msra.mxu0 %v2381
    %3275 = vmatprep.subr.bf16.mxu0 %v2414
    %3276 = vmatpush1.bf16.msra.mxu0 %v2413
    %3277 = vmatprep.subr.bf16.mxu0 %v2446
    %3278 = vmatpush1.bf16.msra.mxu0 %v2445
    %3279 = vmatprep.subr.bf16.mxu0 %v2478
    %3280 = vmatpush1.bf16.msra.mxu0 %v2477
    %3281 = vmatprep.subr.bf16.mxu0 %v2510
    %3282 = vmatpush1.bf16.msra.mxu0 %v2509
    %3283 = vmatprep.subr.bf16.mxu0 %v2542
    %3284 = vmatpush1.bf16.msra.mxu0 %v2541
    %3285 = vmatprep.subr.bf16.mxu0 %v2574
    %3286 = vmatpush1.bf16.msra.mxu0 %v2573
    %3287 = vmatprep.subr.bf16.mxu0 %v2606
    %3288 = vmatpush1.bf16.msra.mxu0 %v2605
    %3289 = vmatprep.subr.bf16.mxu0 %v2638
    %3290 = vmatpush1.bf16.msra.mxu0 %v2637
    %3291 = vmatprep.mubr.bf16.mxu0 %v103
    %3292 = vmatmul.mubr.bf16.gmra.mrb[0].mxu0 %v102
    %v3293 = vpop.f32.mrb[0].mxu0
    %v3294 = vadd.f32 0.0, %v3293
    %v3295 = vpop.f32.mrb[0].mxu0
    %v3296 = vadd.f32 0.0, %v3295
    %v3297 = vpop.f32.mrb[0].mxu0
    %v3298 = vpop.f32.mrb[0].mxu0
    %3299 = vdwg.mxu0
    %3300 = vmatprep.subr.bf16.mxu0 %v2160
    %3301 = vmatpush1.bf16.msra.mxu0 %v2159
    %3302 = vmatprep.subr.bf16.mxu0 %v2192
    %3303 = vmatpush1.bf16.msra.mxu0 %v2191
    %3304 = vmatprep.subr.bf16.mxu0 %v2224
    %3305 = vmatpush1.bf16.msra.mxu0 %v2223
    %3306 = vmatprep.subr.bf16.mxu0 %v2256
    %3307 = vmatpush1.bf16.msra.mxu0 %v2255
    %3308 = vmatprep.subr.bf16.mxu0 %v2288
    %3309 = vmatpush1.bf16.msra.mxu0 %v2287
    %3310 = vmatprep.subr.bf16.mxu0 %v2320
    %3311 = vmatpush1.bf16.msra.mxu0 %v2319
    %3312 = vmatprep.subr.bf16.mxu0 %v2352
    %3313 = vmatpush1.bf16.msra.mxu0 %v2351
    %3314 = vmatprep.subr.bf16.mxu0 %v2384
    %3315 = vmatpush1.bf16.msra.mxu0 %v2383
    %3316 = vmatprep.subr.bf16.mxu0 %v2416
    %3317 = vmatpush1.bf16.msra.mxu0 %v2415
    %3318 = vmatprep.subr.bf16.mxu0 %v2448
    %3319 = vmatpush1.bf16.msra.mxu0 %v2447
    %3320 = vmatprep.subr.bf16.mxu0 %v2480
    %3321 = vmatpush1.bf16.msra.mxu0 %v2479
    %3322 = vmatprep.subr.bf16.mxu0 %v2512
    %3323 = vmatpush1.bf16.msra.mxu0 %v2511
    %3324 = vmatprep.subr.bf16.mxu0 %v2544
    %3325 = vmatpush1.bf16.msra.mxu0 %v2543
    %3326 = vmatprep.subr.bf16.mxu0 %v2576
    %3327 = vmatpush1.bf16.msra.mxu0 %v2575
    %3328 = vmatprep.subr.bf16.mxu0 %v2608
    %3329 = vmatpush1.bf16.msra.mxu0 %v2607
    %3330 = vmatprep.subr.bf16.mxu0 %v2640
    %3331 = vmatpush1.bf16.msra.mxu0 %v2639
    %3332 = vmatprep.mubr.bf16.mxu0 %v103
    %3333 = vmatmul.mubr.bf16.gmra.mrb[0].mxu0 %v102
    %v3334 = vpop.f32.mrb[0].mxu0
    %v3335 = vadd.f32 0.0, %v3334
    %v3336 = vpop.f32.mrb[0].mxu0
    %v3337 = vadd.f32 0.0, %v3336
    %v3338 = vpop.f32.mrb[0].mxu0
    %v3339 = vpop.f32.mrb[0].mxu0
    %3340 = vdwg.mxu0
    %3341 = vmatprep.subr.bf16.mxu0 %v2162
    %3342 = vmatpush1.bf16.msra.mxu0 %v2161
    %3343 = vmatprep.subr.bf16.mxu0 %v2194
    %3344 = vmatpush1.bf16.msra.mxu0 %v2193
    %3345 = vmatprep.subr.bf16.mxu0 %v2226
    %3346 = vmatpush1.bf16.msra.mxu0 %v2225
    %3347 = vmatprep.subr.bf16.mxu0 %v2258
    %3348 = vmatpush1.bf16.msra.mxu0 %v2257
    %3349 = vmatprep.subr.bf16.mxu0 %v2290
    %3350 = vmatpush1.bf16.msra.mxu0 %v2289
    %3351 = vmatprep.subr.bf16.mxu0 %v2322
    %3352 = vmatpush1.bf16.msra.mxu0 %v2321
    %3353 = vmatprep.subr.bf16.mxu0 %v2354
    %3354 = vmatpush1.bf16.msra.mxu0 %v2353
    %3355 = vmatprep.subr.bf16.mxu0 %v2386
    %3356 = vmatpush1.bf16.msra.mxu0 %v2385
    %3357 = vmatprep.subr.bf16.mxu0 %v2418
    %3358 = vmatpush1.bf16.msra.mxu0 %v2417
    %3359 = vmatprep.subr.bf16.mxu0 %v2450
    %3360 = vmatpush1.bf16.msra.mxu0 %v2449
    %3361 = vmatprep.subr.bf16.mxu0 %v2482
    %3362 = vmatpush1.bf16.msra.mxu0 %v2481
    %3363 = vmatprep.subr.bf16.mxu0 %v2514
    %3364 = vmatpush1.bf16.msra.mxu0 %v2513
    %3365 = vmatprep.subr.bf16.mxu0 %v2546
    %3366 = vmatpush1.bf16.msra.mxu0 %v2545
    %3367 = vmatprep.subr.bf16.mxu0 %v2578
    %3368 = vmatpush1.bf16.msra.mxu0 %v2577
    %3369 = vmatprep.subr.bf16.mxu0 %v2610
    %3370 = vmatpush1.bf16.msra.mxu0 %v2609
    %3371 = vmatprep.subr.bf16.mxu0 %v2642
    %3372 = vmatpush1.bf16.msra.mxu0 %v2641
    %3373 = vmatprep.mubr.bf16.mxu0 %v103
    %3374 = vmatmul.mubr.bf16.gmra.mrb[0].mxu0 %v102
    %v3375 = vpop.f32.mrb[0].mxu0
    %v3376 = vadd.f32 0.0, %v3375
    %v3377 = vpop.f32.mrb[0].mxu0
    %v3378 = vadd.f32 0.0, %v3377
    %v3379 = vpop.f32.mrb[0].mxu0
    %v3380 = vpop.f32.mrb[0].mxu0
    %3381 = vdwg.mxu0
    %3382 = vmatprep.subr.bf16.mxu0 %v2164
    %3383 = vmatpush1.bf16.msra.mxu0 %v2163
    %3384 = vmatprep.subr.bf16.mxu0 %v2196
    %3385 = vmatpush1.bf16.msra.mxu0 %v2195
    %3386 = vmatprep.subr.bf16.mxu0 %v2228
    %3387 = vmatpush1.bf16.msra.mxu0 %v2227
    %3388 = vmatprep.subr.bf16.mxu0 %v2260
    %3389 = vmatpush1.bf16.msra.mxu0 %v2259
    %3390 = vmatprep.subr.bf16.mxu0 %v2292
    %3391 = vmatpush1.bf16.msra.mxu0 %v2291
    %3392 = vmatprep.subr.bf16.mxu0 %v2324
    %3393 = vmatpush1.bf16.msra.mxu0 %v2323
    %3394 = vmatprep.subr.bf16.mxu0 %v2356
    %3395 = vmatpush1.bf16.msra.mxu0 %v2355
    %3396 = vmatprep.subr.bf16.mxu0 %v2388
    %3397 = vmatpush1.bf16.msra.mxu0 %v2387
    %3398 = vmatprep.subr.bf16.mxu0 %v2420
    %3399 = vmatpush1.bf16.msra.mxu0 %v2419
    %3400 = vmatprep.subr.bf16.mxu0 %v2452
    %3401 = vmatpush1.bf16.msra.mxu0 %v2451
    %3402 = vmatprep.subr.bf16.mxu0 %v2484
    %3403 = vmatpush1.bf16.msra.mxu0 %v2483
    %3404 = vmatprep.subr.bf16.mxu0 %v2516
    %3405 = vmatpush1.bf16.msra.mxu0 %v2515
    %3406 = vmatprep.subr.bf16.mxu0 %v2548
    %3407 = vmatpush1.bf16.msra.mxu0 %v2547
    %3408 = vmatprep.subr.bf16.mxu0 %v2580
    %3409 = vmatpush1.bf16.msra.mxu0 %v2579
    %3410 = vmatprep.subr.bf16.mxu0 %v2612
    %3411 = vmatpush1.bf16.msra.mxu0 %v2611
    %3412 = vmatprep.subr.bf16.mxu0 %v2644
    %3413 = vmatpush1.bf16.msra.mxu0 %v2643
    %3414 = vmatprep.mubr.bf16.mxu0 %v103
    %3415 = vmatmul.mubr.bf16.gmra.mrb[0].mxu0 %v102
    %v3416 = vpop.f32.mrb[0].mxu0
    %v3417 = vadd.f32 0.0, %v3416
    %v3418 = vpop.f32.mrb[0].mxu0
    %v3419 = vadd.f32 0.0, %v3418
    %v3420 = vpop.f32.mrb[0].mxu0
    %v3421 = vpop.f32.mrb[0].mxu0
    %3422 = vdwg.mxu0
    %3423 = vmatprep.subr.bf16.mxu0 %v2166
    %3424 = vmatpush1.bf16.msra.mxu0 %v2165
    %3425 = vmatprep.subr.bf16.mxu0 %v2198
    %3426 = vmatpush1.bf16.msra.mxu0 %v2197
    %3427 = vmatprep.subr.bf16.mxu0 %v2230
    %3428 = vmatpush1.bf16.msra.mxu0 %v2229
    %3429 = vmatprep.subr.bf16.mxu0 %v2262
    %3430 = vmatpush1.bf16.msra.mxu0 %v2261
    %3431 = vmatprep.subr.bf16.mxu0 %v2294
    %3432 = vmatpush1.bf16.msra.mxu0 %v2293
    %3433 = vmatprep.subr.bf16.mxu0 %v2326
    %3434 = vmatpush1.bf16.msra.mxu0 %v2325
    %3435 = vmatprep.subr.bf16.mxu0 %v2358
    %3436 = vmatpush1.bf16.msra.mxu0 %v2357
    %3437 = vmatprep.subr.bf16.mxu0 %v2390
    %3438 = vmatpush1.bf16.msra.mxu0 %v2389
    %3439 = vmatprep.subr.bf16.mxu0 %v2422
    %3440 = vmatpush1.bf16.msra.mxu0 %v2421
    %3441 = vmatprep.subr.bf16.mxu0 %v2454
    %3442 = vmatpush1.bf16.msra.mxu0 %v2453
    %3443 = vmatprep.subr.bf16.mxu0 %v2486
    %3444 = vmatpush1.bf16.msra.mxu0 %v2485
    %3445 = vmatprep.subr.bf16.mxu0 %v2518
    %3446 = vmatpush1.bf16.msra.mxu0 %v2517
    %3447 = vmatprep.subr.bf16.mxu0 %v2550
    %3448 = vmatpush1.bf16.msra.mxu0 %v2549
    %3449 = vmatprep.subr.bf16.mxu0 %v2582
    %3450 = vmatpush1.bf16.msra.mxu0 %v2581
    %3451 = vmatprep.subr.bf16.mxu0 %v2614
    %3452 = vmatpush1.bf16.msra.mxu0 %v2613
    %3453 = vmatprep.subr.bf16.mxu0 %v2646
    %3454 = vmatpush1.bf16.msra.mxu0 %v2645
    %3455 = vmatprep.mubr.bf16.mxu0 %v103
    %3456 = vmatmul.mubr.bf16.gmra.mrb[0].mxu0 %v102
    %v3457 = vpop.f32.mrb[0].mxu0
    %v3458 = vadd.f32 0.0, %v3457
    %v3459 = vpop.f32.mrb[0].mxu0
    %v3460 = vadd.f32 0.0, %v3459
    %v3461 = vpop.f32.mrb[0].mxu0
    %v3462 = vpop.f32.mrb[0].mxu0
    %3463 = vdwg.mxu0
    %3464 = vmatprep.subr.bf16.mxu0 %v2168
    %3465 = vmatpush1.bf16.msra.mxu0 %v2167
    %3466 = vmatprep.subr.bf16.mxu0 %v2200
    %3467 = vmatpush1.bf16.msra.mxu0 %v2199
    %3468 = vmatprep.subr.bf16.mxu0 %v2232
    %3469 = vmatpush1.bf16.msra.mxu0 %v2231
    %3470 = vmatprep.subr.bf16.mxu0 %v2264
    %3471 = vmatpush1.bf16.msra.mxu0 %v2263
    %3472 = vmatprep.subr.bf16.mxu0 %v2296
    %3473 = vmatpush1.bf16.msra.mxu0 %v2295
    %3474 = vmatprep.subr.bf16.mxu0 %v2328
    %3475 = vmatpush1.bf16.msra.mxu0 %v2327
    %3476 = vmatprep.subr.bf16.mxu0 %v2360
    %3477 = vmatpush1.bf16.msra.mxu0 %v2359
    %3478 = vmatprep.subr.bf16.mxu0 %v2392
    %3479 = vmatpush1.bf16.msra.mxu0 %v2391
    %3480 = vmatprep.subr.bf16.mxu0 %v2424
    %3481 = vmatpush1.bf16.msra.mxu0 %v2423
    %3482 = vmatprep.subr.bf16.mxu0 %v2456
    %3483 = vmatpush1.bf16.msra.mxu0 %v2455
    %3484 = vmatprep.subr.bf16.mxu0 %v2488
    %3485 = vmatpush1.bf16.msra.mxu0 %v2487
    %3486 = vmatprep.subr.bf16.mxu0 %v2520
    %3487 = vmatpush1.bf16.msra.mxu0 %v2519
    %3488 = vmatprep.subr.bf16.mxu0 %v2552
    %3489 = vmatpush1.bf16.msra.mxu0 %v2551
    %3490 = vmatprep.subr.bf16.mxu0 %v2584
    %3491 = vmatpush1.bf16.msra.mxu0 %v2583
    %3492 = vmatprep.subr.bf16.mxu0 %v2616
    %3493 = vmatpush1.bf16.msra.mxu0 %v2615
    %3494 = vmatprep.subr.bf16.mxu0 %v2648
    %3495 = vmatpush1.bf16.msra.mxu0 %v2647
    %3496 = vmatprep.mubr.bf16.mxu0 %v103
    %3497 = vmatmul.mubr.bf16.gmra.mrb[0].mxu0 %v102
    %v3498 = vpop.f32.mrb[0].mxu0
    %v3499 = vadd.f32 0.0, %v3498
    %v3500 = vpop.f32.mrb[0].mxu0
    %v3501 = vadd.f32 0.0, %v3500
    %v3502 = vpop.f32.mrb[0].mxu0
    %v3503 = vpop.f32.mrb[0].mxu0
    %3504 = vdwg.mxu0
    %3505 = vmatprep.subr.bf16.mxu0 %v2170
    %3506 = vmatpush1.bf16.msra.mxu0 %v2169
    %3507 = vmatprep.subr.bf16.mxu0 %v2202
    %3508 = vmatpush1.bf16.msra.mxu0 %v2201
    %3509 = vmatprep.subr.bf16.mxu0 %v2234
    %3510 = vmatpush1.bf16.msra.mxu0 %v2233
    %3511 = vmatprep.subr.bf16.mxu0 %v2266
    %3512 = vmatpush1.bf16.msra.mxu0 %v2265
    %3513 = vmatprep.subr.bf16.mxu0 %v2298
    %3514 = vmatpush1.bf16.msra.mxu0 %v2297
    %3515 = vmatprep.subr.bf16.mxu0 %v2330
    %3516 = vmatpush1.bf16.msra.mxu0 %v2329
    %3517 = vmatprep.subr.bf16.mxu0 %v2362
    %3518 = vmatpush1.bf16.msra.mxu0 %v2361
    %3519 = vmatprep.subr.bf16.mxu0 %v2394
    %3520 = vmatpush1.bf16.msra.mxu0 %v2393
    %3521 = vmatprep.subr.bf16.mxu0 %v2426
    %3522 = vmatpush1.bf16.msra.mxu0 %v2425
    %3523 = vmatprep.subr.bf16.mxu0 %v2458
    %3524 = vmatpush1.bf16.msra.mxu0 %v2457
    %3525 = vmatprep.subr.bf16.mxu0 %v2490
    %3526 = vmatpush1.bf16.msra.mxu0 %v2489
    %3527 = vmatprep.subr.bf16.mxu0 %v2522
    %3528 = vmatpush1.bf16.msra.mxu0 %v2521
    %3529 = vmatprep.subr.bf16.mxu0 %v2554
    %3530 = vmatpush1.bf16.msra.mxu0 %v2553
    %3531 = vmatprep.subr.bf16.mxu0 %v2586
    %3532 = vmatpush1.bf16.msra.mxu0 %v2585
    %3533 = vmatprep.subr.bf16.mxu0 %v2618
    %3534 = vmatpush1.bf16.msra.mxu0 %v2617
    %3535 = vmatprep.subr.bf16.mxu0 %v2650
    %3536 = vmatpush1.bf16.msra.mxu0 %v2649
    %3537 = vmatprep.mubr.bf16.mxu0 %v103
    %3538 = vmatmul.mubr.bf16.gmra.mrb[0].mxu0 %v102
    %v3539 = vpop.f32.mrb[0].mxu0
    %v3540 = vadd.f32 0.0, %v3539
    %v3541 = vpop.f32.mrb[0].mxu0
    %v3542 = vadd.f32 0.0, %v3541
    %v3543 = vpop.f32.mrb[0].mxu0
    %v3544 = vpop.f32.mrb[0].mxu0
    %3545 = vdwg.mxu0
    %3546 = vmatprep.subr.bf16.mxu0 %v2172
    %3547 = vmatpush1.bf16.msra.mxu0 %v2171
    %3548 = vmatprep.subr.bf16.mxu0 %v2204
    %3549 = vmatpush1.bf16.msra.mxu0 %v2203
    %3550 = vmatprep.subr.bf16.mxu0 %v2236
    %3551 = vmatpush1.bf16.msra.mxu0 %v2235
    %3552 = vmatprep.subr.bf16.mxu0 %v2268
    %3553 = vmatpush1.bf16.msra.mxu0 %v2267
    %3554 = vmatprep.subr.bf16.mxu0 %v2300
    %3555 = vmatpush1.bf16.msra.mxu0 %v2299
    %3556 = vmatprep.subr.bf16.mxu0 %v2332
    %3557 = vmatpush1.bf16.msra.mxu0 %v2331
    %3558 = vmatprep.subr.bf16.mxu0 %v2364
    %3559 = vmatpush1.bf16.msra.mxu0 %v2363
    %3560 = vmatprep.subr.bf16.mxu0 %v2396
    %3561 = vmatpush1.bf16.msra.mxu0 %v2395
    %3562 = vmatprep.subr.bf16.mxu0 %v2428
    %3563 = vmatpush1.bf16.msra.mxu0 %v2427
    %3564 = vmatprep.subr.bf16.mxu0 %v2460
    %3565 = vmatpush1.bf16.msra.mxu0 %v2459
    %3566 = vmatprep.subr.bf16.mxu0 %v2492
    %3567 = vmatpush1.bf16.msra.mxu0 %v2491
    %3568 = vmatprep.subr.bf16.mxu0 %v2524
    %3569 = vmatpush1.bf16.msra.mxu0 %v2523
    %3570 = vmatprep.subr.bf16.mxu0 %v2556
    %3571 = vmatpush1.bf16.msra.mxu0 %v2555
    %3572 = vmatprep.subr.bf16.mxu0 %v2588
    %3573 = vmatpush1.bf16.msra.mxu0 %v2587
    %3574 = vmatprep.subr.bf16.mxu0 %v2620
    %3575 = vmatpush1.bf16.msra.mxu0 %v2619
    %3576 = vmatprep.subr.bf16.mxu0 %v2652
    %3577 = vmatpush1.bf16.msra.mxu0 %v2651
    %3578 = vmatprep.mubr.bf16.mxu0 %v103
    %3579 = vmatmul.mubr.bf16.gmra.mrb[0].mxu0 %v102
    %v3580 = vpop.f32.mrb[0].mxu0
    %v3581 = vadd.f32 0.0, %v3580
    %v3582 = vpop.f32.mrb[0].mxu0
    %v3583 = vadd.f32 0.0, %v3582
    %v3584 = vpop.f32.mrb[0].mxu0
    %v3585 = vpop.f32.mrb[0].mxu0
    %3586 = vdwg.mxu0
    %3587 = vmatprep.subr.bf16.mxu0 %v2174
    %3588 = vmatpush1.bf16.msra.mxu0 %v2173
    %3589 = vmatprep.subr.bf16.mxu0 %v2206
    %3590 = vmatpush1.bf16.msra.mxu0 %v2205
    %3591 = vmatprep.subr.bf16.mxu0 %v2238
    %3592 = vmatpush1.bf16.msra.mxu0 %v2237
    %3593 = vmatprep.subr.bf16.mxu0 %v2270
    %3594 = vmatpush1.bf16.msra.mxu0 %v2269
    %3595 = vmatprep.subr.bf16.mxu0 %v2302
    %3596 = vmatpush1.bf16.msra.mxu0 %v2301
    %3597 = vmatprep.subr.bf16.mxu0 %v2334
    %3598 = vmatpush1.bf16.msra.mxu0 %v2333
    %3599 = vmatprep.subr.bf16.mxu0 %v2366
    %3600 = vmatpush1.bf16.msra.mxu0 %v2365
    %3601 = vmatprep.subr.bf16.mxu0 %v2398
    %3602 = vmatpush1.bf16.msra.mxu0 %v2397
    %3603 = vmatprep.subr.bf16.mxu0 %v2430
    %3604 = vmatpush1.bf16.msra.mxu0 %v2429
    %3605 = vmatprep.subr.bf16.mxu0 %v2462
    %3606 = vmatpush1.bf16.msra.mxu0 %v2461
    %3607 = vmatprep.subr.bf16.mxu0 %v2494
    %3608 = vmatpush1.bf16.msra.mxu0 %v2493
    %3609 = vmatprep.subr.bf16.mxu0 %v2526
    %3610 = vmatpush1.bf16.msra.mxu0 %v2525
    %3611 = vmatprep.subr.bf16.mxu0 %v2558
    %3612 = vmatpush1.bf16.msra.mxu0 %v2557
    %3613 = vmatprep.subr.bf16.mxu0 %v2590
    %3614 = vmatpush1.bf16.msra.mxu0 %v2589
    %3615 = vmatprep.subr.bf16.mxu0 %v2622
    %3616 = vmatpush1.bf16.msra.mxu0 %v2621
    %3617 = vmatprep.subr.bf16.mxu0 %v2654
    %3618 = vmatpush1.bf16.msra.mxu0 %v2653
    %3619 = vmatprep.mubr.bf16.mxu0 %v103
    %3620 = vmatmul.mubr.bf16.gmra.mrb[0].mxu0 %v102
    %v3621 = vpop.f32.mrb[0].mxu0
    %v3622 = vadd.f32 0.0, %v3621
    %v3623 = vpop.f32.mrb[0].mxu0
    %v3624 = vadd.f32 0.0, %v3623
    %v3625 = vpop.f32.mrb[0].mxu0
    %v3626 = vpop.f32.mrb[0].mxu0
    %3627 = vdwg.mxu0
    %3628 = vmatprep.subr.bf16.mxu0 %v2176
    %3629 = vmatpush1.bf16.msra.mxu0 %v2175
    %3630 = vmatprep.subr.bf16.mxu0 %v2208
    %3631 = vmatpush1.bf16.msra.mxu0 %v2207
    %3632 = vmatprep.subr.bf16.mxu0 %v2240
    %3633 = vmatpush1.bf16.msra.mxu0 %v2239
    %3634 = vmatprep.subr.bf16.mxu0 %v2272
    %3635 = vmatpush1.bf16.msra.mxu0 %v2271
    %3636 = vmatprep.subr.bf16.mxu0 %v2304
    %3637 = vmatpush1.bf16.msra.mxu0 %v2303
    %3638 = vmatprep.subr.bf16.mxu0 %v2336
    %3639 = vmatpush1.bf16.msra.mxu0 %v2335
    %3640 = vmatprep.subr.bf16.mxu0 %v2368
    %3641 = vmatpush1.bf16.msra.mxu0 %v2367
    %3642 = vmatprep.subr.bf16.mxu0 %v2400
    %3643 = vmatpush1.bf16.msra.mxu0 %v2399
    %3644 = vmatprep.subr.bf16.mxu0 %v2432
    %3645 = vmatpush1.bf16.msra.mxu0 %v2431
    %3646 = vmatprep.subr.bf16.mxu0 %v2464
    %3647 = vmatpush1.bf16.msra.mxu0 %v2463
    %3648 = vmatprep.subr.bf16.mxu0 %v2496
    %3649 = vmatpush1.bf16.msra.mxu0 %v2495
    %3650 = vmatprep.subr.bf16.mxu0 %v2528
    %3651 = vmatpush1.bf16.msra.mxu0 %v2527
    %3652 = vmatprep.subr.bf16.mxu0 %v2560
    %3653 = vmatpush1.bf16.msra.mxu0 %v2559
    %3654 = vmatprep.subr.bf16.mxu0 %v2592
    %3655 = vmatpush1.bf16.msra.mxu0 %v2591
    %3656 = vmatprep.subr.bf16.mxu0 %v2624
    %3657 = vmatpush1.bf16.msra.mxu0 %v2623
    %3658 = vmatprep.subr.bf16.mxu0 %v2656
    %3659 = vmatpush1.bf16.msra.mxu0 %v2655
    %3660 = vmatprep.mubr.bf16.mxu0 %v103
    %3661 = vmatmul.mubr.bf16.gmra.mrb[0].mxu0 %v102
    %v3662 = vpop.f32.mrb[0].mxu0
    %v3663 = vadd.f32 0.0, %v3662
    %v3664 = vpop.f32.mrb[0].mxu0
    %v3665 = vadd.f32 0.0, %v3664
    %v3666 = vpop.f32.mrb[0].mxu0
    %v3667 = vpop.f32.mrb[0].mxu0
    %3668 = vdwg.mxu0
    %3669 = vmatprep.subr.bf16.mxu0 %v2178
    %3670 = vmatpush1.bf16.msra.mxu0 %v2177
    %3671 = vmatprep.subr.bf16.mxu0 %v2210
    %3672 = vmatpush1.bf16.msra.mxu0 %v2209
    %3673 = vmatprep.subr.bf16.mxu0 %v2242
    %3674 = vmatpush1.bf16.msra.mxu0 %v2241
    %3675 = vmatprep.subr.bf16.mxu0 %v2274
    %3676 = vmatpush1.bf16.msra.mxu0 %v2273
    %3677 = vmatprep.subr.bf16.mxu0 %v2306
    %3678 = vmatpush1.bf16.msra.mxu0 %v2305
    %3679 = vmatprep.subr.bf16.mxu0 %v2338
    %3680 = vmatpush1.bf16.msra.mxu0 %v2337
    %3681 = vmatprep.subr.bf16.mxu0 %v2370
    %3682 = vmatpush1.bf16.msra.mxu0 %v2369
    %3683 = vmatprep.subr.bf16.mxu0 %v2402
    %3684 = vmatpush1.bf16.msra.mxu0 %v2401
    %3685 = vmatprep.subr.bf16.mxu0 %v2434
    %3686 = vmatpush1.bf16.msra.mxu0 %v2433
    %3687 = vmatprep.subr.bf16.mxu0 %v2466
    %3688 = vmatpush1.bf16.msra.mxu0 %v2465
    %3689 = vmatprep.subr.bf16.mxu0 %v2498
    %3690 = vmatpush1.bf16.msra.mxu0 %v2497
    %3691 = vmatprep.subr.bf16.mxu0 %v2530
    %3692 = vmatpush1.bf16.msra.mxu0 %v2529
    %3693 = vmatprep.subr.bf16.mxu0 %v2562
    %3694 = vmatpush1.bf16.msra.mxu0 %v2561
    %3695 = vmatprep.subr.bf16.mxu0 %v2594
    %3696 = vmatpush1.bf16.msra.mxu0 %v2593
    %3697 = vmatprep.subr.bf16.mxu0 %v2626
    %3698 = vmatpush1.bf16.msra.mxu0 %v2625
    %3699 = vmatprep.subr.bf16.mxu0 %v2658
    %3700 = vmatpush1.bf16.msra.mxu0 %v2657
    %3701 = vmatprep.mubr.bf16.mxu0 %v103
    %3702 = vmatmul.mubr.bf16.gmra.mrb[0].mxu0 %v102
    %v3703 = vpop.f32.mrb[0].mxu0
    %v3704 = vadd.f32 0.0, %v3703
    %v3705 = vpop.f32.mrb[0].mxu0
    %v3706 = vadd.f32 0.0, %v3705
    %v3707 = vpop.f32.mrb[0].mxu0
    %v3708 = vpop.f32.mrb[0].mxu0
    %3709 = vdwg.mxu0
    %3710 = vmatprep.subr.bf16.mxu0 %v2180
    %3711 = vmatpush1.bf16.msra.mxu0 %v2179
    %3712 = vmatprep.subr.bf16.mxu0 %v2212
    %3713 = vmatpush1.bf16.msra.mxu0 %v2211
    %3714 = vmatprep.subr.bf16.mxu0 %v2244
    %3715 = vmatpush1.bf16.msra.mxu0 %v2243
    %3716 = vmatprep.subr.bf16.mxu0 %v2276
    %3717 = vmatpush1.bf16.msra.mxu0 %v2275
    %3718 = vmatprep.subr.bf16.mxu0 %v2308
    %3719 = vmatpush1.bf16.msra.mxu0 %v2307
    %3720 = vmatprep.subr.bf16.mxu0 %v2340
    %3721 = vmatpush1.bf16.msra.mxu0 %v2339
    %3722 = vmatprep.subr.bf16.mxu0 %v2372
    %3723 = vmatpush1.bf16.msra.mxu0 %v2371
    %3724 = vmatprep.subr.bf16.mxu0 %v2404
    %3725 = vmatpush1.bf16.msra.mxu0 %v2403
    %3726 = vmatprep.subr.bf16.mxu0 %v2436
    %3727 = vmatpush1.bf16.msra.mxu0 %v2435
    %3728 = vmatprep.subr.bf16.mxu0 %v2468
    %3729 = vmatpush1.bf16.msra.mxu0 %v2467
    %3730 = vmatprep.subr.bf16.mxu0 %v2500
    %3731 = vmatpush1.bf16.msra.mxu0 %v2499
    %3732 = vmatprep.subr.bf16.mxu0 %v2532
    %3733 = vmatpush1.bf16.msra.mxu0 %v2531
    %3734 = vmatprep.subr.bf16.mxu0 %v2564
    %3735 = vmatpush1.bf16.msra.mxu0 %v2563
    %3736 = vmatprep.subr.bf16.mxu0 %v2596
    %3737 = vmatpush1.bf16.msra.mxu0 %v2595
    %3738 = vmatprep.subr.bf16.mxu0 %v2628
    %3739 = vmatpush1.bf16.msra.mxu0 %v2627
    %3740 = vmatprep.subr.bf16.mxu0 %v2660
    %3741 = vmatpush1.bf16.msra.mxu0 %v2659
    %3742 = vmatprep.mubr.bf16.mxu0 %v103
    %3743 = vmatmul.mubr.bf16.gmra.mrb[0].mxu0 %v102
    %v3744 = vpop.f32.mrb[0].mxu0
    %v3745 = vadd.f32 0.0, %v3744
    %v3746 = vpop.f32.mrb[0].mxu0
    %v3747 = vadd.f32 0.0, %v3746
    %v3748 = vpop.f32.mrb[0].mxu0
    %v3749 = vpop.f32.mrb[0].mxu0
    %3750 = vdwg.mxu0
    %3751 = vmatprep.subr.bf16.mxu0 %v2182
    %3752 = vmatpush1.bf16.msra.mxu0 %v2181
    %3753 = vmatprep.subr.bf16.mxu0 %v2214
    %3754 = vmatpush1.bf16.msra.mxu0 %v2213
    %3755 = vmatprep.subr.bf16.mxu0 %v2246
    %3756 = vmatpush1.bf16.msra.mxu0 %v2245
    %3757 = vmatprep.subr.bf16.mxu0 %v2278
    %3758 = vmatpush1.bf16.msra.mxu0 %v2277
    %3759 = vmatprep.subr.bf16.mxu0 %v2310
    %3760 = vmatpush1.bf16.msra.mxu0 %v2309
    %3761 = vmatprep.subr.bf16.mxu0 %v2342
    %3762 = vmatpush1.bf16.msra.mxu0 %v2341
    %3763 = vmatprep.subr.bf16.mxu0 %v2374
    %3764 = vmatpush1.bf16.msra.mxu0 %v2373
    %3765 = vmatprep.subr.bf16.mxu0 %v2406
    %3766 = vmatpush1.bf16.msra.mxu0 %v2405
    %3767 = vmatprep.subr.bf16.mxu0 %v2438
    %3768 = vmatpush1.bf16.msra.mxu0 %v2437
    %3769 = vmatprep.subr.bf16.mxu0 %v2470
    %3770 = vmatpush1.bf16.msra.mxu0 %v2469
    %3771 = vmatprep.subr.bf16.mxu0 %v2502
    %3772 = vmatpush1.bf16.msra.mxu0 %v2501
    %3773 = vmatprep.subr.bf16.mxu0 %v2534
    %3774 = vmatpush1.bf16.msra.mxu0 %v2533
    %3775 = vmatprep.subr.bf16.mxu0 %v2566
    %3776 = vmatpush1.bf16.msra.mxu0 %v2565
    %3777 = vmatprep.subr.bf16.mxu0 %v2598
    %3778 = vmatpush1.bf16.msra.mxu0 %v2597
    %3779 = vmatprep.subr.bf16.mxu0 %v2630
    %3780 = vmatpush1.bf16.msra.mxu0 %v2629
    %3781 = vmatprep.subr.bf16.mxu0 %v2662
    %3782 = vmatpush1.bf16.msra.mxu0 %v2661
    %3783 = vmatprep.mubr.bf16.mxu0 %v103
    %3784 = vmatmul.mubr.bf16.gmra.mrb[0].mxu0 %v102
    %v3785 = vpop.f32.mrb[0].mxu0
    %v3786 = vadd.f32 0.0, %v3785
    %v3787 = vpop.f32.mrb[0].mxu0
    %v3788 = vadd.f32 0.0, %v3787
    %v3789 = vpop.f32.mrb[0].mxu0
    %v3790 = vpop.f32.mrb[0].mxu0
    %3791 = vdwg.mxu0
    %3792 = vmatprep.subr.bf16.mxu0 %v2184
    %3793 = vmatpush1.bf16.msra.mxu0 %v2183
    %3794 = vmatprep.subr.bf16.mxu0 %v2216
    %3795 = vmatpush1.bf16.msra.mxu0 %v2215
    %3796 = vmatprep.subr.bf16.mxu0 %v2248
    %3797 = vmatpush1.bf16.msra.mxu0 %v2247
    %3798 = vmatprep.subr.bf16.mxu0 %v2280
    %3799 = vmatpush1.bf16.msra.mxu0 %v2279
    %3800 = vmatprep.subr.bf16.mxu0 %v2312
    %3801 = vmatpush1.bf16.msra.mxu0 %v2311
    %3802 = vmatprep.subr.bf16.mxu0 %v2344
    %3803 = vmatpush1.bf16.msra.mxu0 %v2343
    %3804 = vmatprep.subr.bf16.mxu0 %v2376
    %3805 = vmatpush1.bf16.msra.mxu0 %v2375
    %3806 = vmatprep.subr.bf16.mxu0 %v2408
    %3807 = vmatpush1.bf16.msra.mxu0 %v2407
    %3808 = vmatprep.subr.bf16.mxu0 %v2440
    %3809 = vmatpush1.bf16.msra.mxu0 %v2439
    %3810 = vmatprep.subr.bf16.mxu0 %v2472
    %3811 = vmatpush1.bf16.msra.mxu0 %v2471
    %3812 = vmatprep.subr.bf16.mxu0 %v2504
    %3813 = vmatpush1.bf16.msra.mxu0 %v2503
    %3814 = vmatprep.subr.bf16.mxu0 %v2536
    %3815 = vmatpush1.bf16.msra.mxu0 %v2535
    %3816 = vmatprep.subr.bf16.mxu0 %v2568
    %3817 = vmatpush1.bf16.msra.mxu0 %v2567
    %3818 = vmatprep.subr.bf16.mxu0 %v2600
    %3819 = vmatpush1.bf16.msra.mxu0 %v2599
    %3820 = vmatprep.subr.bf16.mxu0 %v2632
    %3821 = vmatpush1.bf16.msra.mxu0 %v2631
    %3822 = vmatprep.subr.bf16.mxu0 %v2664
    %3823 = vmatpush1.bf16.msra.mxu0 %v2663
    %3824 = vmatprep.mubr.bf16.mxu0 %v103
    %3825 = vmatmul.mubr.bf16.gmra.mrb[0].mxu0 %v102
    %v3826 = vpop.f32.mrb[0].mxu0
    %v3827 = vadd.f32 0.0, %v3826
    %v3828 = vpop.f32.mrb[0].mxu0
    %v3829 = vadd.f32 0.0, %v3828
    %v3830 = vpop.f32.mrb[0].mxu0
    %v3831 = vpop.f32.mrb[0].mxu0
    %3832 = vdwg.mxu0
    %3834 = vset.pattern.permute.xlu0 0
    %3835 = vperm.xlu0 %3834, %v104
    %v3836 = vpop.permute.xlu0 %3835
    %v3838 = vmul.f32 %v3836, %v3212
    %v3839 = vmul.f32 %v3836, %v3214
    %v3840 = vmul.f32 %v3836, %v3253
    %v3841 = vmul.f32 %v3836, %v3255
    %v3842 = vmul.f32 %v3836, %v3294
    %v3843 = vmul.f32 %v3836, %v3296
    %v3844 = vmul.f32 %v3836, %v3335
    %v3845 = vmul.f32 %v3836, %v3337
    %v3846 = vmul.f32 %v3836, %v3376
    %v3847 = vmul.f32 %v3836, %v3378
    %v3848 = vmul.f32 %v3836, %v3417
    %v3849 = vmul.f32 %v3836, %v3419
    %v3850 = vmul.f32 %v3836, %v3458
    %v3851 = vmul.f32 %v3836, %v3460
    %v3852 = vmul.f32 %v3836, %v3499
    %v3853 = vmul.f32 %v3836, %v3501
    %v3854 = vmul.f32 %v3836, %v3540
    %v3855 = vmul.f32 %v3836, %v3542
    %v3856 = vmul.f32 %v3836, %v3581
    %v3857 = vmul.f32 %v3836, %v3583
    %v3858 = vmul.f32 %v3836, %v3622
    %v3859 = vmul.f32 %v3836, %v3624
    %v3860 = vmul.f32 %v3836, %v3663
    %v3861 = vmul.f32 %v3836, %v3665
    %v3862 = vmul.f32 %v3836, %v3704
    %v3863 = vmul.f32 %v3836, %v3706
    %v3864 = vmul.f32 %v3836, %v3745
    %v3865 = vmul.f32 %v3836, %v3747
    %v3866 = vmul.f32 %v3836, %v3786
    %v3867 = vmul.f32 %v3836, %v3788
    %v3868 = vmul.f32 %v3836, %v3827
    %v3869 = vmul.f32 %v3836, %v3829
    %v3870 = vld [vmem:[#allocation9] sm:$0xff]
    %v3871 = vld [vmem:[#allocation9 + $0x8] sm:$0xff]
    %v3872 = vld [vmem:[#allocation9 + $0x10] sm:$0xff]
    %v3873 = vld [vmem:[#allocation9 + $0x18] sm:$0xff]
    %v3878 = vlaneseq
    %v3879 = vshrl.u32 %v3878, 7
    %v3880 = vsub.s32 0, %v3879
    %v3881 = vrot.slane %v3870, %v3880
    %v3882 = vlaneseq
    %v3883 = vshrl.u32 %v3882, 7
    %v3884 = vsub.s32 1, %v3883
    %v3885 = vrot.slane %v3870, %v3884
    %v3886 = vlaneseq
    %v3887 = vshrl.u32 %v3886, 7
    %v3888 = vsub.s32 2, %v3887
    %v3889 = vrot.slane %v3870, %v3888
    %v3890 = vlaneseq
    %v3891 = vshrl.u32 %v3890, 7
    %v3892 = vsub.s32 3, %v3891
    %v3893 = vrot.slane %v3870, %v3892
    %v3894 = vlaneseq
    %v3895 = vshrl.u32 %v3894, 7
    %v3896 = vsub.s32 4, %v3895
    %v3897 = vrot.slane %v3870, %v3896
    %v3898 = vlaneseq
    %v3899 = vshrl.u32 %v3898, 7
    %v3900 = vsub.s32 5, %v3899
    %v3901 = vrot.slane %v3870, %v3900
    %v3902 = vlaneseq
    %v3903 = vshrl.u32 %v3902, 7
    %v3904 = vsub.s32 6, %v3903
    %v3905 = vrot.slane %v3870, %v3904
    %v3906 = vlaneseq
    %v3907 = vshrl.u32 %v3906, 7
    %v3908 = vsub.s32 7, %v3907
    %v3909 = vrot.slane %v3870, %v3908
    %v3910 = vlaneseq
    %v3911 = vshrl.u32 %v3910, 7
    %v3912 = vsub.s32 0, %v3911
    %v3913 = vrot.slane %v3871, %v3912
    %v3914 = vlaneseq
    %v3915 = vshrl.u32 %v3914, 7
    %v3916 = vsub.s32 1, %v3915
    %v3917 = vrot.slane %v3871, %v3916
    %v3918 = vlaneseq
    %v3919 = vshrl.u32 %v3918, 7
    %v3920 = vsub.s32 2, %v3919
    %v3921 = vrot.slane %v3871, %v3920
    %v3922 = vlaneseq
    %v3923 = vshrl.u32 %v3922, 7
    %v3924 = vsub.s32 3, %v3923
    %v3925 = vrot.slane %v3871, %v3924
    %v3926 = vlaneseq
    %v3927 = vshrl.u32 %v3926, 7
    %v3928 = vsub.s32 4, %v3927
    %v3929 = vrot.slane %v3871, %v3928
    %v3930 = vlaneseq
    %v3931 = vshrl.u32 %v3930, 7
    %v3932 = vsub.s32 5, %v3931
    %v3933 = vrot.slane %v3871, %v3932
    %v3934 = vlaneseq
    %v3935 = vshrl.u32 %v3934, 7
    %v3936 = vsub.s32 6, %v3935
    %v3937 = vrot.slane %v3871, %v3936
    %v3938 = vlaneseq
    %v3939 = vshrl.u32 %v3938, 7
    %v3940 = vsub.s32 7, %v3939
    %v3941 = vrot.slane %v3871, %v3940
    %v3942 = vlaneseq
    %v3943 = vshrl.u32 %v3942, 7
    %v3944 = vsub.s32 0, %v3943
    %v3945 = vrot.slane %v3872, %v3944
    %v3946 = vlaneseq
    %v3947 = vshrl.u32 %v3946, 7
    %v3948 = vsub.s32 1, %v3947
    %v3949 = vrot.slane %v3872, %v3948
    %v3950 = vlaneseq
    %v3951 = vshrl.u32 %v3950, 7
    %v3952 = vsub.s32 2, %v3951
    %v3953 = vrot.slane %v3872, %v3952
    %v3954 = vlaneseq
    %v3955 = vshrl.u32 %v3954, 7
    %v3956 = vsub.s32 3, %v3955
    %v3957 = vrot.slane %v3872, %v3956
    %v3958 = vlaneseq
    %v3959 = vshrl.u32 %v3958, 7
    %v3960 = vsub.s32 4, %v3959
    %v3961 = vrot.slane %v3872, %v3960
    %v3962 = vlaneseq
    %v3963 = vshrl.u32 %v3962, 7
    %v3964 = vsub.s32 5, %v3963
    %v3965 = vrot.slane %v3872, %v3964
    %v3966 = vlaneseq
    %v3967 = vshrl.u32 %v3966, 7
    %v3968 = vsub.s32 6, %v3967
    %v3969 = vrot.slane %v3872, %v3968
    %v3970 = vlaneseq
    %v3971 = vshrl.u32 %v3970, 7
    %v3972 = vsub.s32 7, %v3971
    %v3973 = vrot.slane %v3872, %v3972
    %v3974 = vlaneseq
    %v3975 = vshrl.u32 %v3974, 7
    %v3976 = vsub.s32 0, %v3975
    %v3977 = vrot.slane %v3873, %v3976
    %v3978 = vlaneseq
    %v3979 = vshrl.u32 %v3978, 7
    %v3980 = vsub.s32 1, %v3979
    %v3981 = vrot.slane %v3873, %v3980
    %v3982 = vlaneseq
    %v3983 = vshrl.u32 %v3982, 7
    %v3984 = vsub.s32 2, %v3983
    %v3985 = vrot.slane %v3873, %v3984
    %v3986 = vlaneseq
    %v3987 = vshrl.u32 %v3986, 7
    %v3988 = vsub.s32 3, %v3987
    %v3989 = vrot.slane %v3873, %v3988
    %v3990 = vlaneseq
    %v3991 = vshrl.u32 %v3990, 7
    %v3992 = vsub.s32 4, %v3991
    %v3993 = vrot.slane %v3873, %v3992
    %v3994 = vlaneseq
    %v3995 = vshrl.u32 %v3994, 7
    %v3996 = vsub.s32 5, %v3995
    %v3997 = vrot.slane %v3873, %v3996
    %v3998 = vlaneseq
    %v3999 = vshrl.u32 %v3998, 7
    %v4000 = vsub.s32 6, %v3999
    %v4001 = vrot.slane %v3873, %v4000
    %v4002 = vlaneseq
    %v4003 = vshrl.u32 %v4002, 7
    %v4004 = vsub.s32 7, %v4003
    %v4005 = vrot.slane %v3873, %v4004
    %v4038 = vadd.f32 %v3838, %v3881
    %v4039 = vadd.f32 %v3839, %v3885
    %v4040 = vadd.f32 %v3840, %v3889
    %v4041 = vadd.f32 %v3841, %v3893
    %v4042 = vadd.f32 %v3842, %v3897
    %v4043 = vadd.f32 %v3843, %v3901
    %v4044 = vadd.f32 %v3844, %v3905
    %v4045 = vadd.f32 %v3845, %v3909
    %v4046 = vadd.f32 %v3846, %v3913
    %v4047 = vadd.f32 %v3847, %v3917
    %v4048 = vadd.f32 %v3848, %v3921
    %v4049 = vadd.f32 %v3849, %v3925
    %v4050 = vadd.f32 %v3850, %v3929
    %v4051 = vadd.f32 %v3851, %v3933
    %v4052 = vadd.f32 %v3852, %v3937
    %v4053 = vadd.f32 %v3853, %v3941
    %v4054 = vadd.f32 %v3854, %v3945
    %v4055 = vadd.f32 %v3855, %v3949
    %v4056 = vadd.f32 %v3856, %v3953
    %v4057 = vadd.f32 %v3857, %v3957
    %v4058 = vadd.f32 %v3858, %v3961
    %v4059 = vadd.f32 %v3859, %v3965
    %v4060 = vadd.f32 %v3860, %v3969
    %v4061 = vadd.f32 %v3861, %v3973
    %v4062 = vadd.f32 %v3862, %v3977
    %v4063 = vadd.f32 %v3863, %v3981
    %v4064 = vadd.f32 %v3864, %v3985
    %v4065 = vadd.f32 %v3865, %v3989
    %v4066 = vadd.f32 %v3866, %v3993
    %v4067 = vadd.f32 %v3867, %v3997
    %v4068 = vadd.f32 %v3868, %v4001
    %v4069 = vadd.f32 %v3869, %v4005
    %v4070 = vmax.f32 %v4038, 0.0
    %v4071 = vmax.f32 %v4039, 0.0
    %v4072 = vmax.f32 %v4040, 0.0
    %v4073 = vmax.f32 %v4041, 0.0
    %v4074 = vmax.f32 %v4042, 0.0
    %v4075 = vmax.f32 %v4043, 0.0
    %v4076 = vmax.f32 %v4044, 0.0
    %v4077 = vmax.f32 %v4045, 0.0
    %v4078 = vmax.f32 %v4046, 0.0
    %v4079 = vmax.f32 %v4047, 0.0
    %v4080 = vmax.f32 %v4048, 0.0
    %v4081 = vmax.f32 %v4049, 0.0
    %v4082 = vmax.f32 %v4050, 0.0
    %v4083 = vmax.f32 %v4051, 0.0
    %v4084 = vmax.f32 %v4052, 0.0
    %v4085 = vmax.f32 %v4053, 0.0
    %v4086 = vmax.f32 %v4054, 0.0
    %v4087 = vmax.f32 %v4055, 0.0
    %v4088 = vmax.f32 %v4056, 0.0
    %v4089 = vmax.f32 %v4057, 0.0
    %v4090 = vmax.f32 %v4058, 0.0
    %v4091 = vmax.f32 %v4059, 0.0
    %v4092 = vmax.f32 %v4060, 0.0
    %v4093 = vmax.f32 %v4061, 0.0
    %v4094 = vmax.f32 %v4062, 0.0
    %v4095 = vmax.f32 %v4063, 0.0
    %v4096 = vmax.f32 %v4064, 0.0
    %v4097 = vmax.f32 %v4065, 0.0
    %v4098 = vmax.f32 %v4066, 0.0
    %v4099 = vmax.f32 %v4067, 0.0
    %v4100 = vmax.f32 %v4068, 0.0
    %v4101 = vmax.f32 %v4069, 0.0
    %v4102 = vld [vmem:[#allocation3] sm:$0xff]
    %v4103 = vpack.c.bf16 %v4070, %v4070
    %v4104 = vpack.c.bf16 %v4071, %v4071
    %v4105 = vpack.c.bf16 %v4072, %v4072
    %v4106 = vpack.c.bf16 %v4073, %v4073
    %v4107 = vpack.c.bf16 %v4074, %v4074
    %v4108 = vpack.c.bf16 %v4075, %v4075
    %v4109 = vpack.c.bf16 %v4076, %v4076
    %v4110 = vpack.c.bf16 %v4077, %v4077
    %v4111 = vpack.c.bf16 %v4078, %v4078
    %v4112 = vpack.c.bf16 %v4079, %v4079
    %v4113 = vpack.c.bf16 %v4080, %v4080
    %v4114 = vpack.c.bf16 %v4081, %v4081
    %v4115 = vpack.c.bf16 %v4082, %v4082
    %v4116 = vpack.c.bf16 %v4083, %v4083
    %v4117 = vpack.c.bf16 %v4084, %v4084
    %v4118 = vpack.c.bf16 %v4085, %v4085
    %v4119 = vpack.c.bf16 %v4086, %v4086
    %v4120 = vpack.c.bf16 %v4087, %v4087
    %v4121 = vpack.c.bf16 %v4088, %v4088
    %v4122 = vpack.c.bf16 %v4089, %v4089
    %v4123 = vpack.c.bf16 %v4090, %v4090
    %v4124 = vpack.c.bf16 %v4091, %v4091
    %v4125 = vpack.c.bf16 %v4092, %v4092
    %v4126 = vpack.c.bf16 %v4093, %v4093
    %v4127 = vpack.c.bf16 %v4094, %v4094
    %v4128 = vpack.c.bf16 %v4095, %v4095
    %v4129 = vpack.c.bf16 %v4096, %v4096
    %v4130 = vpack.c.bf16 %v4097, %v4097
    %v4131 = vpack.c.bf16 %v4098, %v4098
    %v4132 = vpack.c.bf16 %v4099, %v4099
    %v4133 = vpack.c.bf16 %v4100, %v4100
    %v4134 = vpack.c.bf16 %v4101, %v4101
    %v4135 = vld [vmem:[#allocation10] sm:$0xf]
    %v4136 = vld [vmem:[#allocation10 + $0x4] sm:$0xf]
    %v4137 = vld [vmem:[#allocation10 + $0x8] sm:$0xf]
    %v4138 = vld [vmem:[#allocation10 + $0xc] sm:$0xf]
    %v4139 = vld [vmem:[#allocation10 + $0x10] sm:$0xf]
    %v4140 = vld [vmem:[#allocation10 + $0x14] sm:$0xf]
    %v4141 = vld [vmem:[#allocation10 + $0x18] sm:$0xf]
    %v4142 = vld [vmem:[#allocation10 + $0x1c] sm:$0xf]
    %v4143 = vld [vmem:[#allocation10 + $0x20] sm:$0xf]
    %v4144 = vld [vmem:[#allocation10 + $0x24] sm:$0xf]
    %v4145 = vld [vmem:[#allocation10 + $0x28] sm:$0xf]
    %v4146 = vld [vmem:[#allocation10 + $0x2c] sm:$0xf]
    %v4147 = vld [vmem:[#allocation10 + $0x30] sm:$0xf]
    %v4148 = vld [vmem:[#allocation10 + $0x34] sm:$0xf]
    %v4149 = vld [vmem:[#allocation10 + $0x38] sm:$0xf]
    %v4150 = vld [vmem:[#allocation10 + $0x3c] sm:$0xf]
    %v4151 = vld [vmem:[#allocation10 + $0x40] sm:$0xf]
    %v4152 = vld [vmem:[#allocation10 + $0x44] sm:$0xf]
    %v4153 = vld [vmem:[#allocation10 + $0x48] sm:$0xf]
    %v4154 = vld [vmem:[#allocation10 + $0x4c] sm:$0xf]
    %v4155 = vld [vmem:[#allocation10 + $0x50] sm:$0xf]
    %v4156 = vld [vmem:[#allocation10 + $0x54] sm:$0xf]
    %v4157 = vld [vmem:[#allocation10 + $0x58] sm:$0xf]
    %v4158 = vld [vmem:[#allocation10 + $0x5c] sm:$0xf]
    %v4159 = vld [vmem:[#allocation10 + $0x60] sm:$0xf]
    %v4160 = vld [vmem:[#allocation10 + $0x64] sm:$0xf]
    %v4161 = vld [vmem:[#allocation10 + $0x68] sm:$0xf]
    %v4162 = vld [vmem:[#allocation10 + $0x6c] sm:$0xf]
    %v4163 = vld [vmem:[#allocation10 + $0x70] sm:$0xf]
    %v4164 = vld [vmem:[#allocation10 + $0x74] sm:$0xf]
    %v4165 = vld [vmem:[#allocation10 + $0x78] sm:$0xf]
    %v4166 = vld [vmem:[#allocation10 + $0x7c] sm:$0xf]
    %v4167 = vld [vmem:[#allocation10 + $0x80] sm:$0xf]
    %v4168 = vld [vmem:[#allocation10 + $0x84] sm:$0xf]
    %v4169 = vld [vmem:[#allocation10 + $0x88] sm:$0xf]
    %v4170 = vld [vmem:[#allocation10 + $0x8c] sm:$0xf]
    %v4171 = vld [vmem:[#allocation10 + $0x90] sm:$0xf]
    %v4172 = vld [vmem:[#allocation10 + $0x94] sm:$0xf]
    %v4173 = vld [vmem:[#allocation10 + $0x98] sm:$0xf]
    %v4174 = vld [vmem:[#allocation10 + $0x9c] sm:$0xf]
    %v4175 = vld [vmem:[#allocation10 + $0xa0] sm:$0xf]
    %v4176 = vld [vmem:[#allocation10 + $0xa4] sm:$0xf]
    %v4177 = vld [vmem:[#allocation10 + $0xa8] sm:$0xf]
    %v4178 = vld [vmem:[#allocation10 + $0xac] sm:$0xf]
    %v4179 = vld [vmem:[#allocation10 + $0xb0] sm:$0xf]
    %v4180 = vld [vmem:[#allocation10 + $0xb4] sm:$0xf]
    %v4181 = vld [vmem:[#allocation10 + $0xb8] sm:$0xf]
    %v4182 = vld [vmem:[#allocation10 + $0xbc] sm:$0xf]
    %v4183 = vld [vmem:[#allocation10 + $0xc0] sm:$0xf]
    %v4184 = vld [vmem:[#allocation10 + $0xc4] sm:$0xf]
    %v4185 = vld [vmem:[#allocation10 + $0xc8] sm:$0xf]
    %v4186 = vld [vmem:[#allocation10 + $0xcc] sm:$0xf]
    %v4187 = vld [vmem:[#allocation10 + $0xd0] sm:$0xf]
    %v4188 = vld [vmem:[#allocation10 + $0xd4] sm:$0xf]
    %v4189 = vld [vmem:[#allocation10 + $0xd8] sm:$0xf]
    %v4190 = vld [vmem:[#allocation10 + $0xdc] sm:$0xf]
    %v4191 = vld [vmem:[#allocation10 + $0xe0] sm:$0xf]
    %v4192 = vld [vmem:[#allocation10 + $0xe4] sm:$0xf]
    %v4193 = vld [vmem:[#allocation10 + $0xe8] sm:$0xf]
    %v4194 = vld [vmem:[#allocation10 + $0xec] sm:$0xf]
    %v4195 = vld [vmem:[#allocation10 + $0xf0] sm:$0xf]
    %v4196 = vld [vmem:[#allocation10 + $0xf4] sm:$0xf]
    %v4197 = vld [vmem:[#allocation10 + $0xf8] sm:$0xf]
    %v4198 = vld [vmem:[#allocation10 + $0xfc] sm:$0xf]
    %v4199 = vld [vmem:[#allocation10 + $0x100] sm:$0xf]
    %v4200 = vld [vmem:[#allocation10 + $0x104] sm:$0xf]
    %v4201 = vld [vmem:[#allocation10 + $0x108] sm:$0xf]
    %v4202 = vld [vmem:[#allocation10 + $0x10c] sm:$0xf]
    %v4203 = vld [vmem:[#allocation10 + $0x110] sm:$0xf]
    %v4204 = vld [vmem:[#allocation10 + $0x114] sm:$0xf]
    %v4205 = vld [vmem:[#allocation10 + $0x118] sm:$0xf]
    %v4206 = vld [vmem:[#allocation10 + $0x11c] sm:$0xf]
    %v4207 = vld [vmem:[#allocation10 + $0x120] sm:$0xf]
    %v4208 = vld [vmem:[#allocation10 + $0x124] sm:$0xf]
    %v4209 = vld [vmem:[#allocation10 + $0x128] sm:$0xf]
    %v4210 = vld [vmem:[#allocation10 + $0x12c] sm:$0xf]
    %v4211 = vld [vmem:[#allocation10 + $0x130] sm:$0xf]
    %v4212 = vld [vmem:[#allocation10 + $0x134] sm:$0xf]
    %v4213 = vld [vmem:[#allocation10 + $0x138] sm:$0xf]
    %v4214 = vld [vmem:[#allocation10 + $0x13c] sm:$0xf]
    %v4215 = vld [vmem:[#allocation10 + $0x140] sm:$0xf]
    %v4216 = vld [vmem:[#allocation10 + $0x144] sm:$0xf]
    %v4217 = vld [vmem:[#allocation10 + $0x148] sm:$0xf]
    %v4218 = vld [vmem:[#allocation10 + $0x14c] sm:$0xf]
    %v4219 = vld [vmem:[#allocation10 + $0x150] sm:$0xf]
    %v4220 = vld [vmem:[#allocation10 + $0x154] sm:$0xf]
    %v4221 = vld [vmem:[#allocation10 + $0x158] sm:$0xf]
    %v4222 = vld [vmem:[#allocation10 + $0x15c] sm:$0xf]
    %v4223 = vld [vmem:[#allocation10 + $0x160] sm:$0xf]
    %v4224 = vld [vmem:[#allocation10 + $0x164] sm:$0xf]
    %v4225 = vld [vmem:[#allocation10 + $0x168] sm:$0xf]
    %v4226 = vld [vmem:[#allocation10 + $0x16c] sm:$0xf]
    %v4227 = vld [vmem:[#allocation10 + $0x170] sm:$0xf]
    %v4228 = vld [vmem:[#allocation10 + $0x174] sm:$0xf]
    %v4229 = vld [vmem:[#allocation10 + $0x178] sm:$0xf]
    %v4230 = vld [vmem:[#allocation10 + $0x17c] sm:$0xf]
    %v4231 = vld [vmem:[#allocation10 + $0x180] sm:$0xf]
    %v4232 = vld [vmem:[#allocation10 + $0x184] sm:$0xf]
    %v4233 = vld [vmem:[#allocation10 + $0x188] sm:$0xf]
    %v4234 = vld [vmem:[#allocation10 + $0x18c] sm:$0xf]
    %v4235 = vld [vmem:[#allocation10 + $0x190] sm:$0xf]
    %v4236 = vld [vmem:[#allocation10 + $0x194] sm:$0xf]
    %v4237 = vld [vmem:[#allocation10 + $0x198] sm:$0xf]
    %v4238 = vld [vmem:[#allocation10 + $0x19c] sm:$0xf]
    %v4239 = vld [vmem:[#allocation10 + $0x1a0] sm:$0xf]
    %v4240 = vld [vmem:[#allocation10 + $0x1a4] sm:$0xf]
    %v4241 = vld [vmem:[#allocation10 + $0x1a8] sm:$0xf]
    %v4242 = vld [vmem:[#allocation10 + $0x1ac] sm:$0xf]
    %v4243 = vld [vmem:[#allocation10 + $0x1b0] sm:$0xf]
    %v4244 = vld [vmem:[#allocation10 + $0x1b4] sm:$0xf]
    %v4245 = vld [vmem:[#allocation10 + $0x1b8] sm:$0xf]
    %v4246 = vld [vmem:[#allocation10 + $0x1bc] sm:$0xf]
    %v4247 = vld [vmem:[#allocation10 + $0x1c0] sm:$0xf]
    %v4248 = vld [vmem:[#allocation10 + $0x1c4] sm:$0xf]
    %v4249 = vld [vmem:[#allocation10 + $0x1c8] sm:$0xf]
    %v4250 = vld [vmem:[#allocation10 + $0x1cc] sm:$0xf]
    %v4251 = vld [vmem:[#allocation10 + $0x1d0] sm:$0xf]
    %v4252 = vld [vmem:[#allocation10 + $0x1d4] sm:$0xf]
    %v4253 = vld [vmem:[#allocation10 + $0x1d8] sm:$0xf]
    %v4254 = vld [vmem:[#allocation10 + $0x1dc] sm:$0xf]
    %v4255 = vld [vmem:[#allocation10 + $0x1e0] sm:$0xf]
    %v4256 = vld [vmem:[#allocation10 + $0x1e4] sm:$0xf]
    %v4257 = vld [vmem:[#allocation10 + $0x1e8] sm:$0xf]
    %v4258 = vld [vmem:[#allocation10 + $0x1ec] sm:$0xf]
    %v4259 = vld [vmem:[#allocation10 + $0x1f0] sm:$0xf]
    %v4260 = vld [vmem:[#allocation10 + $0x1f4] sm:$0xf]
    %v4261 = vld [vmem:[#allocation10 + $0x1f8] sm:$0xf]
    %v4262 = vld [vmem:[#allocation10 + $0x1fc] sm:$0xf]
    %v4263 = vld [vmem:[#allocation10 + $0x200] sm:$0xf]
    %v4264 = vld [vmem:[#allocation10 + $0x204] sm:$0xf]
    %v4265 = vld [vmem:[#allocation10 + $0x208] sm:$0xf]
    %v4266 = vld [vmem:[#allocation10 + $0x20c] sm:$0xf]
    %v4267 = vld [vmem:[#allocation10 + $0x210] sm:$0xf]
    %v4268 = vld [vmem:[#allocation10 + $0x214] sm:$0xf]
    %v4269 = vld [vmem:[#allocation10 + $0x218] sm:$0xf]
    %v4270 = vld [vmem:[#allocation10 + $0x21c] sm:$0xf]
    %v4271 = vld [vmem:[#allocation10 + $0x220] sm:$0xf]
    %v4272 = vld [vmem:[#allocation10 + $0x224] sm:$0xf]
    %v4273 = vld [vmem:[#allocation10 + $0x228] sm:$0xf]
    %v4274 = vld [vmem:[#allocation10 + $0x22c] sm:$0xf]
    %v4275 = vld [vmem:[#allocation10 + $0x230] sm:$0xf]
    %v4276 = vld [vmem:[#allocation10 + $0x234] sm:$0xf]
    %v4277 = vld [vmem:[#allocation10 + $0x238] sm:$0xf]
    %v4278 = vld [vmem:[#allocation10 + $0x23c] sm:$0xf]
    %v4279 = vld [vmem:[#allocation10 + $0x240] sm:$0xf]
    %v4280 = vld [vmem:[#allocation10 + $0x244] sm:$0xf]
    %v4281 = vld [vmem:[#allocation10 + $0x248] sm:$0xf]
    %v4282 = vld [vmem:[#allocation10 + $0x24c] sm:$0xf]
    %v4283 = vld [vmem:[#allocation10 + $0x250] sm:$0xf]
    %v4284 = vld [vmem:[#allocation10 + $0x254] sm:$0xf]
    %v4285 = vld [vmem:[#allocation10 + $0x258] sm:$0xf]
    %v4286 = vld [vmem:[#allocation10 + $0x25c] sm:$0xf]
    %v4287 = vld [vmem:[#allocation10 + $0x260] sm:$0xf]
    %v4288 = vld [vmem:[#allocation10 + $0x264] sm:$0xf]
    %v4289 = vld [vmem:[#allocation10 + $0x268] sm:$0xf]
    %v4290 = vld [vmem:[#allocation10 + $0x26c] sm:$0xf]
    %v4291 = vld [vmem:[#allocation10 + $0x270] sm:$0xf]
    %v4292 = vld [vmem:[#allocation10 + $0x274] sm:$0xf]
    %v4293 = vld [vmem:[#allocation10 + $0x278] sm:$0xf]
    %v4294 = vld [vmem:[#allocation10 + $0x27c] sm:$0xf]
    %v4295 = vld [vmem:[#allocation10 + $0x280] sm:$0xf]
    %v4296 = vld [vmem:[#allocation10 + $0x284] sm:$0xf]
    %v4297 = vld [vmem:[#allocation10 + $0x288] sm:$0xf]
    %v4298 = vld [vmem:[#allocation10 + $0x28c] sm:$0xf]
    %v4299 = vld [vmem:[#allocation10 + $0x290] sm:$0xf]
    %v4300 = vld [vmem:[#allocation10 + $0x294] sm:$0xf]
    %v4301 = vld [vmem:[#allocation10 + $0x298] sm:$0xf]
    %v4302 = vld [vmem:[#allocation10 + $0x29c] sm:$0xf]
    %v4303 = vld [vmem:[#allocation10 + $0x2a0] sm:$0xf]
    %v4304 = vld [vmem:[#allocation10 + $0x2a4] sm:$0xf]
    %v4305 = vld [vmem:[#allocation10 + $0x2a8] sm:$0xf]
    %v4306 = vld [vmem:[#allocation10 + $0x2ac] sm:$0xf]
    %v4307 = vld [vmem:[#allocation10 + $0x2b0] sm:$0xf]
    %v4308 = vld [vmem:[#allocation10 + $0x2b4] sm:$0xf]
    %v4309 = vld [vmem:[#allocation10 + $0x2b8] sm:$0xf]
    %v4310 = vld [vmem:[#allocation10 + $0x2bc] sm:$0xf]
    %v4311 = vld [vmem:[#allocation10 + $0x2c0] sm:$0xf]
    %v4312 = vld [vmem:[#allocation10 + $0x2c4] sm:$0xf]
    %v4313 = vld [vmem:[#allocation10 + $0x2c8] sm:$0xf]
    %v4314 = vld [vmem:[#allocation10 + $0x2cc] sm:$0xf]
    %v4315 = vld [vmem:[#allocation10 + $0x2d0] sm:$0xf]
    %v4316 = vld [vmem:[#allocation10 + $0x2d4] sm:$0xf]
    %v4317 = vld [vmem:[#allocation10 + $0x2d8] sm:$0xf]
    %v4318 = vld [vmem:[#allocation10 + $0x2dc] sm:$0xf]
    %v4319 = vld [vmem:[#allocation10 + $0x2e0] sm:$0xf]
    %v4320 = vld [vmem:[#allocation10 + $0x2e4] sm:$0xf]
    %v4321 = vld [vmem:[#allocation10 + $0x2e8] sm:$0xf]
    %v4322 = vld [vmem:[#allocation10 + $0x2ec] sm:$0xf]
    %v4323 = vld [vmem:[#allocation10 + $0x2f0] sm:$0xf]
    %v4324 = vld [vmem:[#allocation10 + $0x2f4] sm:$0xf]
    %v4325 = vld [vmem:[#allocation10 + $0x2f8] sm:$0xf]
    %v4326 = vld [vmem:[#allocation10 + $0x2fc] sm:$0xf]
    %v4327 = vld [vmem:[#allocation10 + $0x300] sm:$0xf]
    %v4328 = vld [vmem:[#allocation10 + $0x304] sm:$0xf]
    %v4329 = vld [vmem:[#allocation10 + $0x308] sm:$0xf]
    %v4330 = vld [vmem:[#allocation10 + $0x30c] sm:$0xf]
    %v4331 = vld [vmem:[#allocation10 + $0x310] sm:$0xf]
    %v4332 = vld [vmem:[#allocation10 + $0x314] sm:$0xf]
    %v4333 = vld [vmem:[#allocation10 + $0x318] sm:$0xf]
    %v4334 = vld [vmem:[#allocation10 + $0x31c] sm:$0xf]
    %v4335 = vld [vmem:[#allocation10 + $0x320] sm:$0xf]
    %v4336 = vld [vmem:[#allocation10 + $0x324] sm:$0xf]
    %v4337 = vld [vmem:[#allocation10 + $0x328] sm:$0xf]
    %v4338 = vld [vmem:[#allocation10 + $0x32c] sm:$0xf]
    %v4339 = vld [vmem:[#allocation10 + $0x330] sm:$0xf]
    %v4340 = vld [vmem:[#allocation10 + $0x334] sm:$0xf]
    %v4341 = vld [vmem:[#allocation10 + $0x338] sm:$0xf]
    %v4342 = vld [vmem:[#allocation10 + $0x33c] sm:$0xf]
    %v4343 = vld [vmem:[#allocation10 + $0x340] sm:$0xf]
    %v4344 = vld [vmem:[#allocation10 + $0x344] sm:$0xf]
    %v4345 = vld [vmem:[#allocation10 + $0x348] sm:$0xf]
    %v4346 = vld [vmem:[#allocation10 + $0x34c] sm:$0xf]
    %v4347 = vld [vmem:[#allocation10 + $0x350] sm:$0xf]
    %v4348 = vld [vmem:[#allocation10 + $0x354] sm:$0xf]
    %v4349 = vld [vmem:[#allocation10 + $0x358] sm:$0xf]
    %v4350 = vld [vmem:[#allocation10 + $0x35c] sm:$0xf]
    %v4351 = vld [vmem:[#allocation10 + $0x360] sm:$0xf]
    %v4352 = vld [vmem:[#allocation10 + $0x364] sm:$0xf]
    %v4353 = vld [vmem:[#allocation10 + $0x368] sm:$0xf]
    %v4354 = vld [vmem:[#allocation10 + $0x36c] sm:$0xf]
    %v4355 = vld [vmem:[#allocation10 + $0x370] sm:$0xf]
    %v4356 = vld [vmem:[#allocation10 + $0x374] sm:$0xf]
    %v4357 = vld [vmem:[#allocation10 + $0x378] sm:$0xf]
    %v4358 = vld [vmem:[#allocation10 + $0x37c] sm:$0xf]
    %v4359 = vld [vmem:[#allocation10 + $0x380] sm:$0xf]
    %v4360 = vld [vmem:[#allocation10 + $0x384] sm:$0xf]
    %v4361 = vld [vmem:[#allocation10 + $0x388] sm:$0xf]
    %v4362 = vld [vmem:[#allocation10 + $0x38c] sm:$0xf]
    %v4363 = vld [vmem:[#allocation10 + $0x390] sm:$0xf]
    %v4364 = vld [vmem:[#allocation10 + $0x394] sm:$0xf]
    %v4365 = vld [vmem:[#allocation10 + $0x398] sm:$0xf]
    %v4366 = vld [vmem:[#allocation10 + $0x39c] sm:$0xf]
    %v4367 = vld [vmem:[#allocation10 + $0x3a0] sm:$0xf]
    %v4368 = vld [vmem:[#allocation10 + $0x3a4] sm:$0xf]
    %v4369 = vld [vmem:[#allocation10 + $0x3a8] sm:$0xf]
    %v4370 = vld [vmem:[#allocation10 + $0x3ac] sm:$0xf]
    %v4371 = vld [vmem:[#allocation10 + $0x3b0] sm:$0xf]
    %v4372 = vld [vmem:[#allocation10 + $0x3b4] sm:$0xf]
    %v4373 = vld [vmem:[#allocation10 + $0x3b8] sm:$0xf]
    %v4374 = vld [vmem:[#allocation10 + $0x3bc] sm:$0xf]
    %v4375 = vld [vmem:[#allocation10 + $0x3c0] sm:$0xf]
    %v4376 = vld [vmem:[#allocation10 + $0x3c4] sm:$0xf]
    %v4377 = vld [vmem:[#allocation10 + $0x3c8] sm:$0xf]
    %v4378 = vld [vmem:[#allocation10 + $0x3cc] sm:$0xf]
    %v4379 = vld [vmem:[#allocation10 + $0x3d0] sm:$0xf]
    %v4380 = vld [vmem:[#allocation10 + $0x3d4] sm:$0xf]
    %v4381 = vld [vmem:[#allocation10 + $0x3d8] sm:$0xf]
    %v4382 = vld [vmem:[#allocation10 + $0x3dc] sm:$0xf]
    %v4383 = vld [vmem:[#allocation10 + $0x3e0] sm:$0xf]
    %v4384 = vld [vmem:[#allocation10 + $0x3e4] sm:$0xf]
    %v4385 = vld [vmem:[#allocation10 + $0x3e8] sm:$0xf]
    %v4386 = vld [vmem:[#allocation10 + $0x3ec] sm:$0xf]
    %v4387 = vld [vmem:[#allocation10 + $0x3f0] sm:$0xf]
    %v4388 = vld [vmem:[#allocation10 + $0x3f4] sm:$0xf]
    %v4389 = vld [vmem:[#allocation10 + $0x3f8] sm:$0xf]
    %v4390 = vld [vmem:[#allocation10 + $0x3fc] sm:$0xf]
    %v4391 = vld [vmem:[#allocation10 + $0x400] sm:$0xf]
    %v4392 = vld [vmem:[#allocation10 + $0x404] sm:$0xf]
    %v4393 = vld [vmem:[#allocation10 + $0x408] sm:$0xf]
    %v4394 = vld [vmem:[#allocation10 + $0x40c] sm:$0xf]
    %v4395 = vld [vmem:[#allocation10 + $0x410] sm:$0xf]
    %v4396 = vld [vmem:[#allocation10 + $0x414] sm:$0xf]
    %v4397 = vld [vmem:[#allocation10 + $0x418] sm:$0xf]
    %v4398 = vld [vmem:[#allocation10 + $0x41c] sm:$0xf]
    %v4399 = vld [vmem:[#allocation10 + $0x420] sm:$0xf]
    %v4400 = vld [vmem:[#allocation10 + $0x424] sm:$0xf]
    %v4401 = vld [vmem:[#allocation10 + $0x428] sm:$0xf]
    %v4402 = vld [vmem:[#allocation10 + $0x42c] sm:$0xf]
    %v4403 = vld [vmem:[#allocation10 + $0x430] sm:$0xf]
    %v4404 = vld [vmem:[#allocation10 + $0x434] sm:$0xf]
    %v4405 = vld [vmem:[#allocation10 + $0x438] sm:$0xf]
    %v4406 = vld [vmem:[#allocation10 + $0x43c] sm:$0xf]
    %v4407 = vld [vmem:[#allocation10 + $0x440] sm:$0xf]
    %v4408 = vld [vmem:[#allocation10 + $0x444] sm:$0xf]
    %v4409 = vld [vmem:[#allocation10 + $0x448] sm:$0xf]
    %v4410 = vld [vmem:[#allocation10 + $0x44c] sm:$0xf]
    %v4411 = vld [vmem:[#allocation10 + $0x450] sm:$0xf]
    %v4412 = vld [vmem:[#allocation10 + $0x454] sm:$0xf]
    %v4413 = vld [vmem:[#allocation10 + $0x458] sm:$0xf]
    %v4414 = vld [vmem:[#allocation10 + $0x45c] sm:$0xf]
    %v4415 = vld [vmem:[#allocation10 + $0x460] sm:$0xf]
    %v4416 = vld [vmem:[#allocation10 + $0x464] sm:$0xf]
    %v4417 = vld [vmem:[#allocation10 + $0x468] sm:$0xf]
    %v4418 = vld [vmem:[#allocation10 + $0x46c] sm:$0xf]
    %v4419 = vld [vmem:[#allocation10 + $0x470] sm:$0xf]
    %v4420 = vld [vmem:[#allocation10 + $0x474] sm:$0xf]
    %v4421 = vld [vmem:[#allocation10 + $0x478] sm:$0xf]
    %v4422 = vld [vmem:[#allocation10 + $0x47c] sm:$0xf]
    %v4423 = vld [vmem:[#allocation10 + $0x480] sm:$0xf]
    %v4424 = vld [vmem:[#allocation10 + $0x484] sm:$0xf]
    %v4425 = vld [vmem:[#allocation10 + $0x488] sm:$0xf]
    %v4426 = vld [vmem:[#allocation10 + $0x48c] sm:$0xf]
    %v4427 = vld [vmem:[#allocation10 + $0x490] sm:$0xf]
    %v4428 = vld [vmem:[#allocation10 + $0x494] sm:$0xf]
    %v4429 = vld [vmem:[#allocation10 + $0x498] sm:$0xf]
    %v4430 = vld [vmem:[#allocation10 + $0x49c] sm:$0xf]
    %v4431 = vld [vmem:[#allocation10 + $0x4a0] sm:$0xf]
    %v4432 = vld [vmem:[#allocation10 + $0x4a4] sm:$0xf]
    %v4433 = vld [vmem:[#allocation10 + $0x4a8] sm:$0xf]
    %v4434 = vld [vmem:[#allocation10 + $0x4ac] sm:$0xf]
    %v4435 = vld [vmem:[#allocation10 + $0x4b0] sm:$0xf]
    %v4436 = vld [vmem:[#allocation10 + $0x4b4] sm:$0xf]
    %v4437 = vld [vmem:[#allocation10 + $0x4b8] sm:$0xf]
    %v4438 = vld [vmem:[#allocation10 + $0x4bc] sm:$0xf]
    %v4439 = vld [vmem:[#allocation10 + $0x4c0] sm:$0xf]
    %v4440 = vld [vmem:[#allocation10 + $0x4c4] sm:$0xf]
    %v4441 = vld [vmem:[#allocation10 + $0x4c8] sm:$0xf]
    %v4442 = vld [vmem:[#allocation10 + $0x4cc] sm:$0xf]
    %v4443 = vld [vmem:[#allocation10 + $0x4d0] sm:$0xf]
    %v4444 = vld [vmem:[#allocation10 + $0x4d4] sm:$0xf]
    %v4445 = vld [vmem:[#allocation10 + $0x4d8] sm:$0xf]
    %v4446 = vld [vmem:[#allocation10 + $0x4dc] sm:$0xf]
    %v4447 = vld [vmem:[#allocation10 + $0x4e0] sm:$0xf]
    %v4448 = vld [vmem:[#allocation10 + $0x4e4] sm:$0xf]
    %v4449 = vld [vmem:[#allocation10 + $0x4e8] sm:$0xf]
    %v4450 = vld [vmem:[#allocation10 + $0x4ec] sm:$0xf]
    %v4451 = vld [vmem:[#allocation10 + $0x4f0] sm:$0xf]
    %v4452 = vld [vmem:[#allocation10 + $0x4f4] sm:$0xf]
    %v4453 = vld [vmem:[#allocation10 + $0x4f8] sm:$0xf]
    %v4454 = vld [vmem:[#allocation10 + $0x4fc] sm:$0xf]
    %v4455 = vld [vmem:[#allocation10 + $0x500] sm:$0xf]
    %v4456 = vld [vmem:[#allocation10 + $0x504] sm:$0xf]
    %v4457 = vld [vmem:[#allocation10 + $0x508] sm:$0xf]
    %v4458 = vld [vmem:[#allocation10 + $0x50c] sm:$0xf]
    %v4459 = vld [vmem:[#allocation10 + $0x510] sm:$0xf]
    %v4460 = vld [vmem:[#allocation10 + $0x514] sm:$0xf]
    %v4461 = vld [vmem:[#allocation10 + $0x518] sm:$0xf]
    %v4462 = vld [vmem:[#allocation10 + $0x51c] sm:$0xf]
    %v4463 = vld [vmem:[#allocation10 + $0x520] sm:$0xf]
    %v4464 = vld [vmem:[#allocation10 + $0x524] sm:$0xf]
    %v4465 = vld [vmem:[#allocation10 + $0x528] sm:$0xf]
    %v4466 = vld [vmem:[#allocation10 + $0x52c] sm:$0xf]
    %v4467 = vld [vmem:[#allocation10 + $0x530] sm:$0xf]
    %v4468 = vld [vmem:[#allocation10 + $0x534] sm:$0xf]
    %v4469 = vld [vmem:[#allocation10 + $0x538] sm:$0xf]
    %v4470 = vld [vmem:[#allocation10 + $0x53c] sm:$0xf]
    %v4471 = vld [vmem:[#allocation10 + $0x540] sm:$0xf]
    %v4472 = vld [vmem:[#allocation10 + $0x544] sm:$0xf]
    %v4473 = vld [vmem:[#allocation10 + $0x548] sm:$0xf]
    %v4474 = vld [vmem:[#allocation10 + $0x54c] sm:$0xf]
    %v4475 = vld [vmem:[#allocation10 + $0x550] sm:$0xf]
    %v4476 = vld [vmem:[#allocation10 + $0x554] sm:$0xf]
    %v4477 = vld [vmem:[#allocation10 + $0x558] sm:$0xf]
    %v4478 = vld [vmem:[#allocation10 + $0x55c] sm:$0xf]
    %v4479 = vld [vmem:[#allocation10 + $0x560] sm:$0xf]
    %v4480 = vld [vmem:[#allocation10 + $0x564] sm:$0xf]
    %v4481 = vld [vmem:[#allocation10 + $0x568] sm:$0xf]
    %v4482 = vld [vmem:[#allocation10 + $0x56c] sm:$0xf]
    %v4483 = vld [vmem:[#allocation10 + $0x570] sm:$0xf]
    %v4484 = vld [vmem:[#allocation10 + $0x574] sm:$0xf]
    %v4485 = vld [vmem:[#allocation10 + $0x578] sm:$0xf]
    %v4486 = vld [vmem:[#allocation10 + $0x57c] sm:$0xf]
    %v4487 = vld [vmem:[#allocation10 + $0x580] sm:$0xf]
    %v4488 = vld [vmem:[#allocation10 + $0x584] sm:$0xf]
    %v4489 = vld [vmem:[#allocation10 + $0x588] sm:$0xf]
    %v4490 = vld [vmem:[#allocation10 + $0x58c] sm:$0xf]
    %v4491 = vld [vmem:[#allocation10 + $0x590] sm:$0xf]
    %v4492 = vld [vmem:[#allocation10 + $0x594] sm:$0xf]
    %v4493 = vld [vmem:[#allocation10 + $0x598] sm:$0xf]
    %v4494 = vld [vmem:[#allocation10 + $0x59c] sm:$0xf]
    %v4495 = vld [vmem:[#allocation10 + $0x5a0] sm:$0xf]
    %v4496 = vld [vmem:[#allocation10 + $0x5a4] sm:$0xf]
    %v4497 = vld [vmem:[#allocation10 + $0x5a8] sm:$0xf]
    %v4498 = vld [vmem:[#allocation10 + $0x5ac] sm:$0xf]
    %v4499 = vld [vmem:[#allocation10 + $0x5b0] sm:$0xf]
    %v4500 = vld [vmem:[#allocation10 + $0x5b4] sm:$0xf]
    %v4501 = vld [vmem:[#allocation10 + $0x5b8] sm:$0xf]
    %v4502 = vld [vmem:[#allocation10 + $0x5bc] sm:$0xf]
    %v4503 = vld [vmem:[#allocation10 + $0x5c0] sm:$0xf]
    %v4504 = vld [vmem:[#allocation10 + $0x5c4] sm:$0xf]
    %v4505 = vld [vmem:[#allocation10 + $0x5c8] sm:$0xf]
    %v4506 = vld [vmem:[#allocation10 + $0x5cc] sm:$0xf]
    %v4507 = vld [vmem:[#allocation10 + $0x5d0] sm:$0xf]
    %v4508 = vld [vmem:[#allocation10 + $0x5d4] sm:$0xf]
    %v4509 = vld [vmem:[#allocation10 + $0x5d8] sm:$0xf]
    %v4510 = vld [vmem:[#allocation10 + $0x5dc] sm:$0xf]
    %v4511 = vld [vmem:[#allocation10 + $0x5e0] sm:$0xf]
    %v4512 = vld [vmem:[#allocation10 + $0x5e4] sm:$0xf]
    %v4513 = vld [vmem:[#allocation10 + $0x5e8] sm:$0xf]
    %v4514 = vld [vmem:[#allocation10 + $0x5ec] sm:$0xf]
    %v4515 = vld [vmem:[#allocation10 + $0x5f0] sm:$0xf]
    %v4516 = vld [vmem:[#allocation10 + $0x5f4] sm:$0xf]
    %v4517 = vld [vmem:[#allocation10 + $0x5f8] sm:$0xf]
    %v4518 = vld [vmem:[#allocation10 + $0x5fc] sm:$0xf]
    %v4519 = vld [vmem:[#allocation10 + $0x600] sm:$0xf]
    %v4520 = vld [vmem:[#allocation10 + $0x604] sm:$0xf]
    %v4521 = vld [vmem:[#allocation10 + $0x608] sm:$0xf]
    %v4522 = vld [vmem:[#allocation10 + $0x60c] sm:$0xf]
    %v4523 = vld [vmem:[#allocation10 + $0x610] sm:$0xf]
    %v4524 = vld [vmem:[#allocation10 + $0x614] sm:$0xf]
    %v4525 = vld [vmem:[#allocation10 + $0x618] sm:$0xf]
    %v4526 = vld [vmem:[#allocation10 + $0x61c] sm:$0xf]
    %v4527 = vld [vmem:[#allocation10 + $0x620] sm:$0xf]
    %v4528 = vld [vmem:[#allocation10 + $0x624] sm:$0xf]
    %v4529 = vld [vmem:[#allocation10 + $0x628] sm:$0xf]
    %v4530 = vld [vmem:[#allocation10 + $0x62c] sm:$0xf]
    %v4531 = vld [vmem:[#allocation10 + $0x630] sm:$0xf]
    %v4532 = vld [vmem:[#allocation10 + $0x634] sm:$0xf]
    %v4533 = vld [vmem:[#allocation10 + $0x638] sm:$0xf]
    %v4534 = vld [vmem:[#allocation10 + $0x63c] sm:$0xf]
    %v4535 = vld [vmem:[#allocation10 + $0x640] sm:$0xf]
    %v4536 = vld [vmem:[#allocation10 + $0x644] sm:$0xf]
    %v4537 = vld [vmem:[#allocation10 + $0x648] sm:$0xf]
    %v4538 = vld [vmem:[#allocation10 + $0x64c] sm:$0xf]
    %v4539 = vld [vmem:[#allocation10 + $0x650] sm:$0xf]
    %v4540 = vld [vmem:[#allocation10 + $0x654] sm:$0xf]
    %v4541 = vld [vmem:[#allocation10 + $0x658] sm:$0xf]
    %v4542 = vld [vmem:[#allocation10 + $0x65c] sm:$0xf]
    %v4543 = vld [vmem:[#allocation10 + $0x660] sm:$0xf]
    %v4544 = vld [vmem:[#allocation10 + $0x664] sm:$0xf]
    %v4545 = vld [vmem:[#allocation10 + $0x668] sm:$0xf]
    %v4546 = vld [vmem:[#allocation10 + $0x66c] sm:$0xf]
    %v4547 = vld [vmem:[#allocation10 + $0x670] sm:$0xf]
    %v4548 = vld [vmem:[#allocation10 + $0x674] sm:$0xf]
    %v4549 = vld [vmem:[#allocation10 + $0x678] sm:$0xf]
    %v4550 = vld [vmem:[#allocation10 + $0x67c] sm:$0xf]
    %v4551 = vld [vmem:[#allocation10 + $0x680] sm:$0xf]
    %v4552 = vld [vmem:[#allocation10 + $0x684] sm:$0xf]
    %v4553 = vld [vmem:[#allocation10 + $0x688] sm:$0xf]
    %v4554 = vld [vmem:[#allocation10 + $0x68c] sm:$0xf]
    %v4555 = vld [vmem:[#allocation10 + $0x690] sm:$0xf]
    %v4556 = vld [vmem:[#allocation10 + $0x694] sm:$0xf]
    %v4557 = vld [vmem:[#allocation10 + $0x698] sm:$0xf]
    %v4558 = vld [vmem:[#allocation10 + $0x69c] sm:$0xf]
    %v4559 = vld [vmem:[#allocation10 + $0x6a0] sm:$0xf]
    %v4560 = vld [vmem:[#allocation10 + $0x6a4] sm:$0xf]
    %v4561 = vld [vmem:[#allocation10 + $0x6a8] sm:$0xf]
    %v4562 = vld [vmem:[#allocation10 + $0x6ac] sm:$0xf]
    %v4563 = vld [vmem:[#allocation10 + $0x6b0] sm:$0xf]
    %v4564 = vld [vmem:[#allocation10 + $0x6b4] sm:$0xf]
    %v4565 = vld [vmem:[#allocation10 + $0x6b8] sm:$0xf]
    %v4566 = vld [vmem:[#allocation10 + $0x6bc] sm:$0xf]
    %v4567 = vld [vmem:[#allocation10 + $0x6c0] sm:$0xf]
    %v4568 = vld [vmem:[#allocation10 + $0x6c4] sm:$0xf]
    %v4569 = vld [vmem:[#allocation10 + $0x6c8] sm:$0xf]
    %v4570 = vld [vmem:[#allocation10 + $0x6cc] sm:$0xf]
    %v4571 = vld [vmem:[#allocation10 + $0x6d0] sm:$0xf]
    %v4572 = vld [vmem:[#allocation10 + $0x6d4] sm:$0xf]
    %v4573 = vld [vmem:[#allocation10 + $0x6d8] sm:$0xf]
    %v4574 = vld [vmem:[#allocation10 + $0x6dc] sm:$0xf]
    %v4575 = vld [vmem:[#allocation10 + $0x6e0] sm:$0xf]
    %v4576 = vld [vmem:[#allocation10 + $0x6e4] sm:$0xf]
    %v4577 = vld [vmem:[#allocation10 + $0x6e8] sm:$0xf]
    %v4578 = vld [vmem:[#allocation10 + $0x6ec] sm:$0xf]
    %v4579 = vld [vmem:[#allocation10 + $0x6f0] sm:$0xf]
    %v4580 = vld [vmem:[#allocation10 + $0x6f4] sm:$0xf]
    %v4581 = vld [vmem:[#allocation10 + $0x6f8] sm:$0xf]
    %v4582 = vld [vmem:[#allocation10 + $0x6fc] sm:$0xf]
    %v4583 = vld [vmem:[#allocation10 + $0x700] sm:$0xf]
    %v4584 = vld [vmem:[#allocation10 + $0x704] sm:$0xf]
    %v4585 = vld [vmem:[#allocation10 + $0x708] sm:$0xf]
    %v4586 = vld [vmem:[#allocation10 + $0x70c] sm:$0xf]
    %v4587 = vld [vmem:[#allocation10 + $0x710] sm:$0xf]
    %v4588 = vld [vmem:[#allocation10 + $0x714] sm:$0xf]
    %v4589 = vld [vmem:[#allocation10 + $0x718] sm:$0xf]
    %v4590 = vld [vmem:[#allocation10 + $0x71c] sm:$0xf]
    %v4591 = vld [vmem:[#allocation10 + $0x720] sm:$0xf]
    %v4592 = vld [vmem:[#allocation10 + $0x724] sm:$0xf]
    %v4593 = vld [vmem:[#allocation10 + $0x728] sm:$0xf]
    %v4594 = vld [vmem:[#allocation10 + $0x72c] sm:$0xf]
    %v4595 = vld [vmem:[#allocation10 + $0x730] sm:$0xf]
    %v4596 = vld [vmem:[#allocation10 + $0x734] sm:$0xf]
    %v4597 = vld [vmem:[#allocation10 + $0x738] sm:$0xf]
    %v4598 = vld [vmem:[#allocation10 + $0x73c] sm:$0xf]
    %v4599 = vld [vmem:[#allocation10 + $0x740] sm:$0xf]
    %v4600 = vld [vmem:[#allocation10 + $0x744] sm:$0xf]
    %v4601 = vld [vmem:[#allocation10 + $0x748] sm:$0xf]
    %v4602 = vld [vmem:[#allocation10 + $0x74c] sm:$0xf]
    %v4603 = vld [vmem:[#allocation10 + $0x750] sm:$0xf]
    %v4604 = vld [vmem:[#allocation10 + $0x754] sm:$0xf]
    %v4605 = vld [vmem:[#allocation10 + $0x758] sm:$0xf]
    %v4606 = vld [vmem:[#allocation10 + $0x75c] sm:$0xf]
    %v4607 = vld [vmem:[#allocation10 + $0x760] sm:$0xf]
    %v4608 = vld [vmem:[#allocation10 + $0x764] sm:$0xf]
    %v4609 = vld [vmem:[#allocation10 + $0x768] sm:$0xf]
    %v4610 = vld [vmem:[#allocation10 + $0x76c] sm:$0xf]
    %v4611 = vld [vmem:[#allocation10 + $0x770] sm:$0xf]
    %v4612 = vld [vmem:[#allocation10 + $0x774] sm:$0xf]
    %v4613 = vld [vmem:[#allocation10 + $0x778] sm:$0xf]
    %v4614 = vld [vmem:[#allocation10 + $0x77c] sm:$0xf]
    %v4615 = vld [vmem:[#allocation10 + $0x780] sm:$0xf]
    %v4616 = vld [vmem:[#allocation10 + $0x784] sm:$0xf]
    %v4617 = vld [vmem:[#allocation10 + $0x788] sm:$0xf]
    %v4618 = vld [vmem:[#allocation10 + $0x78c] sm:$0xf]
    %v4619 = vld [vmem:[#allocation10 + $0x790] sm:$0xf]
    %v4620 = vld [vmem:[#allocation10 + $0x794] sm:$0xf]
    %v4621 = vld [vmem:[#allocation10 + $0x798] sm:$0xf]
    %v4622 = vld [vmem:[#allocation10 + $0x79c] sm:$0xf]
    %v4623 = vld [vmem:[#allocation10 + $0x7a0] sm:$0xf]
    %v4624 = vld [vmem:[#allocation10 + $0x7a4] sm:$0xf]
    %v4625 = vld [vmem:[#allocation10 + $0x7a8] sm:$0xf]
    %v4626 = vld [vmem:[#allocation10 + $0x7ac] sm:$0xf]
    %v4627 = vld [vmem:[#allocation10 + $0x7b0] sm:$0xf]
    %v4628 = vld [vmem:[#allocation10 + $0x7b4] sm:$0xf]
    %v4629 = vld [vmem:[#allocation10 + $0x7b8] sm:$0xf]
    %v4630 = vld [vmem:[#allocation10 + $0x7bc] sm:$0xf]
    %v4631 = vld [vmem:[#allocation10 + $0x7c0] sm:$0xf]
    %v4632 = vld [vmem:[#allocation10 + $0x7c4] sm:$0xf]
    %v4633 = vld [vmem:[#allocation10 + $0x7c8] sm:$0xf]
    %v4634 = vld [vmem:[#allocation10 + $0x7cc] sm:$0xf]
    %v4635 = vld [vmem:[#allocation10 + $0x7d0] sm:$0xf]
    %v4636 = vld [vmem:[#allocation10 + $0x7d4] sm:$0xf]
    %v4637 = vld [vmem:[#allocation10 + $0x7d8] sm:$0xf]
    %v4638 = vld [vmem:[#allocation10 + $0x7dc] sm:$0xf]
    %v4639 = vld [vmem:[#allocation10 + $0x7e0] sm:$0xf]
    %v4640 = vld [vmem:[#allocation10 + $0x7e4] sm:$0xf]
    %v4641 = vld [vmem:[#allocation10 + $0x7e8] sm:$0xf]
    %v4642 = vld [vmem:[#allocation10 + $0x7ec] sm:$0xf]
    %v4643 = vld [vmem:[#allocation10 + $0x7f0] sm:$0xf]
    %v4644 = vld [vmem:[#allocation10 + $0x7f4] sm:$0xf]
    %v4645 = vld [vmem:[#allocation10 + $0x7f8] sm:$0xf]
    %v4646 = vld [vmem:[#allocation10 + $0x7fc] sm:$0xf]
    %v5159 = vunpack.c.l.b16 %v4135
    %v5160 = vunpack.c.l.b16 %v4136
    %v5161 = vunpack.c.l.b16 %v4137
    %v5162 = vunpack.c.l.b16 %v4138
    %v5163 = vunpack.c.l.b16 %v4139
    %v5164 = vunpack.c.l.b16 %v4140
    %v5165 = vunpack.c.l.b16 %v4141
    %v5166 = vunpack.c.l.b16 %v4142
    %v5167 = vunpack.c.l.b16 %v4143
    %v5168 = vunpack.c.l.b16 %v4144
    %v5169 = vunpack.c.l.b16 %v4145
    %v5170 = vunpack.c.l.b16 %v4146
    %v5171 = vunpack.c.l.b16 %v4147
    %v5172 = vunpack.c.l.b16 %v4148
    %v5173 = vunpack.c.l.b16 %v4149
    %v5174 = vunpack.c.l.b16 %v4150
    %v5175 = vunpack.c.l.b16 %v4151
    %v5176 = vunpack.c.l.b16 %v4152
    %v5177 = vunpack.c.l.b16 %v4153
    %v5178 = vunpack.c.l.b16 %v4154
    %v5179 = vunpack.c.l.b16 %v4155
    %v5180 = vunpack.c.l.b16 %v4156
    %v5181 = vunpack.c.l.b16 %v4157
    %v5182 = vunpack.c.l.b16 %v4158
    %v5183 = vunpack.c.l.b16 %v4159
    %v5184 = vunpack.c.l.b16 %v4160
    %v5185 = vunpack.c.l.b16 %v4161
    %v5186 = vunpack.c.l.b16 %v4162
    %v5187 = vunpack.c.l.b16 %v4163
    %v5188 = vunpack.c.l.b16 %v4164
    %v5189 = vunpack.c.l.b16 %v4165
    %v5190 = vunpack.c.l.b16 %v4166
    %v5191 = vunpack.c.l.b16 %v4167
    %v5192 = vunpack.c.l.b16 %v4168
    %v5193 = vunpack.c.l.b16 %v4169
    %v5194 = vunpack.c.l.b16 %v4170
    %v5195 = vunpack.c.l.b16 %v4171
    %v5196 = vunpack.c.l.b16 %v4172
    %v5197 = vunpack.c.l.b16 %v4173
    %v5198 = vunpack.c.l.b16 %v4174
    %v5199 = vunpack.c.l.b16 %v4175
    %v5200 = vunpack.c.l.b16 %v4176
    %v5201 = vunpack.c.l.b16 %v4177
    %v5202 = vunpack.c.l.b16 %v4178
    %v5203 = vunpack.c.l.b16 %v4179
    %v5204 = vunpack.c.l.b16 %v4180
    %v5205 = vunpack.c.l.b16 %v4181
    %v5206 = vunpack.c.l.b16 %v4182
    %v5207 = vunpack.c.l.b16 %v4183
    %v5208 = vunpack.c.l.b16 %v4184
    %v5209 = vunpack.c.l.b16 %v4185
    %v5210 = vunpack.c.l.b16 %v4186
    %v5211 = vunpack.c.l.b16 %v4187
    %v5212 = vunpack.c.l.b16 %v4188
    %v5213 = vunpack.c.l.b16 %v4189
    %v5214 = vunpack.c.l.b16 %v4190
    %v5215 = vunpack.c.l.b16 %v4191
    %v5216 = vunpack.c.l.b16 %v4192
    %v5217 = vunpack.c.l.b16 %v4193
    %v5218 = vunpack.c.l.b16 %v4194
    %v5219 = vunpack.c.l.b16 %v4195
    %v5220 = vunpack.c.l.b16 %v4196
    %v5221 = vunpack.c.l.b16 %v4197
    %v5222 = vunpack.c.l.b16 %v4198
    %v5223 = vunpack.c.l.b16 %v4199
    %v5224 = vunpack.c.l.b16 %v4200
    %v5225 = vunpack.c.l.b16 %v4201
    %v5226 = vunpack.c.l.b16 %v4202
    %v5227 = vunpack.c.l.b16 %v4203
    %v5228 = vunpack.c.l.b16 %v4204
    %v5229 = vunpack.c.l.b16 %v4205
    %v5230 = vunpack.c.l.b16 %v4206
    %v5231 = vunpack.c.l.b16 %v4207
    %v5232 = vunpack.c.l.b16 %v4208
    %v5233 = vunpack.c.l.b16 %v4209
    %v5234 = vunpack.c.l.b16 %v4210
    %v5235 = vunpack.c.l.b16 %v4211
    %v5236 = vunpack.c.l.b16 %v4212
    %v5237 = vunpack.c.l.b16 %v4213
    %v5238 = vunpack.c.l.b16 %v4214
    %v5239 = vunpack.c.l.b16 %v4215
    %v5240 = vunpack.c.l.b16 %v4216
    %v5241 = vunpack.c.l.b16 %v4217
    %v5242 = vunpack.c.l.b16 %v4218
    %v5243 = vunpack.c.l.b16 %v4219
    %v5244 = vunpack.c.l.b16 %v4220
    %v5245 = vunpack.c.l.b16 %v4221
    %v5246 = vunpack.c.l.b16 %v4222
    %v5247 = vunpack.c.l.b16 %v4223
    %v5248 = vunpack.c.l.b16 %v4224
    %v5249 = vunpack.c.l.b16 %v4225
    %v5250 = vunpack.c.l.b16 %v4226
    %v5251 = vunpack.c.l.b16 %v4227
    %v5252 = vunpack.c.l.b16 %v4228
    %v5253 = vunpack.c.l.b16 %v4229
    %v5254 = vunpack.c.l.b16 %v4230
    %v5255 = vunpack.c.l.b16 %v4231
    %v5256 = vunpack.c.l.b16 %v4232
    %v5257 = vunpack.c.l.b16 %v4233
    %v5258 = vunpack.c.l.b16 %v4234
    %v5259 = vunpack.c.l.b16 %v4235
    %v5260 = vunpack.c.l.b16 %v4236
    %v5261 = vunpack.c.l.b16 %v4237
    %v5262 = vunpack.c.l.b16 %v4238
    %v5263 = vunpack.c.l.b16 %v4239
    %v5264 = vunpack.c.l.b16 %v4240
    %v5265 = vunpack.c.l.b16 %v4241
    %v5266 = vunpack.c.l.b16 %v4242
    %v5267 = vunpack.c.l.b16 %v4243
    %v5268 = vunpack.c.l.b16 %v4244
    %v5269 = vunpack.c.l.b16 %v4245
    %v5270 = vunpack.c.l.b16 %v4246
    %v5271 = vunpack.c.l.b16 %v4247
    %v5272 = vunpack.c.l.b16 %v4248
    %v5273 = vunpack.c.l.b16 %v4249
    %v5274 = vunpack.c.l.b16 %v4250
    %v5275 = vunpack.c.l.b16 %v4251
    %v5276 = vunpack.c.l.b16 %v4252
    %v5277 = vunpack.c.l.b16 %v4253
    %v5278 = vunpack.c.l.b16 %v4254
    %v5279 = vunpack.c.l.b16 %v4255
    %v5280 = vunpack.c.l.b16 %v4256
    %v5281 = vunpack.c.l.b16 %v4257
    %v5282 = vunpack.c.l.b16 %v4258
    %v5283 = vunpack.c.l.b16 %v4259
    %v5284 = vunpack.c.l.b16 %v4260
    %v5285 = vunpack.c.l.b16 %v4261
    %v5286 = vunpack.c.l.b16 %v4262
    %v5287 = vunpack.c.l.b16 %v4263
    %v5288 = vunpack.c.l.b16 %v4264
    %v5289 = vunpack.c.l.b16 %v4265
    %v5290 = vunpack.c.l.b16 %v4266
    %v5291 = vunpack.c.l.b16 %v4267
    %v5292 = vunpack.c.l.b16 %v4268
    %v5293 = vunpack.c.l.b16 %v4269
    %v5294 = vunpack.c.l.b16 %v4270
    %v5295 = vunpack.c.l.b16 %v4271
    %v5296 = vunpack.c.l.b16 %v4272
    %v5297 = vunpack.c.l.b16 %v4273
    %v5298 = vunpack.c.l.b16 %v4274
    %v5299 = vunpack.c.l.b16 %v4275
    %v5300 = vunpack.c.l.b16 %v4276
    %v5301 = vunpack.c.l.b16 %v4277
    %v5302 = vunpack.c.l.b16 %v4278
    %v5303 = vunpack.c.l.b16 %v4279
    %v5304 = vunpack.c.l.b16 %v4280
    %v5305 = vunpack.c.l.b16 %v4281
    %v5306 = vunpack.c.l.b16 %v4282
    %v5307 = vunpack.c.l.b16 %v4283
    %v5308 = vunpack.c.l.b16 %v4284
    %v5309 = vunpack.c.l.b16 %v4285
    %v5310 = vunpack.c.l.b16 %v4286
    %v5311 = vunpack.c.l.b16 %v4287
    %v5312 = vunpack.c.l.b16 %v4288
    %v5313 = vunpack.c.l.b16 %v4289
    %v5314 = vunpack.c.l.b16 %v4290
    %v5315 = vunpack.c.l.b16 %v4291
    %v5316 = vunpack.c.l.b16 %v4292
    %v5317 = vunpack.c.l.b16 %v4293
    %v5318 = vunpack.c.l.b16 %v4294
    %v5319 = vunpack.c.l.b16 %v4295
    %v5320 = vunpack.c.l.b16 %v4296
    %v5321 = vunpack.c.l.b16 %v4297
    %v5322 = vunpack.c.l.b16 %v4298
    %v5323 = vunpack.c.l.b16 %v4299
    %v5324 = vunpack.c.l.b16 %v4300
    %v5325 = vunpack.c.l.b16 %v4301
    %v5326 = vunpack.c.l.b16 %v4302
    %v5327 = vunpack.c.l.b16 %v4303
    %v5328 = vunpack.c.l.b16 %v4304
    %v5329 = vunpack.c.l.b16 %v4305
    %v5330 = vunpack.c.l.b16 %v4306
    %v5331 = vunpack.c.l.b16 %v4307
    %v5332 = vunpack.c.l.b16 %v4308
    %v5333 = vunpack.c.l.b16 %v4309
    %v5334 = vunpack.c.l.b16 %v4310
    %v5335 = vunpack.c.l.b16 %v4311
    %v5336 = vunpack.c.l.b16 %v4312
    %v5337 = vunpack.c.l.b16 %v4313
    %v5338 = vunpack.c.l.b16 %v4314
    %v5339 = vunpack.c.l.b16 %v4315
    %v5340 = vunpack.c.l.b16 %v4316
    %v5341 = vunpack.c.l.b16 %v4317
    %v5342 = vunpack.c.l.b16 %v4318
    %v5343 = vunpack.c.l.b16 %v4319
    %v5344 = vunpack.c.l.b16 %v4320
    %v5345 = vunpack.c.l.b16 %v4321
    %v5346 = vunpack.c.l.b16 %v4322
    %v5347 = vunpack.c.l.b16 %v4323
    %v5348 = vunpack.c.l.b16 %v4324
    %v5349 = vunpack.c.l.b16 %v4325
    %v5350 = vunpack.c.l.b16 %v4326
    %v5351 = vunpack.c.l.b16 %v4327
    %v5352 = vunpack.c.l.b16 %v4328
    %v5353 = vunpack.c.l.b16 %v4329
    %v5354 = vunpack.c.l.b16 %v4330
    %v5355 = vunpack.c.l.b16 %v4331
    %v5356 = vunpack.c.l.b16 %v4332
    %v5357 = vunpack.c.l.b16 %v4333
    %v5358 = vunpack.c.l.b16 %v4334
    %v5359 = vunpack.c.l.b16 %v4335
    %v5360 = vunpack.c.l.b16 %v4336
    %v5361 = vunpack.c.l.b16 %v4337
    %v5362 = vunpack.c.l.b16 %v4338
    %v5363 = vunpack.c.l.b16 %v4339
    %v5364 = vunpack.c.l.b16 %v4340
    %v5365 = vunpack.c.l.b16 %v4341
    %v5366 = vunpack.c.l.b16 %v4342
    %v5367 = vunpack.c.l.b16 %v4343
    %v5368 = vunpack.c.l.b16 %v4344
    %v5369 = vunpack.c.l.b16 %v4345
    %v5370 = vunpack.c.l.b16 %v4346
    %v5371 = vunpack.c.l.b16 %v4347
    %v5372 = vunpack.c.l.b16 %v4348
    %v5373 = vunpack.c.l.b16 %v4349
    %v5374 = vunpack.c.l.b16 %v4350
    %v5375 = vunpack.c.l.b16 %v4351
    %v5376 = vunpack.c.l.b16 %v4352
    %v5377 = vunpack.c.l.b16 %v4353
    %v5378 = vunpack.c.l.b16 %v4354
    %v5379 = vunpack.c.l.b16 %v4355
    %v5380 = vunpack.c.l.b16 %v4356
    %v5381 = vunpack.c.l.b16 %v4357
    %v5382 = vunpack.c.l.b16 %v4358
    %v5383 = vunpack.c.l.b16 %v4359
    %v5384 = vunpack.c.l.b16 %v4360
    %v5385 = vunpack.c.l.b16 %v4361
    %v5386 = vunpack.c.l.b16 %v4362
    %v5387 = vunpack.c.l.b16 %v4363
    %v5388 = vunpack.c.l.b16 %v4364
    %v5389 = vunpack.c.l.b16 %v4365
    %v5390 = vunpack.c.l.b16 %v4366
    %v5391 = vunpack.c.l.b16 %v4367
    %v5392 = vunpack.c.l.b16 %v4368
    %v5393 = vunpack.c.l.b16 %v4369
    %v5394 = vunpack.c.l.b16 %v4370
    %v5395 = vunpack.c.l.b16 %v4371
    %v5396 = vunpack.c.l.b16 %v4372
    %v5397 = vunpack.c.l.b16 %v4373
    %v5398 = vunpack.c.l.b16 %v4374
    %v5399 = vunpack.c.l.b16 %v4375
    %v5400 = vunpack.c.l.b16 %v4376
    %v5401 = vunpack.c.l.b16 %v4377
    %v5402 = vunpack.c.l.b16 %v4378
    %v5403 = vunpack.c.l.b16 %v4379
    %v5404 = vunpack.c.l.b16 %v4380
    %v5405 = vunpack.c.l.b16 %v4381
    %v5406 = vunpack.c.l.b16 %v4382
    %v5407 = vunpack.c.l.b16 %v4383
    %v5408 = vunpack.c.l.b16 %v4384
    %v5409 = vunpack.c.l.b16 %v4385
    %v5410 = vunpack.c.l.b16 %v4386
    %v5411 = vunpack.c.l.b16 %v4387
    %v5412 = vunpack.c.l.b16 %v4388
    %v5413 = vunpack.c.l.b16 %v4389
    %v5414 = vunpack.c.l.b16 %v4390
    %v5415 = vunpack.c.l.b16 %v4391
    %v5416 = vunpack.c.l.b16 %v4392
    %v5417 = vunpack.c.l.b16 %v4393
    %v5418 = vunpack.c.l.b16 %v4394
    %v5419 = vunpack.c.l.b16 %v4395
    %v5420 = vunpack.c.l.b16 %v4396
    %v5421 = vunpack.c.l.b16 %v4397
    %v5422 = vunpack.c.l.b16 %v4398
    %v5423 = vunpack.c.l.b16 %v4399
    %v5424 = vunpack.c.l.b16 %v4400
    %v5425 = vunpack.c.l.b16 %v4401
    %v5426 = vunpack.c.l.b16 %v4402
    %v5427 = vunpack.c.l.b16 %v4403
    %v5428 = vunpack.c.l.b16 %v4404
    %v5429 = vunpack.c.l.b16 %v4405
    %v5430 = vunpack.c.l.b16 %v4406
    %v5431 = vunpack.c.l.b16 %v4407
    %v5432 = vunpack.c.l.b16 %v4408
    %v5433 = vunpack.c.l.b16 %v4409
    %v5434 = vunpack.c.l.b16 %v4410
    %v5435 = vunpack.c.l.b16 %v4411
    %v5436 = vunpack.c.l.b16 %v4412
    %v5437 = vunpack.c.l.b16 %v4413
    %v5438 = vunpack.c.l.b16 %v4414
    %v5439 = vunpack.c.l.b16 %v4415
    %v5440 = vunpack.c.l.b16 %v4416
    %v5441 = vunpack.c.l.b16 %v4417
    %v5442 = vunpack.c.l.b16 %v4418
    %v5443 = vunpack.c.l.b16 %v4419
    %v5444 = vunpack.c.l.b16 %v4420
    %v5445 = vunpack.c.l.b16 %v4421
    %v5446 = vunpack.c.l.b16 %v4422
    %v5447 = vunpack.c.l.b16 %v4423
    %v5448 = vunpack.c.l.b16 %v4424
    %v5449 = vunpack.c.l.b16 %v4425
    %v5450 = vunpack.c.l.b16 %v4426
    %v5451 = vunpack.c.l.b16 %v4427
    %v5452 = vunpack.c.l.b16 %v4428
    %v5453 = vunpack.c.l.b16 %v4429
    %v5454 = vunpack.c.l.b16 %v4430
    %v5455 = vunpack.c.l.b16 %v4431
    %v5456 = vunpack.c.l.b16 %v4432
    %v5457 = vunpack.c.l.b16 %v4433
    %v5458 = vunpack.c.l.b16 %v4434
    %v5459 = vunpack.c.l.b16 %v4435
    %v5460 = vunpack.c.l.b16 %v4436
    %v5461 = vunpack.c.l.b16 %v4437
    %v5462 = vunpack.c.l.b16 %v4438
    %v5463 = vunpack.c.l.b16 %v4439
    %v5464 = vunpack.c.l.b16 %v4440
    %v5465 = vunpack.c.l.b16 %v4441
    %v5466 = vunpack.c.l.b16 %v4442
    %v5467 = vunpack.c.l.b16 %v4443
    %v5468 = vunpack.c.l.b16 %v4444
    %v5469 = vunpack.c.l.b16 %v4445
    %v5470 = vunpack.c.l.b16 %v4446
    %v5471 = vunpack.c.l.b16 %v4447
    %v5472 = vunpack.c.l.b16 %v4448
    %v5473 = vunpack.c.l.b16 %v4449
    %v5474 = vunpack.c.l.b16 %v4450
    %v5475 = vunpack.c.l.b16 %v4451
    %v5476 = vunpack.c.l.b16 %v4452
    %v5477 = vunpack.c.l.b16 %v4453
    %v5478 = vunpack.c.l.b16 %v4454
    %v5479 = vunpack.c.l.b16 %v4455
    %v5480 = vunpack.c.l.b16 %v4456
    %v5481 = vunpack.c.l.b16 %v4457
    %v5482 = vunpack.c.l.b16 %v4458
    %v5483 = vunpack.c.l.b16 %v4459
    %v5484 = vunpack.c.l.b16 %v4460
    %v5485 = vunpack.c.l.b16 %v4461
    %v5486 = vunpack.c.l.b16 %v4462
    %v5487 = vunpack.c.l.b16 %v4463
    %v5488 = vunpack.c.l.b16 %v4464
    %v5489 = vunpack.c.l.b16 %v4465
    %v5490 = vunpack.c.l.b16 %v4466
    %v5491 = vunpack.c.l.b16 %v4467
    %v5492 = vunpack.c.l.b16 %v4468
    %v5493 = vunpack.c.l.b16 %v4469
    %v5494 = vunpack.c.l.b16 %v4470
    %v5495 = vunpack.c.l.b16 %v4471
    %v5496 = vunpack.c.l.b16 %v4472
    %v5497 = vunpack.c.l.b16 %v4473
    %v5498 = vunpack.c.l.b16 %v4474
    %v5499 = vunpack.c.l.b16 %v4475
    %v5500 = vunpack.c.l.b16 %v4476
    %v5501 = vunpack.c.l.b16 %v4477
    %v5502 = vunpack.c.l.b16 %v4478
    %v5503 = vunpack.c.l.b16 %v4479
    %v5504 = vunpack.c.l.b16 %v4480
    %v5505 = vunpack.c.l.b16 %v4481
    %v5506 = vunpack.c.l.b16 %v4482
    %v5507 = vunpack.c.l.b16 %v4483
    %v5508 = vunpack.c.l.b16 %v4484
    %v5509 = vunpack.c.l.b16 %v4485
    %v5510 = vunpack.c.l.b16 %v4486
    %v5511 = vunpack.c.l.b16 %v4487
    %v5512 = vunpack.c.l.b16 %v4488
    %v5513 = vunpack.c.l.b16 %v4489
    %v5514 = vunpack.c.l.b16 %v4490
    %v5515 = vunpack.c.l.b16 %v4491
    %v5516 = vunpack.c.l.b16 %v4492
    %v5517 = vunpack.c.l.b16 %v4493
    %v5518 = vunpack.c.l.b16 %v4494
    %v5519 = vunpack.c.l.b16 %v4495
    %v5520 = vunpack.c.l.b16 %v4496
    %v5521 = vunpack.c.l.b16 %v4497
    %v5522 = vunpack.c.l.b16 %v4498
    %v5523 = vunpack.c.l.b16 %v4499
    %v5524 = vunpack.c.l.b16 %v4500
    %v5525 = vunpack.c.l.b16 %v4501
    %v5526 = vunpack.c.l.b16 %v4502
    %v5527 = vunpack.c.l.b16 %v4503
    %v5528 = vunpack.c.l.b16 %v4504
    %v5529 = vunpack.c.l.b16 %v4505
    %v5530 = vunpack.c.l.b16 %v4506
    %v5531 = vunpack.c.l.b16 %v4507
    %v5532 = vunpack.c.l.b16 %v4508
    %v5533 = vunpack.c.l.b16 %v4509
    %v5534 = vunpack.c.l.b16 %v4510
    %v5535 = vunpack.c.l.b16 %v4511
    %v5536 = vunpack.c.l.b16 %v4512
    %v5537 = vunpack.c.l.b16 %v4513
    %v5538 = vunpack.c.l.b16 %v4514
    %v5539 = vunpack.c.l.b16 %v4515
    %v5540 = vunpack.c.l.b16 %v4516
    %v5541 = vunpack.c.l.b16 %v4517
    %v5542 = vunpack.c.l.b16 %v4518
    %v5543 = vunpack.c.l.b16 %v4519
    %v5544 = vunpack.c.l.b16 %v4520
    %v5545 = vunpack.c.l.b16 %v4521
    %v5546 = vunpack.c.l.b16 %v4522
    %v5547 = vunpack.c.l.b16 %v4523
    %v5548 = vunpack.c.l.b16 %v4524
    %v5549 = vunpack.c.l.b16 %v4525
    %v5550 = vunpack.c.l.b16 %v4526
    %v5551 = vunpack.c.l.b16 %v4527
    %v5552 = vunpack.c.l.b16 %v4528
    %v5553 = vunpack.c.l.b16 %v4529
    %v5554 = vunpack.c.l.b16 %v4530
    %v5555 = vunpack.c.l.b16 %v4531
    %v5556 = vunpack.c.l.b16 %v4532
    %v5557 = vunpack.c.l.b16 %v4533
    %v5558 = vunpack.c.l.b16 %v4534
    %v5559 = vunpack.c.l.b16 %v4535
    %v5560 = vunpack.c.l.b16 %v4536
    %v5561 = vunpack.c.l.b16 %v4537
    %v5562 = vunpack.c.l.b16 %v4538
    %v5563 = vunpack.c.l.b16 %v4539
    %v5564 = vunpack.c.l.b16 %v4540
    %v5565 = vunpack.c.l.b16 %v4541
    %v5566 = vunpack.c.l.b16 %v4542
    %v5567 = vunpack.c.l.b16 %v4543
    %v5568 = vunpack.c.l.b16 %v4544
    %v5569 = vunpack.c.l.b16 %v4545
    %v5570 = vunpack.c.l.b16 %v4546
    %v5571 = vunpack.c.l.b16 %v4547
    %v5572 = vunpack.c.l.b16 %v4548
    %v5573 = vunpack.c.l.b16 %v4549
    %v5574 = vunpack.c.l.b16 %v4550
    %v5575 = vunpack.c.l.b16 %v4551
    %v5576 = vunpack.c.l.b16 %v4552
    %v5577 = vunpack.c.l.b16 %v4553
    %v5578 = vunpack.c.l.b16 %v4554
    %v5579 = vunpack.c.l.b16 %v4555
    %v5580 = vunpack.c.l.b16 %v4556
    %v5581 = vunpack.c.l.b16 %v4557
    %v5582 = vunpack.c.l.b16 %v4558
    %v5583 = vunpack.c.l.b16 %v4559
    %v5584 = vunpack.c.l.b16 %v4560
    %v5585 = vunpack.c.l.b16 %v4561
    %v5586 = vunpack.c.l.b16 %v4562
    %v5587 = vunpack.c.l.b16 %v4563
    %v5588 = vunpack.c.l.b16 %v4564
    %v5589 = vunpack.c.l.b16 %v4565
    %v5590 = vunpack.c.l.b16 %v4566
    %v5591 = vunpack.c.l.b16 %v4567
    %v5592 = vunpack.c.l.b16 %v4568
    %v5593 = vunpack.c.l.b16 %v4569
    %v5594 = vunpack.c.l.b16 %v4570
    %v5595 = vunpack.c.l.b16 %v4571
    %v5596 = vunpack.c.l.b16 %v4572
    %v5597 = vunpack.c.l.b16 %v4573
    %v5598 = vunpack.c.l.b16 %v4574
    %v5599 = vunpack.c.l.b16 %v4575
    %v5600 = vunpack.c.l.b16 %v4576
    %v5601 = vunpack.c.l.b16 %v4577
    %v5602 = vunpack.c.l.b16 %v4578
    %v5603 = vunpack.c.l.b16 %v4579
    %v5604 = vunpack.c.l.b16 %v4580
    %v5605 = vunpack.c.l.b16 %v4581
    %v5606 = vunpack.c.l.b16 %v4582
    %v5607 = vunpack.c.l.b16 %v4583
    %v5608 = vunpack.c.l.b16 %v4584
    %v5609 = vunpack.c.l.b16 %v4585
    %v5610 = vunpack.c.l.b16 %v4586
    %v5611 = vunpack.c.l.b16 %v4587
    %v5612 = vunpack.c.l.b16 %v4588
    %v5613 = vunpack.c.l.b16 %v4589
    %v5614 = vunpack.c.l.b16 %v4590
    %v5615 = vunpack.c.l.b16 %v4591
    %v5616 = vunpack.c.l.b16 %v4592
    %v5617 = vunpack.c.l.b16 %v4593
    %v5618 = vunpack.c.l.b16 %v4594
    %v5619 = vunpack.c.l.b16 %v4595
    %v5620 = vunpack.c.l.b16 %v4596
    %v5621 = vunpack.c.l.b16 %v4597
    %v5622 = vunpack.c.l.b16 %v4598
    %v5623 = vunpack.c.l.b16 %v4599
    %v5624 = vunpack.c.l.b16 %v4600
    %v5625 = vunpack.c.l.b16 %v4601
    %v5626 = vunpack.c.l.b16 %v4602
    %v5627 = vunpack.c.l.b16 %v4603
    %v5628 = vunpack.c.l.b16 %v4604
    %v5629 = vunpack.c.l.b16 %v4605
    %v5630 = vunpack.c.l.b16 %v4606
    %v5631 = vunpack.c.l.b16 %v4607
    %v5632 = vunpack.c.l.b16 %v4608
    %v5633 = vunpack.c.l.b16 %v4609
    %v5634 = vunpack.c.l.b16 %v4610
    %v5635 = vunpack.c.l.b16 %v4611
    %v5636 = vunpack.c.l.b16 %v4612
    %v5637 = vunpack.c.l.b16 %v4613
    %v5638 = vunpack.c.l.b16 %v4614
    %v5639 = vunpack.c.l.b16 %v4615
    %v5640 = vunpack.c.l.b16 %v4616
    %v5641 = vunpack.c.l.b16 %v4617
    %v5642 = vunpack.c.l.b16 %v4618
    %v5643 = vunpack.c.l.b16 %v4619
    %v5644 = vunpack.c.l.b16 %v4620
    %v5645 = vunpack.c.l.b16 %v4621
    %v5646 = vunpack.c.l.b16 %v4622
    %v5647 = vunpack.c.l.b16 %v4623
    %v5648 = vunpack.c.l.b16 %v4624
    %v5649 = vunpack.c.l.b16 %v4625
    %v5650 = vunpack.c.l.b16 %v4626
    %v5651 = vunpack.c.l.b16 %v4627
    %v5652 = vunpack.c.l.b16 %v4628
    %v5653 = vunpack.c.l.b16 %v4629
    %v5654 = vunpack.c.l.b16 %v4630
    %v5655 = vunpack.c.l.b16 %v4631
    %v5656 = vunpack.c.l.b16 %v4632
    %v5657 = vunpack.c.l.b16 %v4633
    %v5658 = vunpack.c.l.b16 %v4634
    %v5659 = vunpack.c.l.b16 %v4635
    %v5660 = vunpack.c.l.b16 %v4636
    %v5661 = vunpack.c.l.b16 %v4637
    %v5662 = vunpack.c.l.b16 %v4638
    %v5663 = vunpack.c.l.b16 %v4639
    %v5664 = vunpack.c.l.b16 %v4640
    %v5665 = vunpack.c.l.b16 %v4641
    %v5666 = vunpack.c.l.b16 %v4642
    %v5667 = vunpack.c.l.b16 %v4643
    %v5668 = vunpack.c.l.b16 %v4644
    %v5669 = vunpack.c.l.b16 %v4645
    %v5670 = vunpack.c.l.b16 %v4646
    %v5671 = vpack.c.b16 %v5160, %v5159
    %v5672 = vpack.c.b16 %v5162, %v5161
    %v5673 = vpack.c.b16 %v5164, %v5163
    %v5674 = vpack.c.b16 %v5166, %v5165
    %v5675 = vpack.c.b16 %v5168, %v5167
    %v5676 = vpack.c.b16 %v5170, %v5169
    %v5677 = vpack.c.b16 %v5172, %v5171
    %v5678 = vpack.c.b16 %v5174, %v5173
    %v5679 = vpack.c.b16 %v5176, %v5175
    %v5680 = vpack.c.b16 %v5178, %v5177
    %v5681 = vpack.c.b16 %v5180, %v5179
    %v5682 = vpack.c.b16 %v5182, %v5181
    %v5683 = vpack.c.b16 %v5184, %v5183
    %v5684 = vpack.c.b16 %v5186, %v5185
    %v5685 = vpack.c.b16 %v5188, %v5187
    %v5686 = vpack.c.b16 %v5190, %v5189
    %v5687 = vpack.c.b16 %v5192, %v5191
    %v5688 = vpack.c.b16 %v5194, %v5193
    %v5689 = vpack.c.b16 %v5196, %v5195
    %v5690 = vpack.c.b16 %v5198, %v5197
    %v5691 = vpack.c.b16 %v5200, %v5199
    %v5692 = vpack.c.b16 %v5202, %v5201
    %v5693 = vpack.c.b16 %v5204, %v5203
    %v5694 = vpack.c.b16 %v5206, %v5205
    %v5695 = vpack.c.b16 %v5208, %v5207
    %v5696 = vpack.c.b16 %v5210, %v5209
    %v5697 = vpack.c.b16 %v5212, %v5211
    %v5698 = vpack.c.b16 %v5214, %v5213
    %v5699 = vpack.c.b16 %v5216, %v5215
    %v5700 = vpack.c.b16 %v5218, %v5217
    %v5701 = vpack.c.b16 %v5220, %v5219
    %v5702 = vpack.c.b16 %v5222, %v5221
    %v5703 = vpack.c.b16 %v5224, %v5223
    %v5704 = vpack.c.b16 %v5226, %v5225
    %v5705 = vpack.c.b16 %v5228, %v5227
    %v5706 = vpack.c.b16 %v5230, %v5229
    %v5707 = vpack.c.b16 %v5232, %v5231
    %v5708 = vpack.c.b16 %v5234, %v5233
    %v5709 = vpack.c.b16 %v5236, %v5235
    %v5710 = vpack.c.b16 %v5238, %v5237
    %v5711 = vpack.c.b16 %v5240, %v5239
    %v5712 = vpack.c.b16 %v5242, %v5241
    %v5713 = vpack.c.b16 %v5244, %v5243
    %v5714 = vpack.c.b16 %v5246, %v5245
    %v5715 = vpack.c.b16 %v5248, %v5247
    %v5716 = vpack.c.b16 %v5250, %v5249
    %v5717 = vpack.c.b16 %v5252, %v5251
    %v5718 = vpack.c.b16 %v5254, %v5253
    %v5719 = vpack.c.b16 %v5256, %v5255
    %v5720 = vpack.c.b16 %v5258, %v5257
    %v5721 = vpack.c.b16 %v5260, %v5259
    %v5722 = vpack.c.b16 %v5262, %v5261
    %v5723 = vpack.c.b16 %v5264, %v5263
    %v5724 = vpack.c.b16 %v5266, %v5265
    %v5725 = vpack.c.b16 %v5268, %v5267
    %v5726 = vpack.c.b16 %v5270, %v5269
    %v5727 = vpack.c.b16 %v5272, %v5271
    %v5728 = vpack.c.b16 %v5274, %v5273
    %v5729 = vpack.c.b16 %v5276, %v5275
    %v5730 = vpack.c.b16 %v5278, %v5277
    %v5731 = vpack.c.b16 %v5280, %v5279
    %v5732 = vpack.c.b16 %v5282, %v5281
    %v5733 = vpack.c.b16 %v5284, %v5283
    %v5734 = vpack.c.b16 %v5286, %v5285
    %v5735 = vpack.c.b16 %v5288, %v5287
    %v5736 = vpack.c.b16 %v5290, %v5289
    %v5737 = vpack.c.b16 %v5292, %v5291
    %v5738 = vpack.c.b16 %v5294, %v5293
    %v5739 = vpack.c.b16 %v5296, %v5295
    %v5740 = vpack.c.b16 %v5298, %v5297
    %v5741 = vpack.c.b16 %v5300, %v5299
    %v5742 = vpack.c.b16 %v5302, %v5301
    %v5743 = vpack.c.b16 %v5304, %v5303
    %v5744 = vpack.c.b16 %v5306, %v5305
    %v5745 = vpack.c.b16 %v5308, %v5307
    %v5746 = vpack.c.b16 %v5310, %v5309
    %v5747 = vpack.c.b16 %v5312, %v5311
    %v5748 = vpack.c.b16 %v5314, %v5313
    %v5749 = vpack.c.b16 %v5316, %v5315
    %v5750 = vpack.c.b16 %v5318, %v5317
    %v5751 = vpack.c.b16 %v5320, %v5319
    %v5752 = vpack.c.b16 %v5322, %v5321
    %v5753 = vpack.c.b16 %v5324, %v5323
    %v5754 = vpack.c.b16 %v5326, %v5325
    %v5755 = vpack.c.b16 %v5328, %v5327
    %v5756 = vpack.c.b16 %v5330, %v5329
    %v5757 = vpack.c.b16 %v5332, %v5331
    %v5758 = vpack.c.b16 %v5334, %v5333
    %v5759 = vpack.c.b16 %v5336, %v5335
    %v5760 = vpack.c.b16 %v5338, %v5337
    %v5761 = vpack.c.b16 %v5340, %v5339
    %v5762 = vpack.c.b16 %v5342, %v5341
    %v5763 = vpack.c.b16 %v5344, %v5343
    %v5764 = vpack.c.b16 %v5346, %v5345
    %v5765 = vpack.c.b16 %v5348, %v5347
    %v5766 = vpack.c.b16 %v5350, %v5349
    %v5767 = vpack.c.b16 %v5352, %v5351
    %v5768 = vpack.c.b16 %v5354, %v5353
    %v5769 = vpack.c.b16 %v5356, %v5355
    %v5770 = vpack.c.b16 %v5358, %v5357
    %v5771 = vpack.c.b16 %v5360, %v5359
    %v5772 = vpack.c.b16 %v5362, %v5361
    %v5773 = vpack.c.b16 %v5364, %v5363
    %v5774 = vpack.c.b16 %v5366, %v5365
    %v5775 = vpack.c.b16 %v5368, %v5367
    %v5776 = vpack.c.b16 %v5370, %v5369
    %v5777 = vpack.c.b16 %v5372, %v5371
    %v5778 = vpack.c.b16 %v5374, %v5373
    %v5779 = vpack.c.b16 %v5376, %v5375
    %v5780 = vpack.c.b16 %v5378, %v5377
    %v5781 = vpack.c.b16 %v5380, %v5379
    %v5782 = vpack.c.b16 %v5382, %v5381
    %v5783 = vpack.c.b16 %v5384, %v5383
    %v5784 = vpack.c.b16 %v5386, %v5385
    %v5785 = vpack.c.b16 %v5388, %v5387
    %v5786 = vpack.c.b16 %v5390, %v5389
    %v5787 = vpack.c.b16 %v5392, %v5391
    %v5788 = vpack.c.b16 %v5394, %v5393
    %v5789 = vpack.c.b16 %v5396, %v5395
    %v5790 = vpack.c.b16 %v5398, %v5397
    %v5791 = vpack.c.b16 %v5400, %v5399
    %v5792 = vpack.c.b16 %v5402, %v5401
    %v5793 = vpack.c.b16 %v5404, %v5403
    %v5794 = vpack.c.b16 %v5406, %v5405
    %v5795 = vpack.c.b16 %v5408, %v5407
    %v5796 = vpack.c.b16 %v5410, %v5409
    %v5797 = vpack.c.b16 %v5412, %v5411
    %v5798 = vpack.c.b16 %v5414, %v5413
    %v5799 = vpack.c.b16 %v5416, %v5415
    %v5800 = vpack.c.b16 %v5418, %v5417
    %v5801 = vpack.c.b16 %v5420, %v5419
    %v5802 = vpack.c.b16 %v5422, %v5421
    %v5803 = vpack.c.b16 %v5424, %v5423
    %v5804 = vpack.c.b16 %v5426, %v5425
    %v5805 = vpack.c.b16 %v5428, %v5427
    %v5806 = vpack.c.b16 %v5430, %v5429
    %v5807 = vpack.c.b16 %v5432, %v5431
    %v5808 = vpack.c.b16 %v5434, %v5433
    %v5809 = vpack.c.b16 %v5436, %v5435
    %v5810 = vpack.c.b16 %v5438, %v5437
    %v5811 = vpack.c.b16 %v5440, %v5439
    %v5812 = vpack.c.b16 %v5442, %v5441
    %v5813 = vpack.c.b16 %v5444, %v5443
    %v5814 = vpack.c.b16 %v5446, %v5445
    %v5815 = vpack.c.b16 %v5448, %v5447
    %v5816 = vpack.c.b16 %v5450, %v5449
    %v5817 = vpack.c.b16 %v5452, %v5451
    %v5818 = vpack.c.b16 %v5454, %v5453
    %v5819 = vpack.c.b16 %v5456, %v5455
    %v5820 = vpack.c.b16 %v5458, %v5457
    %v5821 = vpack.c.b16 %v5460, %v5459
    %v5822 = vpack.c.b16 %v5462, %v5461
    %v5823 = vpack.c.b16 %v5464, %v5463
    %v5824 = vpack.c.b16 %v5466, %v5465
    %v5825 = vpack.c.b16 %v5468, %v5467
    %v5826 = vpack.c.b16 %v5470, %v5469
    %v5827 = vpack.c.b16 %v5472, %v5471
    %v5828 = vpack.c.b16 %v5474, %v5473
    %v5829 = vpack.c.b16 %v5476, %v5475
    %v5830 = vpack.c.b16 %v5478, %v5477
    %v5831 = vpack.c.b16 %v5480, %v5479
    %v5832 = vpack.c.b16 %v5482, %v5481
    %v5833 = vpack.c.b16 %v5484, %v5483
    %v5834 = vpack.c.b16 %v5486, %v5485
    %v5835 = vpack.c.b16 %v5488, %v5487
    %v5836 = vpack.c.b16 %v5490, %v5489
    %v5837 = vpack.c.b16 %v5492, %v5491
    %v5838 = vpack.c.b16 %v5494, %v5493
    %v5839 = vpack.c.b16 %v5496, %v5495
    %v5840 = vpack.c.b16 %v5498, %v5497
    %v5841 = vpack.c.b16 %v5500, %v5499
    %v5842 = vpack.c.b16 %v5502, %v5501
    %v5843 = vpack.c.b16 %v5504, %v5503
    %v5844 = vpack.c.b16 %v5506, %v5505
    %v5845 = vpack.c.b16 %v5508, %v5507
    %v5846 = vpack.c.b16 %v5510, %v5509
    %v5847 = vpack.c.b16 %v5512, %v5511
    %v5848 = vpack.c.b16 %v5514, %v5513
    %v5849 = vpack.c.b16 %v5516, %v5515
    %v5850 = vpack.c.b16 %v5518, %v5517
    %v5851 = vpack.c.b16 %v5520, %v5519
    %v5852 = vpack.c.b16 %v5522, %v5521
    %v5853 = vpack.c.b16 %v5524, %v5523
    %v5854 = vpack.c.b16 %v5526, %v5525
    %v5855 = vpack.c.b16 %v5528, %v5527
    %v5856 = vpack.c.b16 %v5530, %v5529
    %v5857 = vpack.c.b16 %v5532, %v5531
    %v5858 = vpack.c.b16 %v5534, %v5533
    %v5859 = vpack.c.b16 %v5536, %v5535
    %v5860 = vpack.c.b16 %v5538, %v5537
    %v5861 = vpack.c.b16 %v5540, %v5539
    %v5862 = vpack.c.b16 %v5542, %v5541
    %v5863 = vpack.c.b16 %v5544, %v5543
    %v5864 = vpack.c.b16 %v5546, %v5545
    %v5865 = vpack.c.b16 %v5548, %v5547
    %v5866 = vpack.c.b16 %v5550, %v5549
    %v5867 = vpack.c.b16 %v5552, %v5551
    %v5868 = vpack.c.b16 %v5554, %v5553
    %v5869 = vpack.c.b16 %v5556, %v5555
    %v5870 = vpack.c.b16 %v5558, %v5557
    %v5871 = vpack.c.b16 %v5560, %v5559
    %v5872 = vpack.c.b16 %v5562, %v5561
    %v5873 = vpack.c.b16 %v5564, %v5563
    %v5874 = vpack.c.b16 %v5566, %v5565
    %v5875 = vpack.c.b16 %v5568, %v5567
    %v5876 = vpack.c.b16 %v5570, %v5569
    %v5877 = vpack.c.b16 %v5572, %v5571
    %v5878 = vpack.c.b16 %v5574, %v5573
    %v5879 = vpack.c.b16 %v5576, %v5575
    %v5880 = vpack.c.b16 %v5578, %v5577
    %v5881 = vpack.c.b16 %v5580, %v5579
    %v5882 = vpack.c.b16 %v5582, %v5581
    %v5883 = vpack.c.b16 %v5584, %v5583
    %v5884 = vpack.c.b16 %v5586, %v5585
    %v5885 = vpack.c.b16 %v5588, %v5587
    %v5886 = vpack.c.b16 %v5590, %v5589
    %v5887 = vpack.c.b16 %v5592, %v5591
    %v5888 = vpack.c.b16 %v5594, %v5593
    %v5889 = vpack.c.b16 %v5596, %v5595
    %v5890 = vpack.c.b16 %v5598, %v5597
    %v5891 = vpack.c.b16 %v5600, %v5599
    %v5892 = vpack.c.b16 %v5602, %v5601
    %v5893 = vpack.c.b16 %v5604, %v5603
    %v5894 = vpack.c.b16 %v5606, %v5605
    %v5895 = vpack.c.b16 %v5608, %v5607
    %v5896 = vpack.c.b16 %v5610, %v5609
    %v5897 = vpack.c.b16 %v5612, %v5611
    %v5898 = vpack.c.b16 %v5614, %v5613
    %v5899 = vpack.c.b16 %v5616, %v5615
    %v5900 = vpack.c.b16 %v5618, %v5617
    %v5901 = vpack.c.b16 %v5620, %v5619
    %v5902 = vpack.c.b16 %v5622, %v5621
    %v5903 = vpack.c.b16 %v5624, %v5623
    %v5904 = vpack.c.b16 %v5626, %v5625
    %v5905 = vpack.c.b16 %v5628, %v5627
    %v5906 = vpack.c.b16 %v5630, %v5629
    %v5907 = vpack.c.b16 %v5632, %v5631
    %v5908 = vpack.c.b16 %v5634, %v5633
    %v5909 = vpack.c.b16 %v5636, %v5635
    %v5910 = vpack.c.b16 %v5638, %v5637
    %v5911 = vpack.c.b16 %v5640, %v5639
    %v5912 = vpack.c.b16 %v5642, %v5641
    %v5913 = vpack.c.b16 %v5644, %v5643
    %v5914 = vpack.c.b16 %v5646, %v5645
    %v5915 = vpack.c.b16 %v5648, %v5647
    %v5916 = vpack.c.b16 %v5650, %v5649
    %v5917 = vpack.c.b16 %v5652, %v5651
    %v5918 = vpack.c.b16 %v5654, %v5653
    %v5919 = vpack.c.b16 %v5656, %v5655
    %v5920 = vpack.c.b16 %v5658, %v5657
    %v5921 = vpack.c.b16 %v5660, %v5659
    %v5922 = vpack.c.b16 %v5662, %v5661
    %v5923 = vpack.c.b16 %v5664, %v5663
    %v5924 = vpack.c.b16 %v5666, %v5665
    %v5925 = vpack.c.b16 %v5668, %v5667
    %v5926 = vpack.c.b16 %v5670, %v5669
    %6183 = vmatprep.subr.bf16.mxu0 0
    %6184 = vmatpush1.bf16.msra.mxu0 %v5671
    %6185 = vmatprep.subr.bf16.mxu0 0
    %6186 = vmatpush1.bf16.msra.mxu0 %v5672
    %6187 = vmatprep.subr.bf16.mxu0 0
    %6188 = vmatpush1.bf16.msra.mxu0 %v5673
    %6189 = vmatprep.subr.bf16.mxu0 0
    %6190 = vmatpush1.bf16.msra.mxu0 %v5674
    %6191 = vmatprep.subr.bf16.mxu0 0
    %6192 = vmatpush1.bf16.msra.mxu0 %v5675
    %6193 = vmatprep.subr.bf16.mxu0 0
    %6194 = vmatpush1.bf16.msra.mxu0 %v5676
    %6195 = vmatprep.subr.bf16.mxu0 0
    %6196 = vmatpush1.bf16.msra.mxu0 %v5677
    %6197 = vmatprep.subr.bf16.mxu0 0
    %6198 = vmatpush1.bf16.msra.mxu0 %v5678
    %6199 = vmatprep.subr.bf16.mxu0 0
    %6200 = vmatpush1.bf16.msra.mxu0 %v5679
    %6201 = vmatprep.subr.bf16.mxu0 0
    %6202 = vmatpush1.bf16.msra.mxu0 %v5680
    %6203 = vmatprep.subr.bf16.mxu0 0
    %6204 = vmatpush1.bf16.msra.mxu0 %v5681
    %6205 = vmatprep.subr.bf16.mxu0 0
    %6206 = vmatpush1.bf16.msra.mxu0 %v5682
    %6207 = vmatprep.subr.bf16.mxu0 0
    %6208 = vmatpush1.bf16.msra.mxu0 %v5683
    %6209 = vmatprep.subr.bf16.mxu0 0
    %6210 = vmatpush1.bf16.msra.mxu0 %v5684
    %6211 = vmatprep.subr.bf16.mxu0 0
    %6212 = vmatpush1.bf16.msra.mxu0 %v5685
    %6213 = vmatprep.subr.bf16.mxu0 0
    %6214 = vmatpush1.bf16.msra.mxu0 %v5686
    %6215 = vmatprep.mubr.bf16.mxu0 %v4104
    %6216 = vmatmul.mubr.bf16.gmra.mrb[0].mxu0 %v4103
    %v6217 = vpop.f32.mrb[0].mxu0
    %v6218 = vadd.f32 0.0, %v6217
    %v6219 = vpop.f32.mrb[0].mxu0
    %v6220 = vpop.f32.mrb[0].mxu0
    %v6221 = vpop.f32.mrb[0].mxu0
    %6222 = vdwg.mxu0
    %6223 = vmatprep.subr.bf16.mxu0 0
    %6224 = vmatpush1.bf16.msra.mxu0 %v5687
    %6225 = vmatprep.subr.bf16.mxu0 0
    %6226 = vmatpush1.bf16.msra.mxu0 %v5688
    %6227 = vmatprep.subr.bf16.mxu0 0
    %6228 = vmatpush1.bf16.msra.mxu0 %v5689
    %6229 = vmatprep.subr.bf16.mxu0 0
    %6230 = vmatpush1.bf16.msra.mxu0 %v5690
    %6231 = vmatprep.subr.bf16.mxu0 0
    %6232 = vmatpush1.bf16.msra.mxu0 %v5691
    %6233 = vmatprep.subr.bf16.mxu0 0
    %6234 = vmatpush1.bf16.msra.mxu0 %v5692
    %6235 = vmatprep.subr.bf16.mxu0 0
    %6236 = vmatpush1.bf16.msra.mxu0 %v5693
    %6237 = vmatprep.subr.bf16.mxu0 0
    %6238 = vmatpush1.bf16.msra.mxu0 %v5694
    %6239 = vmatprep.subr.bf16.mxu0 0
    %6240 = vmatpush1.bf16.msra.mxu0 %v5695
    %6241 = vmatprep.subr.bf16.mxu0 0
    %6242 = vmatpush1.bf16.msra.mxu0 %v5696
    %6243 = vmatprep.subr.bf16.mxu0 0
    %6244 = vmatpush1.bf16.msra.mxu0 %v5697
    %6245 = vmatprep.subr.bf16.mxu0 0
    %6246 = vmatpush1.bf16.msra.mxu0 %v5698
    %6247 = vmatprep.subr.bf16.mxu0 0
    %6248 = vmatpush1.bf16.msra.mxu0 %v5699
    %6249 = vmatprep.subr.bf16.mxu0 0
    %6250 = vmatpush1.bf16.msra.mxu0 %v5700
    %6251 = vmatprep.subr.bf16.mxu0 0
    %6252 = vmatpush1.bf16.msra.mxu0 %v5701
    %6253 = vmatprep.subr.bf16.mxu0 0
    %6254 = vmatpush1.bf16.msra.mxu0 %v5702
    %6255 = vmatprep.mubr.bf16.mxu0 %v4106
    %6256 = vmatmul.mubr.bf16.gmra.mrb[0].mxu0 %v4105
    %v6257 = vpop.f32.mrb[0].mxu0
    %v6258 = vadd.f32 %v6218, %v6257
    %v6259 = vpop.f32.mrb[0].mxu0
    %v6260 = vpop.f32.mrb[0].mxu0
    %v6261 = vpop.f32.mrb[0].mxu0
    %6262 = vdwg.mxu0
    %6263 = vmatprep.subr.bf16.mxu0 0
    %6264 = vmatpush1.bf16.msra.mxu0 %v5703
    %6265 = vmatprep.subr.bf16.mxu0 0
    %6266 = vmatpush1.bf16.msra.mxu0 %v5704
    %6267 = vmatprep.subr.bf16.mxu0 0
    %6268 = vmatpush1.bf16.msra.mxu0 %v5705
    %6269 = vmatprep.subr.bf16.mxu0 0
    %6270 = vmatpush1.bf16.msra.mxu0 %v5706
    %6271 = vmatprep.subr.bf16.mxu0 0
    %6272 = vmatpush1.bf16.msra.mxu0 %v5707
    %6273 = vmatprep.subr.bf16.mxu0 0
    %6274 = vmatpush1.bf16.msra.mxu0 %v5708
    %6275 = vmatprep.subr.bf16.mxu0 0
    %6276 = vmatpush1.bf16.msra.mxu0 %v5709
    %6277 = vmatprep.subr.bf16.mxu0 0
    %6278 = vmatpush1.bf16.msra.mxu0 %v5710
    %6279 = vmatprep.subr.bf16.mxu0 0
    %6280 = vmatpush1.bf16.msra.mxu0 %v5711
    %6281 = vmatprep.subr.bf16.mxu0 0
    %6282 = vmatpush1.bf16.msra.mxu0 %v5712
    %6283 = vmatprep.subr.bf16.mxu0 0
    %6284 = vmatpush1.bf16.msra.mxu0 %v5713
    %6285 = vmatprep.subr.bf16.mxu0 0
    %6286 = vmatpush1.bf16.msra.mxu0 %v5714
    %6287 = vmatprep.subr.bf16.mxu0 0
    %6288 = vmatpush1.bf16.msra.mxu0 %v5715
    %6289 = vmatprep.subr.bf16.mxu0 0
    %6290 = vmatpush1.bf16.msra.mxu0 %v5716
    %6291 = vmatprep.subr.bf16.mxu0 0
    %6292 = vmatpush1.bf16.msra.mxu0 %v5717
    %6293 = vmatprep.subr.bf16.mxu0 0
    %6294 = vmatpush1.bf16.msra.mxu0 %v5718
    %6295 = vmatprep.mubr.bf16.mxu0 %v4108
    %6296 = vmatmul.mubr.bf16.gmra.mrb[0].mxu0 %v4107
    %v6297 = vpop.f32.mrb[0].mxu0
    %v6298 = vadd.f32 %v6258, %v6297
    %v6299 = vpop.f32.mrb[0].mxu0
    %v6300 = vpop.f32.mrb[0].mxu0
    %v6301 = vpop.f32.mrb[0].mxu0
    %6302 = vdwg.mxu0
    %6303 = vmatprep.subr.bf16.mxu0 0
    %6304 = vmatpush1.bf16.msra.mxu0 %v5719
    %6305 = vmatprep.subr.bf16.mxu0 0
    %6306 = vmatpush1.bf16.msra.mxu0 %v5720
    %6307 = vmatprep.subr.bf16.mxu0 0
    %6308 = vmatpush1.bf16.msra.mxu0 %v5721
    %6309 = vmatprep.subr.bf16.mxu0 0
    %6310 = vmatpush1.bf16.msra.mxu0 %v5722
    %6311 = vmatprep.subr.bf16.mxu0 0
    %6312 = vmatpush1.bf16.msra.mxu0 %v5723
    %6313 = vmatprep.subr.bf16.mxu0 0
    %6314 = vmatpush1.bf16.msra.mxu0 %v5724
    %6315 = vmatprep.subr.bf16.mxu0 0
    %6316 = vmatpush1.bf16.msra.mxu0 %v5725
    %6317 = vmatprep.subr.bf16.mxu0 0
    %6318 = vmatpush1.bf16.msra.mxu0 %v5726
    %6319 = vmatprep.subr.bf16.mxu0 0
    %6320 = vmatpush1.bf16.msra.mxu0 %v5727
    %6321 = vmatprep.subr.bf16.mxu0 0
    %6322 = vmatpush1.bf16.msra.mxu0 %v5728
    %6323 = vmatprep.subr.bf16.mxu0 0
    %6324 = vmatpush1.bf16.msra.mxu0 %v5729
    %6325 = vmatprep.subr.bf16.mxu0 0
    %6326 = vmatpush1.bf16.msra.mxu0 %v5730
    %6327 = vmatprep.subr.bf16.mxu0 0
    %6328 = vmatpush1.bf16.msra.mxu0 %v5731
    %6329 = vmatprep.subr.bf16.mxu0 0
    %6330 = vmatpush1.bf16.msra.mxu0 %v5732
    %6331 = vmatprep.subr.bf16.mxu0 0
    %6332 = vmatpush1.bf16.msra.mxu0 %v5733
    %6333 = vmatprep.subr.bf16.mxu0 0
    %6334 = vmatpush1.bf16.msra.mxu0 %v5734
    %6335 = vmatprep.mubr.bf16.mxu0 %v4110
    %6336 = vmatmul.mubr.bf16.gmra.mrb[0].mxu0 %v4109
    %v6337 = vpop.f32.mrb[0].mxu0
    %v6338 = vadd.f32 %v6298, %v6337
    %v6339 = vpop.f32.mrb[0].mxu0
    %v6340 = vpop.f32.mrb[0].mxu0
    %v6341 = vpop.f32.mrb[0].mxu0
    %6342 = vdwg.mxu0
    %6343 = vmatprep.subr.bf16.mxu0 0
    %6344 = vmatpush1.bf16.msra.mxu0 %v5735
    %6345 = vmatprep.subr.bf16.mxu0 0
    %6346 = vmatpush1.bf16.msra.mxu0 %v5736
    %6347 = vmatprep.subr.bf16.mxu0 0
    %6348 = vmatpush1.bf16.msra.mxu0 %v5737
    %6349 = vmatprep.subr.bf16.mxu0 0
    %6350 = vmatpush1.bf16.msra.mxu0 %v5738
    %6351 = vmatprep.subr.bf16.mxu0 0
    %6352 = vmatpush1.bf16.msra.mxu0 %v5739
    %6353 = vmatprep.subr.bf16.mxu0 0
    %6354 = vmatpush1.bf16.msra.mxu0 %v5740
    %6355 = vmatprep.subr.bf16.mxu0 0
    %6356 = vmatpush1.bf16.msra.mxu0 %v5741
    %6357 = vmatprep.subr.bf16.mxu0 0
    %6358 = vmatpush1.bf16.msra.mxu0 %v5742
    %6359 = vmatprep.subr.bf16.mxu0 0
    %6360 = vmatpush1.bf16.msra.mxu0 %v5743
    %6361 = vmatprep.subr.bf16.mxu0 0
    %6362 = vmatpush1.bf16.msra.mxu0 %v5744
    %6363 = vmatprep.subr.bf16.mxu0 0
    %6364 = vmatpush1.bf16.msra.mxu0 %v5745
    %6365 = vmatprep.subr.bf16.mxu0 0
    %6366 = vmatpush1.bf16.msra.mxu0 %v5746
    %6367 = vmatprep.subr.bf16.mxu0 0
    %6368 = vmatpush1.bf16.msra.mxu0 %v5747
    %6369 = vmatprep.subr.bf16.mxu0 0
    %6370 = vmatpush1.bf16.msra.mxu0 %v5748
    %6371 = vmatprep.subr.bf16.mxu0 0
    %6372 = vmatpush1.bf16.msra.mxu0 %v5749
    %6373 = vmatprep.subr.bf16.mxu0 0
    %6374 = vmatpush1.bf16.msra.mxu0 %v5750
    %6375 = vmatprep.mubr.bf16.mxu0 %v4112
    %6376 = vmatmul.mubr.bf16.gmra.mrb[0].mxu0 %v4111
    %v6377 = vpop.f32.mrb[0].mxu0
    %v6378 = vadd.f32 %v6338, %v6377
    %v6379 = vpop.f32.mrb[0].mxu0
    %v6380 = vpop.f32.mrb[0].mxu0
    %v6381 = vpop.f32.mrb[0].mxu0
    %6382 = vdwg.mxu0
    %6383 = vmatprep.subr.bf16.mxu0 0
    %6384 = vmatpush1.bf16.msra.mxu0 %v5751
    %6385 = vmatprep.subr.bf16.mxu0 0
    %6386 = vmatpush1.bf16.msra.mxu0 %v5752
    %6387 = vmatprep.subr.bf16.mxu0 0
    %6388 = vmatpush1.bf16.msra.mxu0 %v5753
    %6389 = vmatprep.subr.bf16.mxu0 0
    %6390 = vmatpush1.bf16.msra.mxu0 %v5754
    %6391 = vmatprep.subr.bf16.mxu0 0
    %6392 = vmatpush1.bf16.msra.mxu0 %v5755
    %6393 = vmatprep.subr.bf16.mxu0 0
    %6394 = vmatpush1.bf16.msra.mxu0 %v5756
    %6395 = vmatprep.subr.bf16.mxu0 0
    %6396 = vmatpush1.bf16.msra.mxu0 %v5757
    %6397 = vmatprep.subr.bf16.mxu0 0
    %6398 = vmatpush1.bf16.msra.mxu0 %v5758
    %6399 = vmatprep.subr.bf16.mxu0 0
    %6400 = vmatpush1.bf16.msra.mxu0 %v5759
    %6401 = vmatprep.subr.bf16.mxu0 0
    %6402 = vmatpush1.bf16.msra.mxu0 %v5760
    %6403 = vmatprep.subr.bf16.mxu0 0
    %6404 = vmatpush1.bf16.msra.mxu0 %v5761
    %6405 = vmatprep.subr.bf16.mxu0 0
    %6406 = vmatpush1.bf16.msra.mxu0 %v5762
    %6407 = vmatprep.subr.bf16.mxu0 0
    %6408 = vmatpush1.bf16.msra.mxu0 %v5763
    %6409 = vmatprep.subr.bf16.mxu0 0
    %6410 = vmatpush1.bf16.msra.mxu0 %v5764
    %6411 = vmatprep.subr.bf16.mxu0 0
    %6412 = vmatpush1.bf16.msra.mxu0 %v5765
    %6413 = vmatprep.subr.bf16.mxu0 0
    %6414 = vmatpush1.bf16.msra.mxu0 %v5766
    %6415 = vmatprep.mubr.bf16.mxu0 %v4114
    %6416 = vmatmul.mubr.bf16.gmra.mrb[0].mxu0 %v4113
    %v6417 = vpop.f32.mrb[0].mxu0
    %v6418 = vadd.f32 %v6378, %v6417
    %v6419 = vpop.f32.mrb[0].mxu0
    %v6420 = vpop.f32.mrb[0].mxu0
    %v6421 = vpop.f32.mrb[0].mxu0
    %6422 = vdwg.mxu0
    %6423 = vmatprep.subr.bf16.mxu0 0
    %6424 = vmatpush1.bf16.msra.mxu0 %v5767
    %6425 = vmatprep.subr.bf16.mxu0 0
    %6426 = vmatpush1.bf16.msra.mxu0 %v5768
    %6427 = vmatprep.subr.bf16.mxu0 0
    %6428 = vmatpush1.bf16.msra.mxu0 %v5769
    %6429 = vmatprep.subr.bf16.mxu0 0
    %6430 = vmatpush1.bf16.msra.mxu0 %v5770
    %6431 = vmatprep.subr.bf16.mxu0 0
    %6432 = vmatpush1.bf16.msra.mxu0 %v5771
    %6433 = vmatprep.subr.bf16.mxu0 0
    %6434 = vmatpush1.bf16.msra.mxu0 %v5772
    %6435 = vmatprep.subr.bf16.mxu0 0
    %6436 = vmatpush1.bf16.msra.mxu0 %v5773
    %6437 = vmatprep.subr.bf16.mxu0 0
    %6438 = vmatpush1.bf16.msra.mxu0 %v5774
    %6439 = vmatprep.subr.bf16.mxu0 0
    %6440 = vmatpush1.bf16.msra.mxu0 %v5775
    %6441 = vmatprep.subr.bf16.mxu0 0
    %6442 = vmatpush1.bf16.msra.mxu0 %v5776
    %6443 = vmatprep.subr.bf16.mxu0 0
    %6444 = vmatpush1.bf16.msra.mxu0 %v5777
    %6445 = vmatprep.subr.bf16.mxu0 0
    %6446 = vmatpush1.bf16.msra.mxu0 %v5778
    %6447 = vmatprep.subr.bf16.mxu0 0
    %6448 = vmatpush1.bf16.msra.mxu0 %v5779
    %6449 = vmatprep.subr.bf16.mxu0 0
    %6450 = vmatpush1.bf16.msra.mxu0 %v5780
    %6451 = vmatprep.subr.bf16.mxu0 0
    %6452 = vmatpush1.bf16.msra.mxu0 %v5781
    %6453 = vmatprep.subr.bf16.mxu0 0
    %6454 = vmatpush1.bf16.msra.mxu0 %v5782
    %6455 = vmatprep.mubr.bf16.mxu0 %v4116
    %6456 = vmatmul.mubr.bf16.gmra.mrb[0].mxu0 %v4115
    %v6457 = vpop.f32.mrb[0].mxu0
    %v6458 = vadd.f32 %v6418, %v6457
    %v6459 = vpop.f32.mrb[0].mxu0
    %v6460 = vpop.f32.mrb[0].mxu0
    %v6461 = vpop.f32.mrb[0].mxu0
    %6462 = vdwg.mxu0
    %6463 = vmatprep.subr.bf16.mxu0 0
    %6464 = vmatpush1.bf16.msra.mxu0 %v5783
    %6465 = vmatprep.subr.bf16.mxu0 0
    %6466 = vmatpush1.bf16.msra.mxu0 %v5784
    %6467 = vmatprep.subr.bf16.mxu0 0
    %6468 = vmatpush1.bf16.msra.mxu0 %v5785
    %6469 = vmatprep.subr.bf16.mxu0 0
    %6470 = vmatpush1.bf16.msra.mxu0 %v5786
    %6471 = vmatprep.subr.bf16.mxu0 0
    %6472 = vmatpush1.bf16.msra.mxu0 %v5787
    %6473 = vmatprep.subr.bf16.mxu0 0
    %6474 = vmatpush1.bf16.msra.mxu0 %v5788
    %6475 = vmatprep.subr.bf16.mxu0 0
    %6476 = vmatpush1.bf16.msra.mxu0 %v5789
    %6477 = vmatprep.subr.bf16.mxu0 0
    %6478 = vmatpush1.bf16.msra.mxu0 %v5790
    %6479 = vmatprep.subr.bf16.mxu0 0
    %6480 = vmatpush1.bf16.msra.mxu0 %v5791
    %6481 = vmatprep.subr.bf16.mxu0 0
    %6482 = vmatpush1.bf16.msra.mxu0 %v5792
    %6483 = vmatprep.subr.bf16.mxu0 0
    %6484 = vmatpush1.bf16.msra.mxu0 %v5793
    %6485 = vmatprep.subr.bf16.mxu0 0
    %6486 = vmatpush1.bf16.msra.mxu0 %v5794
    %6487 = vmatprep.subr.bf16.mxu0 0
    %6488 = vmatpush1.bf16.msra.mxu0 %v5795
    %6489 = vmatprep.subr.bf16.mxu0 0
    %6490 = vmatpush1.bf16.msra.mxu0 %v5796
    %6491 = vmatprep.subr.bf16.mxu0 0
    %6492 = vmatpush1.bf16.msra.mxu0 %v5797
    %6493 = vmatprep.subr.bf16.mxu0 0
    %6494 = vmatpush1.bf16.msra.mxu0 %v5798
    %6495 = vmatprep.mubr.bf16.mxu0 %v4118
    %6496 = vmatmul.mubr.bf16.gmra.mrb[0].mxu0 %v4117
    %v6497 = vpop.f32.mrb[0].mxu0
    %v6498 = vadd.f32 %v6458, %v6497
    %v6499 = vpop.f32.mrb[0].mxu0
    %v6500 = vpop.f32.mrb[0].mxu0
    %v6501 = vpop.f32.mrb[0].mxu0
    %6502 = vdwg.mxu0
    %6503 = vmatprep.subr.bf16.mxu0 0
    %6504 = vmatpush1.bf16.msra.mxu0 %v5799
    %6505 = vmatprep.subr.bf16.mxu0 0
    %6506 = vmatpush1.bf16.msra.mxu0 %v5800
    %6507 = vmatprep.subr.bf16.mxu0 0
    %6508 = vmatpush1.bf16.msra.mxu0 %v5801
    %6509 = vmatprep.subr.bf16.mxu0 0
    %6510 = vmatpush1.bf16.msra.mxu0 %v5802
    %6511 = vmatprep.subr.bf16.mxu0 0
    %6512 = vmatpush1.bf16.msra.mxu0 %v5803
    %6513 = vmatprep.subr.bf16.mxu0 0
    %6514 = vmatpush1.bf16.msra.mxu0 %v5804
    %6515 = vmatprep.subr.bf16.mxu0 0
    %6516 = vmatpush1.bf16.msra.mxu0 %v5805
    %6517 = vmatprep.subr.bf16.mxu0 0
    %6518 = vmatpush1.bf16.msra.mxu0 %v5806
    %6519 = vmatprep.subr.bf16.mxu0 0
    %6520 = vmatpush1.bf16.msra.mxu0 %v5807
    %6521 = vmatprep.subr.bf16.mxu0 0
    %6522 = vmatpush1.bf16.msra.mxu0 %v5808
    %6523 = vmatprep.subr.bf16.mxu0 0
    %6524 = vmatpush1.bf16.msra.mxu0 %v5809
    %6525 = vmatprep.subr.bf16.mxu0 0
    %6526 = vmatpush1.bf16.msra.mxu0 %v5810
    %6527 = vmatprep.subr.bf16.mxu0 0
    %6528 = vmatpush1.bf16.msra.mxu0 %v5811
    %6529 = vmatprep.subr.bf16.mxu0 0
    %6530 = vmatpush1.bf16.msra.mxu0 %v5812
    %6531 = vmatprep.subr.bf16.mxu0 0
    %6532 = vmatpush1.bf16.msra.mxu0 %v5813
    %6533 = vmatprep.subr.bf16.mxu0 0
    %6534 = vmatpush1.bf16.msra.mxu0 %v5814
    %6535 = vmatprep.mubr.bf16.mxu0 %v4120
    %6536 = vmatmul.mubr.bf16.gmra.mrb[0].mxu0 %v4119
    %v6537 = vpop.f32.mrb[0].mxu0
    %v6538 = vadd.f32 %v6498, %v6537
    %v6539 = vpop.f32.mrb[0].mxu0
    %v6540 = vpop.f32.mrb[0].mxu0
    %v6541 = vpop.f32.mrb[0].mxu0
    %6542 = vdwg.mxu0
    %6543 = vmatprep.subr.bf16.mxu0 0
    %6544 = vmatpush1.bf16.msra.mxu0 %v5815
    %6545 = vmatprep.subr.bf16.mxu0 0
    %6546 = vmatpush1.bf16.msra.mxu0 %v5816
    %6547 = vmatprep.subr.bf16.mxu0 0
    %6548 = vmatpush1.bf16.msra.mxu0 %v5817
    %6549 = vmatprep.subr.bf16.mxu0 0
    %6550 = vmatpush1.bf16.msra.mxu0 %v5818
    %6551 = vmatprep.subr.bf16.mxu0 0
    %6552 = vmatpush1.bf16.msra.mxu0 %v5819
    %6553 = vmatprep.subr.bf16.mxu0 0
    %6554 = vmatpush1.bf16.msra.mxu0 %v5820
    %6555 = vmatprep.subr.bf16.mxu0 0
    %6556 = vmatpush1.bf16.msra.mxu0 %v5821
    %6557 = vmatprep.subr.bf16.mxu0 0
    %6558 = vmatpush1.bf16.msra.mxu0 %v5822
    %6559 = vmatprep.subr.bf16.mxu0 0
    %6560 = vmatpush1.bf16.msra.mxu0 %v5823
    %6561 = vmatprep.subr.bf16.mxu0 0
    %6562 = vmatpush1.bf16.msra.mxu0 %v5824
    %6563 = vmatprep.subr.bf16.mxu0 0
    %6564 = vmatpush1.bf16.msra.mxu0 %v5825
    %6565 = vmatprep.subr.bf16.mxu0 0
    %6566 = vmatpush1.bf16.msra.mxu0 %v5826
    %6567 = vmatprep.subr.bf16.mxu0 0
    %6568 = vmatpush1.bf16.msra.mxu0 %v5827
    %6569 = vmatprep.subr.bf16.mxu0 0
    %6570 = vmatpush1.bf16.msra.mxu0 %v5828
    %6571 = vmatprep.subr.bf16.mxu0 0
    %6572 = vmatpush1.bf16.msra.mxu0 %v5829
    %6573 = vmatprep.subr.bf16.mxu0 0
    %6574 = vmatpush1.bf16.msra.mxu0 %v5830
    %6575 = vmatprep.mubr.bf16.mxu0 %v4122
    %6576 = vmatmul.mubr.bf16.gmra.mrb[0].mxu0 %v4121
    %v6577 = vpop.f32.mrb[0].mxu0
    %v6578 = vadd.f32 %v6538, %v6577
    %v6579 = vpop.f32.mrb[0].mxu0
    %v6580 = vpop.f32.mrb[0].mxu0
    %v6581 = vpop.f32.mrb[0].mxu0
    %6582 = vdwg.mxu0
    %6583 = vmatprep.subr.bf16.mxu0 0
    %6584 = vmatpush1.bf16.msra.mxu0 %v5831
    %6585 = vmatprep.subr.bf16.mxu0 0
    %6586 = vmatpush1.bf16.msra.mxu0 %v5832
    %6587 = vmatprep.subr.bf16.mxu0 0
    %6588 = vmatpush1.bf16.msra.mxu0 %v5833
    %6589 = vmatprep.subr.bf16.mxu0 0
    %6590 = vmatpush1.bf16.msra.mxu0 %v5834
    %6591 = vmatprep.subr.bf16.mxu0 0
    %6592 = vmatpush1.bf16.msra.mxu0 %v5835
    %6593 = vmatprep.subr.bf16.mxu0 0
    %6594 = vmatpush1.bf16.msra.mxu0 %v5836
    %6595 = vmatprep.subr.bf16.mxu0 0
    %6596 = vmatpush1.bf16.msra.mxu0 %v5837
    %6597 = vmatprep.subr.bf16.mxu0 0
    %6598 = vmatpush1.bf16.msra.mxu0 %v5838
    %6599 = vmatprep.subr.bf16.mxu0 0
    %6600 = vmatpush1.bf16.msra.mxu0 %v5839
    %6601 = vmatprep.subr.bf16.mxu0 0
    %6602 = vmatpush1.bf16.msra.mxu0 %v5840
    %6603 = vmatprep.subr.bf16.mxu0 0
    %6604 = vmatpush1.bf16.msra.mxu0 %v5841
    %6605 = vmatprep.subr.bf16.mxu0 0
    %6606 = vmatpush1.bf16.msra.mxu0 %v5842
    %6607 = vmatprep.subr.bf16.mxu0 0
    %6608 = vmatpush1.bf16.msra.mxu0 %v5843
    %6609 = vmatprep.subr.bf16.mxu0 0
    %6610 = vmatpush1.bf16.msra.mxu0 %v5844
    %6611 = vmatprep.subr.bf16.mxu0 0
    %6612 = vmatpush1.bf16.msra.mxu0 %v5845
    %6613 = vmatprep.subr.bf16.mxu0 0
    %6614 = vmatpush1.bf16.msra.mxu0 %v5846
    %6615 = vmatprep.mubr.bf16.mxu0 %v4124
    %6616 = vmatmul.mubr.bf16.gmra.mrb[0].mxu0 %v4123
    %v6617 = vpop.f32.mrb[0].mxu0
    %v6618 = vadd.f32 %v6578, %v6617
    %v6619 = vpop.f32.mrb[0].mxu0
    %v6620 = vpop.f32.mrb[0].mxu0
    %v6621 = vpop.f32.mrb[0].mxu0
    %6622 = vdwg.mxu0
    %6623 = vmatprep.subr.bf16.mxu0 0
    %6624 = vmatpush1.bf16.msra.mxu0 %v5847
    %6625 = vmatprep.subr.bf16.mxu0 0
    %6626 = vmatpush1.bf16.msra.mxu0 %v5848
    %6627 = vmatprep.subr.bf16.mxu0 0
    %6628 = vmatpush1.bf16.msra.mxu0 %v5849
    %6629 = vmatprep.subr.bf16.mxu0 0
    %6630 = vmatpush1.bf16.msra.mxu0 %v5850
    %6631 = vmatprep.subr.bf16.mxu0 0
    %6632 = vmatpush1.bf16.msra.mxu0 %v5851
    %6633 = vmatprep.subr.bf16.mxu0 0
    %6634 = vmatpush1.bf16.msra.mxu0 %v5852
    %6635 = vmatprep.subr.bf16.mxu0 0
    %6636 = vmatpush1.bf16.msra.mxu0 %v5853
    %6637 = vmatprep.subr.bf16.mxu0 0
    %6638 = vmatpush1.bf16.msra.mxu0 %v5854
    %6639 = vmatprep.subr.bf16.mxu0 0
    %6640 = vmatpush1.bf16.msra.mxu0 %v5855
    %6641 = vmatprep.subr.bf16.mxu0 0
    %6642 = vmatpush1.bf16.msra.mxu0 %v5856
    %6643 = vmatprep.subr.bf16.mxu0 0
    %6644 = vmatpush1.bf16.msra.mxu0 %v5857
    %6645 = vmatprep.subr.bf16.mxu0 0
    %6646 = vmatpush1.bf16.msra.mxu0 %v5858
    %6647 = vmatprep.subr.bf16.mxu0 0
    %6648 = vmatpush1.bf16.msra.mxu0 %v5859
    %6649 = vmatprep.subr.bf16.mxu0 0
    %6650 = vmatpush1.bf16.msra.mxu0 %v5860
    %6651 = vmatprep.subr.bf16.mxu0 0
    %6652 = vmatpush1.bf16.msra.mxu0 %v5861
    %6653 = vmatprep.subr.bf16.mxu0 0
    %6654 = vmatpush1.bf16.msra.mxu0 %v5862
    %6655 = vmatprep.mubr.bf16.mxu0 %v4126
    %6656 = vmatmul.mubr.bf16.gmra.mrb[0].mxu0 %v4125
    %v6657 = vpop.f32.mrb[0].mxu0
    %v6658 = vadd.f32 %v6618, %v6657
    %v6659 = vpop.f32.mrb[0].mxu0
    %v6660 = vpop.f32.mrb[0].mxu0
    %v6661 = vpop.f32.mrb[0].mxu0
    %6662 = vdwg.mxu0
    %6663 = vmatprep.subr.bf16.mxu0 0
    %6664 = vmatpush1.bf16.msra.mxu0 %v5863
    %6665 = vmatprep.subr.bf16.mxu0 0
    %6666 = vmatpush1.bf16.msra.mxu0 %v5864
    %6667 = vmatprep.subr.bf16.mxu0 0
    %6668 = vmatpush1.bf16.msra.mxu0 %v5865
    %6669 = vmatprep.subr.bf16.mxu0 0
    %6670 = vmatpush1.bf16.msra.mxu0 %v5866
    %6671 = vmatprep.subr.bf16.mxu0 0
    %6672 = vmatpush1.bf16.msra.mxu0 %v5867
    %6673 = vmatprep.subr.bf16.mxu0 0
    %6674 = vmatpush1.bf16.msra.mxu0 %v5868
    %6675 = vmatprep.subr.bf16.mxu0 0
    %6676 = vmatpush1.bf16.msra.mxu0 %v5869
    %6677 = vmatprep.subr.bf16.mxu0 0
    %6678 = vmatpush1.bf16.msra.mxu0 %v5870
    %6679 = vmatprep.subr.bf16.mxu0 0
    %6680 = vmatpush1.bf16.msra.mxu0 %v5871
    %6681 = vmatprep.subr.bf16.mxu0 0
    %6682 = vmatpush1.bf16.msra.mxu0 %v5872
    %6683 = vmatprep.subr.bf16.mxu0 0
    %6684 = vmatpush1.bf16.msra.mxu0 %v5873
    %6685 = vmatprep.subr.bf16.mxu0 0
    %6686 = vmatpush1.bf16.msra.mxu0 %v5874
    %6687 = vmatprep.subr.bf16.mxu0 0
    %6688 = vmatpush1.bf16.msra.mxu0 %v5875
    %6689 = vmatprep.subr.bf16.mxu0 0
    %6690 = vmatpush1.bf16.msra.mxu0 %v5876
    %6691 = vmatprep.subr.bf16.mxu0 0
    %6692 = vmatpush1.bf16.msra.mxu0 %v5877
    %6693 = vmatprep.subr.bf16.mxu0 0
    %6694 = vmatpush1.bf16.msra.mxu0 %v5878
    %6695 = vmatprep.mubr.bf16.mxu0 %v4128
    %6696 = vmatmul.mubr.bf16.gmra.mrb[0].mxu0 %v4127
    %v6697 = vpop.f32.mrb[0].mxu0
    %v6698 = vadd.f32 %v6658, %v6697
    %v6699 = vpop.f32.mrb[0].mxu0
    %v6700 = vpop.f32.mrb[0].mxu0
    %v6701 = vpop.f32.mrb[0].mxu0
    %6702 = vdwg.mxu0
    %6703 = vmatprep.subr.bf16.mxu0 0
    %6704 = vmatpush1.bf16.msra.mxu0 %v5879
    %6705 = vmatprep.subr.bf16.mxu0 0
    %6706 = vmatpush1.bf16.msra.mxu0 %v5880
    %6707 = vmatprep.subr.bf16.mxu0 0
    %6708 = vmatpush1.bf16.msra.mxu0 %v5881
    %6709 = vmatprep.subr.bf16.mxu0 0
    %6710 = vmatpush1.bf16.msra.mxu0 %v5882
    %6711 = vmatprep.subr.bf16.mxu0 0
    %6712 = vmatpush1.bf16.msra.mxu0 %v5883
    %6713 = vmatprep.subr.bf16.mxu0 0
    %6714 = vmatpush1.bf16.msra.mxu0 %v5884
    %6715 = vmatprep.subr.bf16.mxu0 0
    %6716 = vmatpush1.bf16.msra.mxu0 %v5885
    %6717 = vmatprep.subr.bf16.mxu0 0
    %6718 = vmatpush1.bf16.msra.mxu0 %v5886
    %6719 = vmatprep.subr.bf16.mxu0 0
    %6720 = vmatpush1.bf16.msra.mxu0 %v5887
    %6721 = vmatprep.subr.bf16.mxu0 0
    %6722 = vmatpush1.bf16.msra.mxu0 %v5888
    %6723 = vmatprep.subr.bf16.mxu0 0
    %6724 = vmatpush1.bf16.msra.mxu0 %v5889
    %6725 = vmatprep.subr.bf16.mxu0 0
    %6726 = vmatpush1.bf16.msra.mxu0 %v5890
    %6727 = vmatprep.subr.bf16.mxu0 0
    %6728 = vmatpush1.bf16.msra.mxu0 %v5891
    %6729 = vmatprep.subr.bf16.mxu0 0
    %6730 = vmatpush1.bf16.msra.mxu0 %v5892
    %6731 = vmatprep.subr.bf16.mxu0 0
    %6732 = vmatpush1.bf16.msra.mxu0 %v5893
    %6733 = vmatprep.subr.bf16.mxu0 0
    %6734 = vmatpush1.bf16.msra.mxu0 %v5894
    %6735 = vmatprep.mubr.bf16.mxu0 %v4130
    %6736 = vmatmul.mubr.bf16.gmra.mrb[0].mxu0 %v4129
    %v6737 = vpop.f32.mrb[0].mxu0
    %v6738 = vadd.f32 %v6698, %v6737
    %v6739 = vpop.f32.mrb[0].mxu0
    %v6740 = vpop.f32.mrb[0].mxu0
    %v6741 = vpop.f32.mrb[0].mxu0
    %6742 = vdwg.mxu0
    %6743 = vmatprep.subr.bf16.mxu0 0
    %6744 = vmatpush1.bf16.msra.mxu0 %v5895
    %6745 = vmatprep.subr.bf16.mxu0 0
    %6746 = vmatpush1.bf16.msra.mxu0 %v5896
    %6747 = vmatprep.subr.bf16.mxu0 0
    %6748 = vmatpush1.bf16.msra.mxu0 %v5897
    %6749 = vmatprep.subr.bf16.mxu0 0
    %6750 = vmatpush1.bf16.msra.mxu0 %v5898
    %6751 = vmatprep.subr.bf16.mxu0 0
    %6752 = vmatpush1.bf16.msra.mxu0 %v5899
    %6753 = vmatprep.subr.bf16.mxu0 0
    %6754 = vmatpush1.bf16.msra.mxu0 %v5900
    %6755 = vmatprep.subr.bf16.mxu0 0
    %6756 = vmatpush1.bf16.msra.mxu0 %v5901
    %6757 = vmatprep.subr.bf16.mxu0 0
    %6758 = vmatpush1.bf16.msra.mxu0 %v5902
    %6759 = vmatprep.subr.bf16.mxu0 0
    %6760 = vmatpush1.bf16.msra.mxu0 %v5903
    %6761 = vmatprep.subr.bf16.mxu0 0
    %6762 = vmatpush1.bf16.msra.mxu0 %v5904
    %6763 = vmatprep.subr.bf16.mxu0 0
    %6764 = vmatpush1.bf16.msra.mxu0 %v5905
    %6765 = vmatprep.subr.bf16.mxu0 0
    %6766 = vmatpush1.bf16.msra.mxu0 %v5906
    %6767 = vmatprep.subr.bf16.mxu0 0
    %6768 = vmatpush1.bf16.msra.mxu0 %v5907
    %6769 = vmatprep.subr.bf16.mxu0 0
    %6770 = vmatpush1.bf16.msra.mxu0 %v5908
    %6771 = vmatprep.subr.bf16.mxu0 0
    %6772 = vmatpush1.bf16.msra.mxu0 %v5909
    %6773 = vmatprep.subr.bf16.mxu0 0
    %6774 = vmatpush1.bf16.msra.mxu0 %v5910
    %6775 = vmatprep.mubr.bf16.mxu0 %v4132
    %6776 = vmatmul.mubr.bf16.gmra.mrb[0].mxu0 %v4131
    %v6777 = vpop.f32.mrb[0].mxu0
    %v6778 = vadd.f32 %v6738, %v6777
    %v6779 = vpop.f32.mrb[0].mxu0
    %v6780 = vpop.f32.mrb[0].mxu0
    %v6781 = vpop.f32.mrb[0].mxu0
    %6782 = vdwg.mxu0
    %6783 = vmatprep.subr.bf16.mxu0 0
    %6784 = vmatpush1.bf16.msra.mxu0 %v5911
    %6785 = vmatprep.subr.bf16.mxu0 0
    %6786 = vmatpush1.bf16.msra.mxu0 %v5912
    %6787 = vmatprep.subr.bf16.mxu0 0
    %6788 = vmatpush1.bf16.msra.mxu0 %v5913
    %6789 = vmatprep.subr.bf16.mxu0 0
    %6790 = vmatpush1.bf16.msra.mxu0 %v5914
    %6791 = vmatprep.subr.bf16.mxu0 0
    %6792 = vmatpush1.bf16.msra.mxu0 %v5915
    %6793 = vmatprep.subr.bf16.mxu0 0
    %6794 = vmatpush1.bf16.msra.mxu0 %v5916
    %6795 = vmatprep.subr.bf16.mxu0 0
    %6796 = vmatpush1.bf16.msra.mxu0 %v5917
    %6797 = vmatprep.subr.bf16.mxu0 0
    %6798 = vmatpush1.bf16.msra.mxu0 %v5918
    %6799 = vmatprep.subr.bf16.mxu0 0
    %6800 = vmatpush1.bf16.msra.mxu0 %v5919
    %6801 = vmatprep.subr.bf16.mxu0 0
    %6802 = vmatpush1.bf16.msra.mxu0 %v5920
    %6803 = vmatprep.subr.bf16.mxu0 0
    %6804 = vmatpush1.bf16.msra.mxu0 %v5921
    %6805 = vmatprep.subr.bf16.mxu0 0
    %6806 = vmatpush1.bf16.msra.mxu0 %v5922
    %6807 = vmatprep.subr.bf16.mxu0 0
    %6808 = vmatpush1.bf16.msra.mxu0 %v5923
    %6809 = vmatprep.subr.bf16.mxu0 0
    %6810 = vmatpush1.bf16.msra.mxu0 %v5924
    %6811 = vmatprep.subr.bf16.mxu0 0
    %6812 = vmatpush1.bf16.msra.mxu0 %v5925
    %6813 = vmatprep.subr.bf16.mxu0 0
    %6814 = vmatpush1.bf16.msra.mxu0 %v5926
    %6815 = vmatprep.mubr.bf16.mxu0 %v4134
    %6816 = vmatmul.mubr.bf16.gmra.mrb[0].mxu0 %v4133
    %v6817 = vpop.f32.mrb[0].mxu0
    %v6818 = vadd.f32 %v6778, %v6817
    %v6819 = vpop.f32.mrb[0].mxu0
    %v6820 = vpop.f32.mrb[0].mxu0
    %v6821 = vpop.f32.mrb[0].mxu0
    %6822 = vdwg.mxu0
    %v6823 = vadd.f32 %v4102, %v6818
    %6824 = vst [vmem:[#allocation3] sm:$0xff] %v6823
    // Predicated region
    $region46: #{tpu_custom_call.1} parent=1 // pred_check
      %p6825 = pneg %p84
    $region47: #{tpu_custom_call.1} parent=1 // pred_check_branch
      %6827 = sbr.rel (%p6825) target = $region49
    $region48: #{tpu_custom_call.1} parent=1 // pred_region
      %v6828 = vld [vmem:[#allocation3] sm:$0xff]
      %v6829 = vld [vmem:[#allocation12] sm:$0x1]
      %v6831 = vlaneseq
      %v6832 = vshrl.u32 %v6831, 7
      %v6833 = vsub.s32 0, %v6832
      %v6834 = vrot.slane %v6829, %v6833
      %v6836 = vadd.f32 %v6828, %v6834
      %v6837 = vtanh.pop %v6836
      %v6838 = vmul.f32 %v6837, %v6837
      %6839 = vadd.xlane.f32.xlu0 %v6838
      %v6840 = vpop.xlane.xlu0 %6839
      %v6841 = vmax.f32 %v6840, 1e-24
      %v6842 = vrsqrt.pop %v6841
      %v6843 = vmul.f32 %v6837, %v6842
      %6844 = vst [vmem:[#allocation13] sm:$0xff] %v6843
    $region49: #{tpu_custom_call.1} parent=1 // pred_fallthru
      _
    // Predicated region
    $region50: #{tpu_custom_call.1} parent=1 // pred_check
      _
    $region51: #{tpu_custom_call.1} parent=1 // pred_check_branch
      %6846 = sbr.rel (0) target = $region53
    $region52: #{tpu_custom_call.1} parent=1 // pred_region
      %s6848 = ssub.s32 128, 128
      %6849 = vsyncadd [#allocation6], %s6848
      %s6851 = sshll.u32 [#allocation13], 4
      %s6852 = int_to_ptr.vmem [resolvable:$true] %s6851
      %6854 = dma.vmem_to_hbm [thread:$0]  %s6852, 128, %s5, [#allocation6]
    $region53: #{tpu_custom_call.1} parent=1 // pred_fallthru
      _
    // Predicated region
    $region54: #{tpu_custom_call.1} parent=1 // pred_check
      _
    $region55: #{tpu_custom_call.1} parent=1 // pred_check_branch
      %6856 = sbr.rel (0) target = $region57
    $region56: #{tpu_custom_call.1} parent=1 // pred_region
      %6857 = dma.done [#allocation6], 128
    $region57: #{tpu_custom_call.1} parent=1 // pred_fallthru
      _
    %6858 = vsyncpa [#allocation5], 1
    %6859 = vsyncpa [#allocation8], 1
    %6860 = vsyncpa [#allocation11], 1
    %6861 = vsyncpa [#allocation6], 1

</llo_original>
